<compile_context>
chip_gen: v6e
topology: v6e:2x2x1
jax: 0.10.0
libtpu: 0.0.40
codegen_flags: <defaults>
</compile_context>

<pallas_src>
import math
import functools

import jax
import jax.numpy as jnp
from jax import lax
from jax.experimental import pallas as pl
from jax.experimental.pallas import tpu as pltpu


# ----------------------------- in-kernel helpers -----------------------------

def _layernorm(z, gamma, beta, eps=1e-5):
    # Two-pass statistics (matches nn.LayerNorm / the reference exactly).
    mu = jnp.mean(z, axis=-1, keepdims=True)
    zc = z - mu
    var = jnp.mean(zc * zc, axis=-1, keepdims=True)
    return zc * lax.rsqrt(var + eps) * gamma + beta


_INV_SQRT2 = 0.7071067811865476


def _erf_approx(x):
    # Abramowitz & Stegun 7.1.26, max abs error ~1.5e-7.  Uses only
    # mul/add/div/exp/select so it lowers on every TPU generation.
    a1, a2, a3, a4, a5 = (0.254829592, -0.284496736, 1.421413741,
                          -1.453152027, 1.061405429)
    p = 0.3275911
    s = jnp.where(x >= 0.0, 1.0, -1.0)
    z = jnp.abs(x)
    t = 1.0 / (1.0 + p * z)
    poly = ((((a5 * t + a4) * t + a3) * t + a2) * t + a1) * t
    return s * (1.0 - poly * jnp.exp(-z * z))


def _gelu_exact(x):
    # 0.5 * x * (1 + erf(x / sqrt(2)))  -- nn.GELU() (exact) to ~1e-7.
    return 0.5 * x * (1.0 + _erf_approx(x * _INV_SQRT2))


# --------------------------------- kernel ------------------------------------

def block_kernel(n_head,
                 x_ref,
                 ln1g_ref, ln1b_ref,
                 wqkv_ref, bqkv_ref,
                 wp_ref, bp_ref,
                 ln2g_ref, ln2b_ref,
                 w1_ref, b1_ref, w2_ref, b2_ref,
                 o_ref):
    Bb, T, C = x_ref.shape
    nh = n_head
    hd = C // nh
    R = Bb * T

    x = x_ref[...].astype(jnp.float32).reshape(R, C)       # packed rows

    # ---- ln1 + fused QKV projection (bf16 operands, f32 accumulation) ------
    h = _layernorm(x, ln1g_ref[...], ln1b_ref[...])
    qkv = jnp.dot(h.astype(jnp.bfloat16), wqkv_ref[...],
                  preferred_element_type=jnp.float32) + bqkv_ref[...]
    q = qkv[:, 0 * C:1 * C]        # 1/sqrt(hd) already folded into Wq / bq
    k = qkv[:, 1 * C:2 * C]
    v = qkv[:, 2 * C:3 * C]

    # ---- multi-head causal attention on a merged (Bb*nh) leading batch -----
    def heads(z):
        return (z.astype(jnp.bfloat16)
                 .reshape(Bb, T, nh, hd)
                 .transpose(0, 2, 1, 3)
                 .reshape(Bb * nh, T, hd))
    qh, kh, vh = heads(q), heads(k), heads(v)

    att = jnp.einsum('htd,hsd->hts', qh, kh,
                     preferred_element_type=jnp.float32)    # (Bb*nh, T, T)

    # Causal mask regenerated in-kernel (no (T,T) HBM/VMEM mask input).
    row = lax.broadcasted_iota(jnp.int32, (T, T), 0)
    col = lax.broadcasted_iota(jnp.int32, (T, T), 1)
    att = jnp.where((row >= col)[None, :, :], att, jnp.float32(-1e30))

    att = att - jnp.max(att, axis=-1, keepdims=True)
    p = jnp.exp(att)
    p = p * pl.reciprocal(jnp.sum(p, axis=-1, keepdims=True), approx=True)

    y = jnp.einsum('hts,hsd->htd', p.astype(jnp.bfloat16), vh,
                   preferred_element_type=jnp.float32)      # (Bb*nh, T, hd)
    y = y.reshape(Bb, nh, T, hd).transpose(0, 2, 1, 3).reshape(R, C)

    y = jnp.dot(y.astype(jnp.bfloat16), wp_ref[...],
                preferred_element_type=jnp.float32) + bp_ref[...]
    x1 = x + y                                              # residual 1

    # ---- ln2 + MLP ----------------------------------------------------------
    h2 = _layernorm(x1, ln2g_ref[...], ln2b_ref[...])
    m = jnp.dot(h2.astype(jnp.bfloat16), w1_ref[...],
                preferred_element_type=jnp.float32) + b1_ref[...]
    m = _gelu_exact(m)                                      # f32 element-wise
    m = jnp.dot(m.astype(jnp.bfloat16), w2_ref[...],
                preferred_element_type=jnp.float32) + b2_ref[...]

    o_ref[...] = (x1 + m).reshape(Bb, T, C).astype(o_ref.dtype)   # residual 2


# --------------------------------- wrapper -----------------------------------

def _pick_block_batch(B, T, target_rows=256):
    """Largest divisor of B with Bb*T <= target_rows (fills MXU sublanes)."""
    limit = max(1, target_rows // max(T, 1))
    bb = 1
    for cand in range(1, B + 1):
        if B % cand == 0 and cand <= limit:
            bb = cand
    return bb


def _vmem_limit_bytes(Bb, T, C, H, nh):
    f32, bf16 = 4, 2
    R = Bb * T
    act_io = 2 * 2 * R * C * f32                          # x/out, double-buffered
    weights = (C * 3 * C + C * C + C * H + H * C) * bf16  # bf16, single-buffered
    small = (3 * C + 2 * H + 8 * C) * f32                 # biases + LN params
    inter = (R * 3 * C + 3 * R * C + 2 * Bb * nh * T * T
             + 4 * R * C + R * H) * f32                   # f32 intermediates
    est = act_io + weights + small + inter
    try:
        cap = int(pltpu.get_tpu_info().vmem_capacity_bytes)   # per-generation
    except Exception:
        cap = 64 * 1024 * 1024                                # conservative
    return int(min(int(0.9 * cap), max(16 * 1024 * 1024, 2 * est)))


def transformer_block(x, params, n_head, *, single_buffer_weights=True):
    (ln1g, ln1b, wq, bq, wk, bk, wv, bv, wp, bp,
     ln2g, ln2b, w1, b1, w2, b2) = params
    B, T, C = x.shape
    H = w1.shape[1]
    hd = C // n_head
    scale = 1.0 / math.sqrt(hd)

    # Fuse QKV, fold the attention scale into the Q columns, cast weights bf16.
    wqkv = jnp.concatenate([wq * scale, wk, wv], axis=1).astype(jnp.bfloat16)
    bqkv = jnp.concatenate([bq * scale, bk, bv], axis=1)            # f32
    wp_b = wp.astype(jnp.bfloat16)
    w1_b = w1.astype(jnp.bfloat16)
    w2_b = w2.astype(jnp.bfloat16)

    Bb = _pick_block_batch(B, T)
    grid = (B // Bb,)
    # NOTE: with B // Bb == 1 one TC of a v7x chip idles; a second parallel
    # grid axis (q-row tiles / head groups) would fix that for larger configs.

    def const_spec(shape):
        idx = lambda i, _s=shape: (0,) * len(_s)
        if single_buffer_weights:
            # Constant index_map -> a second pipeline buffer buys nothing.
            return pl.BlockSpec(shape, idx, pipeline_mode=pl.Buffered(1))
        return pl.BlockSpec(shape, idx)

    in_specs = [
        pl.BlockSpec((Bb, T, C), lambda i: (i, 0, 0)),      # x
        const_spec((1, C)), const_spec((1, C)),             # ln1 gamma/beta
        const_spec((C, 3 * C)), const_spec((1, 3 * C)),     # fused Wqkv, bqkv
        const_spec((C, C)), const_spec((1, C)),             # Wproj, bproj
        const_spec((1, C)), const_spec((1, C)),             # ln2 gamma/beta
        const_spec((C, H)), const_spec((1, H)),             # W1, b1
        const_spec((H, C)), const_spec((1, C)),             # W2, b2
    ]

    return pl.pallas_call(
        functools.partial(block_kernel, n_head),
        out_shape=jax.ShapeDtypeStruct((B, T, C), x.dtype),
        grid=grid,
        in_specs=in_specs,
        out_specs=pl.BlockSpec((Bb, T, C), lambda i: (i, 0, 0)),
        compiler_params=pltpu.CompilerParams(
            dimension_semantics=("parallel",),
            vmem_limit_bytes=_vmem_limit_bytes(Bb, T, C, H, n_head)),
    )(x, ln1g, ln1b, wqkv, bqkv, wp_b, bp, ln2g, ln2b, w1_b, b1, w2_b, b2)


# ------------------------------- references ----------------------------------

def reference_block(x, params, n_head, *, mirror_kernel_precision=False):
    """Plain-JAX reference.

    mirror_kernel_precision=False : faithful f32 module semantics (highest
        matmul precision) -- loose sanity comparison.
    mirror_kernel_precision=True  : casts every matmul operand to bf16 exactly
        like the kernel does (f32 accumulation), so structural bugs show up
        at a tight tolerance independent of the bf16-vs-f32 precision gap.
    """
    (ln1g, ln1b, wq, bq, wk, bk, wv, bv, wp, bp,
     ln2g, ln2b, w1, b1, w2, b2) = params
    B, T, C = x.shape
    hd = C // n_head
    scale = 1.0 / math.sqrt(hd)

    if mirror_kernel_precision:
        cast = lambda a: a.astype(jnp.bfloat16)
        prec = None
    else:
        cast = lambda a: a
        prec = lax.Precision.HIGHEST

    def mm(a, w):
        return jnp.dot(cast(a), cast(w),
                       preferred_element_type=jnp.float32, precision=prec)

    def ln(z, g, b):
        mu = jnp.mean(z, -1, keepdims=True)
        zc = z - mu
        var = jnp.mean(zc * zc, -1, keepdims=True)
        return zc / jnp.sqrt(var + 1e-5) * g + b

    h = ln(x, ln1g, ln1b)
    if mirror_kernel_precision:   # scale folded into Wq/bq, as in the kernel
        q = mm(h, wq * scale) + bq * scale
        k = mm(h, wk) + bk
        v = mm(h, wv) + bv
        att_scale = 1.0
    else:
        q = mm(h, wq) + bq
        k = mm(h, wk) + bk
        v = mm(h, wv) + bv
        att_scale = scale

    q = q.reshape(B, T, n_head, hd).transpose(0, 2, 1, 3)
    k = k.reshape(B, T, n_head, hd).transpose(0, 2, 1, 3)
    v = v.reshape(B, T, n_head, hd).transpose(0, 2, 1, 3)
    att = jnp.einsum('bhtd,bhsd->bhts', cast(q), cast(k),
                     preferred_element_type=jnp.float32,
                     precision=prec) * att_scale
    mask = jnp.tril(jnp.ones((T, T), bool))
    att = jnp.where(mask[None, None], att, -jnp.inf)
    att = jax.nn.softmax(att, axis=-1)
    y = jnp.einsum('bhts,bhsd->bhtd', cast(att), cast(v),
                   preferred_element_type=jnp.float32, precision=prec)
    y = y.transpose(0, 2, 1, 3).reshape(B, T, C)
    y = mm(y, wp) + bp
    x = x + y
    h2 = ln(x, ln2g, ln2b)
    m = jax.nn.gelu(mm(h2, w1) + b1, approximate=False)
    return x + mm(m, w2) + b2


def init_params(key, C):
    H = 4 * C
    ks = jax.random.split(key, 8)
    s = lambda fan_in: 1.0 / math.sqrt(fan_in)
    ln1g = jnp.ones((1, C), jnp.float32)
    ln1b = jnp.zeros((1, C), jnp.float32)
    ln2g = jnp.ones((1, C), jnp.float32)
    ln2b = jnp.zeros((1, C), jnp.float32)
    wq = jax.random.normal(ks[0], (C, C), jnp.float32) * s(C)
    wk = jax.random.normal(ks[1], (C, C), jnp.float32) * s(C)
    wv = jax.random.normal(ks[2], (C, C), jnp.float32) * s(C)
    wp = jax.random.normal(ks[3], (C, C), jnp.float32) * s(C)
    bq = jax.random.normal(ks[4], (1, C), jnp.float32) * 0.01
    bk = jax.random.normal(ks[5], (1, C), jnp.float32) * 0.01
    bv = jnp.zeros((1, C), jnp.float32)
    bp = jnp.zeros((1, C), jnp.float32)
    w1 = jax.random.normal(ks[6], (C, H), jnp.float32) * s(C)
    b1 = jnp.zeros((1, H), jnp.float32)
    w2 = jax.random.normal(ks[7], (H, C), jnp.float32) * s(H)
    b2 = jnp.zeros((1, C), jnp.float32)
    return (ln1g, ln1b, wq, bq, wk, bk, wv, bv, wp, bp,
            ln2g, ln2b, w1, b1, w2, b2)


if __name__ == "__main__":
    # Small config: B=2, T(block_size)=8, n_embd=32, n_head=4
    B, T, C, n_head = 2, 8, 32, 4
    key = jax.random.PRNGKey(0)
    kx, kp = jax.random.split(key)
    x = jax.random.normal(kx, (B, T, C), jnp.float32)
    params = init_params(kp, C)

    try:
        out = jax.block_until_ready(transformer_block(x, params, n_head))
    except Exception:
        # Fallback if this JAX build rejects pl.Buffered(1) pipeline_mode:
        # retry with default (double-buffered) weight specs.
        out = jax.block_until_ready(
            transformer_block(x, params, n_head, single_buffer_weights=False))

    assert out.shape == (B, T, C)
    assert bool(jnp.all(jnp.isfinite(out))), "non-finite output"

    # Tight check vs a reference mirroring the kernel's bf16 matmul-operand
    # precision (isolates structural bugs from the intentional bf16 cast).
    ref_mirror = reference_block(x, params, n_head, mirror_kernel_precision=True)
    assert jnp.allclose(out, ref_mirror, atol=2e-2, rtol=2e-2), \
        "mismatch vs bf16-mirrored reference"

    # Loose sanity check vs the faithful f32 module reference (difference is
    # the expected bf16-MXU-operand rounding requested by the perf review).
    ref_f32 = reference_block(x, params, n_head, mirror_kernel_precision=False)
    assert jnp.allclose(out, ref_f32, atol=1e-1, rtol=1e-1), \
        "mismatch vs f32 module reference"

    print("KERNEL_OK")
</pallas_src>

<mosaic_0001>
module attributes {stable_mosaic.version = 11 : i64} {
  func.func @block_kernel(%arg0: i32, %arg1: memref<2x8x32xf32, #tpu.memory_space<vmem>>, %arg2: memref<1x32xf32, #tpu.memory_space<vmem>>, %arg3: memref<1x32xf32, #tpu.memory_space<vmem>>, %arg4: memref<32x96xbf16, #tpu.memory_space<vmem>>, %arg5: memref<1x96xf32, #tpu.memory_space<vmem>>, %arg6: memref<32x32xbf16, #tpu.memory_space<vmem>>, %arg7: memref<1x32xf32, #tpu.memory_space<vmem>>, %arg8: memref<1x32xf32, #tpu.memory_space<vmem>>, %arg9: memref<1x32xf32, #tpu.memory_space<vmem>>, %arg10: memref<32x128xbf16, #tpu.memory_space<vmem>>, %arg11: memref<1x128xf32, #tpu.memory_space<vmem>>, %arg12: memref<128x32xbf16, #tpu.memory_space<vmem>>, %arg13: memref<1x32xf32, #tpu.memory_space<vmem>>, %arg14: memref<2x8x32xf32, #tpu.memory_space<vmem>>) attributes {dimension_semantics = [#tpu.dimension_semantics<parallel>], iteration_bounds = array<i64: 1>, scalar_prefetch = 0 : i64, scratch_operands = 0 : i64, tpu.core_type = #tpu.core_type<tc>, window_params = [{transform_indices = @transform_0, window_bounds = array<i64: 2, 8, 32>}, {pipeline_mode = #tpu.pipeline_mode<synchronous>, transform_indices = @transform_1, window_bounds = array<i64: 1, 32>}, {pipeline_mode = #tpu.pipeline_mode<synchronous>, transform_indices = @transform_2, window_bounds = array<i64: 1, 32>}, {pipeline_mode = #tpu.pipeline_mode<synchronous>, transform_indices = @transform_3, window_bounds = array<i64: 32, 96>}, {pipeline_mode = #tpu.pipeline_mode<synchronous>, transform_indices = @transform_4, window_bounds = array<i64: 1, 96>}, {pipeline_mode = #tpu.pipeline_mode<synchronous>, transform_indices = @transform_5, window_bounds = array<i64: 32, 32>}, {pipeline_mode = #tpu.pipeline_mode<synchronous>, transform_indices = @transform_6, window_bounds = array<i64: 1, 32>}, {pipeline_mode = #tpu.pipeline_mode<synchronous>, transform_indices = @transform_7, window_bounds = array<i64: 1, 32>}, {pipeline_mode = #tpu.pipeline_mode<synchronous>, transform_indices = @transform_8, window_bounds = array<i64: 1, 32>}, {pipeline_mode = #tpu.pipeline_mode<synchronous>, transform_indices = @transform_9, window_bounds = array<i64: 32, 128>}, {pipeline_mode = #tpu.pipeline_mode<synchronous>, transform_indices = @transform_10, window_bounds = array<i64: 1, 128>}, {pipeline_mode = #tpu.pipeline_mode<synchronous>, transform_indices = @transform_11, window_bounds = array<i64: 128, 32>}, {pipeline_mode = #tpu.pipeline_mode<synchronous>, transform_indices = @transform_12, window_bounds = array<i64: 1, 32>}, {transform_indices = @transform_13, window_bounds = array<i64: 2, 8, 32>}]} {
    %c0 = arith.constant 0 : index
    %c0_0 = arith.constant 0 : index
    %c0_1 = arith.constant 0 : index
    %0 = vector.load %arg1[%c0, %c0_0, %c0_1] : memref<2x8x32xf32, #tpu.memory_space<vmem>>, vector<2x8x32xf32>
    %1 = vector.shape_cast %0 : vector<2x8x32xf32> to vector<16x32xf32>
    %c0_2 = arith.constant 0 : index
    %c0_3 = arith.constant 0 : index
    %2 = vector.load %arg2[%c0_2, %c0_3] : memref<1x32xf32, #tpu.memory_space<vmem>>, vector<1x32xf32>
    %c0_4 = arith.constant 0 : index
    %c0_5 = arith.constant 0 : index
    %3 = vector.load %arg3[%c0_4, %c0_5] : memref<1x32xf32, #tpu.memory_space<vmem>>, vector<1x32xf32>
    %cst = arith.constant dense<0.000000e+00> : vector<16xf32>
    %4 = vector.multi_reduction <add>, %1, %cst [1] : vector<16x32xf32> to vector<16xf32>
    %5 = vector.shape_cast %4 : vector<16xf32> to vector<16x1xf32>
    %cst_6 = arith.constant 3.200000e+01 : f32
    %6 = vector.broadcast %cst_6 : f32 to vector<16x1xf32>
    %7 = arith.divf %5, %6 : vector<16x1xf32>
    %8 = vector.broadcast %7 : vector<16x1xf32> to vector<16x32xf32>
    %9 = arith.subf %1, %8 : vector<16x32xf32>
    %10 = arith.mulf %9, %9 : vector<16x32xf32>
    %cst_7 = arith.constant dense<0.000000e+00> : vector<16xf32>
    %11 = vector.multi_reduction <add>, %10, %cst_7 [1] : vector<16x32xf32> to vector<16xf32>
    %12 = vector.shape_cast %11 : vector<16xf32> to vector<16x1xf32>
    %cst_8 = arith.constant 3.200000e+01 : f32
    %13 = vector.broadcast %cst_8 : f32 to vector<16x1xf32>
    %14 = arith.divf %12, %13 : vector<16x1xf32>
    %cst_9 = arith.constant 9.99999974E-6 : f32
    %15 = vector.broadcast %cst_9 : f32 to vector<16x1xf32>
    %16 = arith.addf %14, %15 : vector<16x1xf32>
    %17 = math.rsqrt %16 : vector<16x1xf32>
    %18 = vector.broadcast %17 : vector<16x1xf32> to vector<16x32xf32>
    %19 = arith.mulf %9, %18 : vector<16x32xf32>
    %20 = vector.broadcast %2 : vector<1x32xf32> to vector<16x32xf32>
    %21 = arith.mulf %19, %20 : vector<16x32xf32>
    %22 = vector.broadcast %3 : vector<1x32xf32> to vector<16x32xf32>
    %23 = arith.addf %21, %22 : vector<16x32xf32>
    %24 = arith.truncf %23 : vector<16x32xf32> to vector<16x32xbf16>
    %c0_10 = arith.constant 0 : index
    %c0_11 = arith.constant 0 : index
    %25 = vector.load %arg4[%c0_10, %c0_11] : memref<32x96xbf16, #tpu.memory_space<vmem>>, vector<32x96xbf16>
    %cst_12 = arith.constant dense<0.000000e+00> : vector<16x96xf32>
    %26 = tpu.matmul %24, %25, %cst_12 {dimension_numbers = #tpu.dot_dimension_numbers<[1], [0], [0], [1], [0, 0, 1, 1], [], []>} : vector<16x32xbf16>, vector<32x96xbf16>, vector<16x96xf32> -> vector<16x96xf32>
    %c0_13 = arith.constant 0 : index
    %c0_14 = arith.constant 0 : index
    %27 = vector.load %arg5[%c0_13, %c0_14] : memref<1x96xf32, #tpu.memory_space<vmem>>, vector<1x96xf32>
    %28 = vector.broadcast %27 : vector<1x96xf32> to vector<16x96xf32>
    %29 = arith.addf %26, %28 : vector<16x96xf32>
    %30 = vector.extract_strided_slice %29 {offsets = [0, 0], sizes = [16, 32], strides = [1, 1]} : vector<16x96xf32> to vector<16x32xf32>
    %31 = vector.extract_strided_slice %29 {offsets = [0, 32], sizes = [16, 32], strides = [1, 1]} : vector<16x96xf32> to vector<16x32xf32>
    %32 = vector.extract_strided_slice %29 {offsets = [0, 64], sizes = [16, 32], strides = [1, 1]} : vector<16x96xf32> to vector<16x32xf32>
    %33 = arith.truncf %30 : vector<16x32xf32> to vector<16x32xbf16>
    %34 = vector.shape_cast %33 : vector<16x32xbf16> to vector<2x8x4x8xbf16>
    %35 = tpu.transpose %34, [0, 2, 1, 3] : vector<2x8x4x8xbf16> -> vector<2x4x8x8xbf16>
    %36 = vector.shape_cast %35 : vector<2x4x8x8xbf16> to vector<8x8x8xbf16>
    %37 = arith.truncf %31 : vector<16x32xf32> to vector<16x32xbf16>
    %38 = vector.shape_cast %37 : vector<16x32xbf16> to vector<2x8x4x8xbf16>
    %39 = tpu.transpose %38, [0, 2, 1, 3] : vector<2x8x4x8xbf16> -> vector<2x4x8x8xbf16>
    %40 = vector.shape_cast %39 : vector<2x4x8x8xbf16> to vector<8x8x8xbf16>
    %41 = arith.truncf %32 : vector<16x32xf32> to vector<16x32xbf16>
    %42 = vector.shape_cast %41 : vector<16x32xbf16> to vector<2x8x4x8xbf16>
    %43 = tpu.transpose %42, [0, 2, 1, 3] : vector<2x8x4x8xbf16> -> vector<2x4x8x8xbf16>
    %44 = vector.shape_cast %43 : vector<2x4x8x8xbf16> to vector<8x8x8xbf16>
    "tpu.trace_start"() <{level = 10 : i32, message = "htd,hsd->hts"}> : () -> ()
    %cst_15 = arith.constant dense<0.000000e+00> : vector<8x8x8xf32>
    %45 = tpu.matmul %36, %40, %cst_15 {dimension_numbers = #tpu.dot_dimension_numbers<[2], [2], [1], [1], [0, 0, 0, 1, 1, 1], [0], [0]>} : vector<8x8x8xbf16>, vector<8x8x8xbf16>, vector<8x8x8xf32> -> vector<8x8x8xf32>
    "tpu.trace_stop"() : () -> ()
    %46 = tpu.iota {dimensions = array<i32: 0>} : vector<8x8xi32>
    %47 = tpu.iota {dimensions = array<i32: 1>} : vector<8x8xi32>
    %48 = arith.cmpi sge, %46, %47 : vector<8x8xi32>
    %49 = vector.shape_cast %48 : vector<8x8xi1> to vector<1x8x8xi1>
    %cst_16 = arith.constant -1.000000e+30 : f32
    %50 = vector.shape_cast %49 : vector<1x8x8xi1> to vector<1x8x8xi1>
    %51 = vector.broadcast %50 : vector<1x8x8xi1> to vector<8x8x8xi1>
    %52 = vector.broadcast %cst_16 : f32 to vector<8x8x8xf32>
    %53 = arith.select %51, %45, %52 : vector<8x8x8xi1>, vector<8x8x8xf32>
    %cst_17 = arith.constant dense<0xFF800000> : vector<8x8xf32>
    %54 = vector.multi_reduction <maximumf>, %53, %cst_17 [2] : vector<8x8x8xf32> to vector<8x8xf32>
    %55 = vector.shape_cast %54 : vector<8x8xf32> to vector<8x8x1xf32>
    %56 = vector.broadcast %55 : vector<8x8x1xf32> to vector<8x8x8xf32>
    %57 = arith.subf %53, %56 : vector<8x8x8xf32>
    %58 = math.exp %57 : vector<8x8x8xf32>
    %cst_18 = arith.constant dense<0.000000e+00> : vector<8x8xf32>
    %59 = vector.multi_reduction <add>, %58, %cst_18 [2] : vector<8x8x8xf32> to vector<8x8xf32>
    %60 = vector.shape_cast %59 : vector<8x8xf32> to vector<8x8x1xf32>
    %61 = tpu.reciprocal %60 {approx = true} : vector<8x8x1xf32> -> vector<8x8x1xf32>
    %62 = vector.broadcast %61 : vector<8x8x1xf32> to vector<8x8x8xf32>
    %63 = arith.mulf %58, %62 : vector<8x8x8xf32>
    %64 = arith.truncf %63 : vector<8x8x8xf32> to vector<8x8x8xbf16>
    "tpu.trace_start"() <{level = 10 : i32, message = "hts,hsd->htd"}> : () -> ()
    %cst_19 = arith.constant dense<0.000000e+00> : vector<8x8x8xf32>
    %65 = tpu.matmul %64, %44, %cst_19 {dimension_numbers = #tpu.dot_dimension_numbers<[2], [1], [1], [2], [0, 0, 0, 1, 1, 2], [0], [0]>} : vector<8x8x8xbf16>, vector<8x8x8xbf16>, vector<8x8x8xf32> -> vector<8x8x8xf32>
    "tpu.trace_stop"() : () -> ()
    %66 = vector.shape_cast %65 : vector<8x8x8xf32> to vector<2x4x8x8xf32>
    %67 = tpu.transpose %66, [0, 2, 1, 3] : vector<2x4x8x8xf32> -> vector<2x8x4x8xf32>
    %68 = vector.shape_cast %67 : vector<2x8x4x8xf32> to vector<16x32xf32>
    %69 = arith.truncf %68 : vector<16x32xf32> to vector<16x32xbf16>
    %c0_20 = arith.constant 0 : index
    %c0_21 = arith.constant 0 : index
    %70 = vector.load %arg6[%c0_20, %c0_21] : memref<32x32xbf16, #tpu.memory_space<vmem>>, vector<32x32xbf16>
    %cst_22 = arith.constant dense<0.000000e+00> : vector<16x32xf32>
    %71 = tpu.matmul %69, %70, %cst_22 {dimension_numbers = #tpu.dot_dimension_numbers<[1], [0], [0], [1], [0, 0, 1, 1], [], []>} : vector<16x32xbf16>, vector<32x32xbf16>, vector<16x32xf32> -> vector<16x32xf32>
    %c0_23 = arith.constant 0 : index
    %c0_24 = arith.constant 0 : index
    %72 = vector.load %arg7[%c0_23, %c0_24] : memref<1x32xf32, #tpu.memory_space<vmem>>, vector<1x32xf32>
    %73 = vector.broadcast %72 : vector<1x32xf32> to vector<16x32xf32>
    %74 = arith.addf %71, %73 : vector<16x32xf32>
    %75 = arith.addf %1, %74 : vector<16x32xf32>
    %c0_25 = arith.constant 0 : index
    %c0_26 = arith.constant 0 : index
    %76 = vector.load %arg8[%c0_25, %c0_26] : memref<1x32xf32, #tpu.memory_space<vmem>>, vector<1x32xf32>
    %c0_27 = arith.constant 0 : index
    %c0_28 = arith.constant 0 : index
    %77 = vector.load %arg9[%c0_27, %c0_28] : memref<1x32xf32, #tpu.memory_space<vmem>>, vector<1x32xf32>
    %cst_29 = arith.constant dense<0.000000e+00> : vector<16xf32>
    %78 = vector.multi_reduction <add>, %75, %cst_29 [1] : vector<16x32xf32> to vector<16xf32>
    %79 = vector.shape_cast %78 : vector<16xf32> to vector<16x1xf32>
    %cst_30 = arith.constant 3.200000e+01 : f32
    %80 = vector.broadcast %cst_30 : f32 to vector<16x1xf32>
    %81 = arith.divf %79, %80 : vector<16x1xf32>
    %82 = vector.broadcast %81 : vector<16x1xf32> to vector<16x32xf32>
    %83 = arith.subf %75, %82 : vector<16x32xf32>
    %84 = arith.mulf %83, %83 : vector<16x32xf32>
    %cst_31 = arith.constant dense<0.000000e+00> : vector<16xf32>
    %85 = vector.multi_reduction <add>, %84, %cst_31 [1] : vector<16x32xf32> to vector<16xf32>
    %86 = vector.shape_cast %85 : vector<16xf32> to vector<16x1xf32>
    %cst_32 = arith.constant 3.200000e+01 : f32
    %87 = vector.broadcast %cst_32 : f32 to vector<16x1xf32>
    %88 = arith.divf %86, %87 : vector<16x1xf32>
    %cst_33 = arith.constant 9.99999974E-6 : f32
    %89 = vector.broadcast %cst_33 : f32 to vector<16x1xf32>
    %90 = arith.addf %88, %89 : vector<16x1xf32>
    %91 = math.rsqrt %90 : vector<16x1xf32>
    %92 = vector.broadcast %91 : vector<16x1xf32> to vector<16x32xf32>
    %93 = arith.mulf %83, %92 : vector<16x32xf32>
    %94 = vector.broadcast %76 : vector<1x32xf32> to vector<16x32xf32>
    %95 = arith.mulf %93, %94 : vector<16x32xf32>
    %96 = vector.broadcast %77 : vector<1x32xf32> to vector<16x32xf32>
    %97 = arith.addf %95, %96 : vector<16x32xf32>
    %98 = arith.truncf %97 : vector<16x32xf32> to vector<16x32xbf16>
    %c0_34 = arith.constant 0 : index
    %c0_35 = arith.constant 0 : index
    %99 = vector.load %arg10[%c0_34, %c0_35] : memref<32x128xbf16, #tpu.memory_space<vmem>>, vector<32x128xbf16>
    %cst_36 = arith.constant dense<0.000000e+00> : vector<16x128xf32>
    %100 = tpu.matmul %98, %99, %cst_36 {dimension_numbers = #tpu.dot_dimension_numbers<[1], [0], [0], [1], [0, 0, 1, 1], [], []>} : vector<16x32xbf16>, vector<32x128xbf16>, vector<16x128xf32> -> vector<16x128xf32>
    %c0_37 = arith.constant 0 : index
    %c0_38 = arith.constant 0 : index
    %101 = vector.load %arg11[%c0_37, %c0_38] : memref<1x128xf32, #tpu.memory_space<vmem>>, vector<1x128xf32>
    %102 = vector.broadcast %101 : vector<1x128xf32> to vector<16x128xf32>
    %103 = arith.addf %100, %102 : vector<16x128xf32>
    %cst_39 = arith.constant 5.000000e-01 : f32
    %104 = vector.broadcast %cst_39 : f32 to vector<16x128xf32>
    %105 = arith.mulf %104, %103 : vector<16x128xf32>
    %cst_40 = arith.constant 0.707106769 : f32
    %106 = vector.broadcast %cst_40 : f32 to vector<16x128xf32>
    %107 = arith.mulf %103, %106 : vector<16x128xf32>
    %cst_41 = arith.constant 0.000000e+00 : f32
    %108 = vector.broadcast %cst_41 : f32 to vector<16x128xf32>
    %109 = arith.cmpf oge, %107, %108 : vector<16x128xf32>
    %cst_42 = arith.constant 1.000000e+00 : f32
    %cst_43 = arith.constant -1.000000e+00 : f32
    %110 = vector.broadcast %cst_42 : f32 to vector<16x128xf32>
    %111 = vector.broadcast %cst_43 : f32 to vector<16x128xf32>
    %112 = arith.select %109, %110, %111 : vector<16x128xi1>, vector<16x128xf32>
    %113 = math.absf %107 : vector<16x128xf32>
    %cst_44 = arith.constant 0.327591091 : f32
    %114 = vector.broadcast %cst_44 : f32 to vector<16x128xf32>
    %115 = arith.mulf %114, %113 : vector<16x128xf32>
    %cst_45 = arith.constant 1.000000e+00 : f32
    %116 = vector.broadcast %cst_45 : f32 to vector<16x128xf32>
    %117 = arith.addf %116, %115 : vector<16x128xf32>
    %cst_46 = arith.constant 1.000000e+00 : f32
    %118 = vector.broadcast %cst_46 : f32 to vector<16x128xf32>
    %119 = arith.divf %118, %117 : vector<16x128xf32>
    %cst_47 = arith.constant 1.06140542 : f32
    %120 = vector.broadcast %cst_47 : f32 to vector<16x128xf32>
    %121 = arith.mulf %120, %119 : vector<16x128xf32>
    %cst_48 = arith.constant -1.45315206 : f32
    %122 = vector.broadcast %cst_48 : f32 to vector<16x128xf32>
    %123 = arith.addf %121, %122 : vector<16x128xf32>
    %124 = arith.mulf %123, %119 : vector<16x128xf32>
    %cst_49 = arith.constant 1.42141378 : f32
    %125 = vector.broadcast %cst_49 : f32 to vector<16x128xf32>
    %126 = arith.addf %124, %125 : vector<16x128xf32>
    %127 = arith.mulf %126, %119 : vector<16x128xf32>
    %cst_50 = arith.constant -0.284496725 : f32
    %128 = vector.broadcast %cst_50 : f32 to vector<16x128xf32>
    %129 = arith.addf %127, %128 : vector<16x128xf32>
    %130 = arith.mulf %129, %119 : vector<16x128xf32>
    %cst_51 = arith.constant 0.254829586 : f32
    %131 = vector.broadcast %cst_51 : f32 to vector<16x128xf32>
    %132 = arith.addf %130, %131 : vector<16x128xf32>
    %133 = arith.mulf %132, %119 : vector<16x128xf32>
    %cst_52 = arith.constant 0.000000e+00 : f32
    %134 = vector.broadcast %cst_52 : f32 to vector<16x128xf32>
    %135 = arith.subf %134, %113 : vector<16x128xf32>
    %136 = arith.mulf %135, %113 : vector<16x128xf32>
    %137 = math.exp %136 : vector<16x128xf32>
    %138 = arith.mulf %133, %137 : vector<16x128xf32>
    %cst_53 = arith.constant 1.000000e+00 : f32
    %139 = vector.broadcast %cst_53 : f32 to vector<16x128xf32>
    %140 = arith.subf %139, %138 : vector<16x128xf32>
    %141 = arith.mulf %112, %140 : vector<16x128xf32>
    %cst_54 = arith.constant 1.000000e+00 : f32
    %142 = vector.broadcast %cst_54 : f32 to vector<16x128xf32>
    %143 = arith.addf %142, %141 : vector<16x128xf32>
    %144 = arith.mulf %105, %143 : vector<16x128xf32>
    %145 = arith.truncf %144 : vector<16x128xf32> to vector<16x128xbf16>
    %c0_55 = arith.constant 0 : index
    %c0_56 = arith.constant 0 : index
    %146 = vector.load %arg12[%c0_55, %c0_56] : memref<128x32xbf16, #tpu.memory_space<vmem>>, vector<128x32xbf16>
    %cst_57 = arith.constant dense<0.000000e+00> : vector<16x32xf32>
    %147 = tpu.matmul %145, %146, %cst_57 {dimension_numbers = #tpu.dot_dimension_numbers<[1], [0], [0], [1], [0, 0, 1, 1], [], []>} : vector<16x128xbf16>, vector<128x32xbf16>, vector<16x32xf32> -> vector<16x32xf32>
    %c0_58 = arith.constant 0 : index
    %c0_59 = arith.constant 0 : index
    %148 = vector.load %arg13[%c0_58, %c0_59] : memref<1x32xf32, #tpu.memory_space<vmem>>, vector<1x32xf32>
    %149 = vector.broadcast %148 : vector<1x32xf32> to vector<16x32xf32>
    %150 = arith.addf %147, %149 : vector<16x32xf32>
    %151 = arith.addf %75, %150 : vector<16x32xf32>
    %152 = vector.shape_cast %151 : vector<16x32xf32> to vector<2x8x32xf32>
    %c0_60 = arith.constant 0 : index
    %c0_61 = arith.constant 0 : index
    %c0_62 = arith.constant 0 : index
    %153 = vector.load %arg14[%c0_60, %c0_61, %c0_62] : memref<2x8x32xf32, #tpu.memory_space<vmem>>, vector<2x8x32xf32>
    tpu.vector_store %arg14[%c0_60, %c0_61, %c0_62], %152 {strides = array<i32>} : memref<2x8x32xf32, #tpu.memory_space<vmem>>, vector<2x8x32xf32>,
    return
  }
  func.func @transform_0(%arg0: i32) -> (i32, i32, i32) {
    %c0_i32 = arith.constant 0 : i32
    %c0_i32_0 = arith.constant 0 : i32
    %c0_i32_1 = arith.constant 0 : i32
    return %arg0, %c0_i32, %c0_i32_0 : i32, i32, i32
  }
  func.func @transform_1(%arg0: i32) -> (i32, i32) {
    %c0_i32 = arith.constant 0 : i32
    %c0_i32_0 = arith.constant 0 : i32
    %c0_i32_1 = arith.constant 0 : i32
    return %c0_i32, %c0_i32_0 : i32, i32
  }
  func.func @transform_2(%arg0: i32) -> (i32, i32) {
    %c0_i32 = arith.constant 0 : i32
    %c0_i32_0 = arith.constant 0 : i32
    %c0_i32_1 = arith.constant 0 : i32
    return %c0_i32, %c0_i32_0 : i32, i32
  }
  func.func @transform_3(%arg0: i32) -> (i32, i32) {
    %c0_i32 = arith.constant 0 : i32
    %c0_i32_0 = arith.constant 0 : i32
    %c0_i32_1 = arith.constant 0 : i32
    return %c0_i32, %c0_i32_0 : i32, i32
  }
  func.func @transform_4(%arg0: i32) -> (i32, i32) {
    %c0_i32 = arith.constant 0 : i32
    %c0_i32_0 = arith.constant 0 : i32
    %c0_i32_1 = arith.constant 0 : i32
    return %c0_i32, %c0_i32_0 : i32, i32
  }
  func.func @transform_5(%arg0: i32) -> (i32, i32) {
    %c0_i32 = arith.constant 0 : i32
    %c0_i32_0 = arith.constant 0 : i32
    %c0_i32_1 = arith.constant 0 : i32
    return %c0_i32, %c0_i32_0 : i32, i32
  }
  func.func @transform_6(%arg0: i32) -> (i32, i32) {
    %c0_i32 = arith.constant 0 : i32
    %c0_i32_0 = arith.constant 0 : i32
    %c0_i32_1 = arith.constant 0 : i32
    return %c0_i32, %c0_i32_0 : i32, i32
  }
  func.func @transform_7(%arg0: i32) -> (i32, i32) {
    %c0_i32 = arith.constant 0 : i32
    %c0_i32_0 = arith.constant 0 : i32
    %c0_i32_1 = arith.constant 0 : i32
    return %c0_i32, %c0_i32_0 : i32, i32
  }
  func.func @transform_8(%arg0: i32) -> (i32, i32) {
    %c0_i32 = arith.constant 0 : i32
    %c0_i32_0 = arith.constant 0 : i32
    %c0_i32_1 = arith.constant 0 : i32
    return %c0_i32, %c0_i32_0 : i32, i32
  }
  func.func @transform_9(%arg0: i32) -> (i32, i32) {
    %c0_i32 = arith.constant 0 : i32
    %c0_i32_0 = arith.constant 0 : i32
    %c0_i32_1 = arith.constant 0 : i32
    return %c0_i32, %c0_i32_0 : i32, i32
  }
  func.func @transform_10(%arg0: i32) -> (i32, i32) {
    %c0_i32 = arith.constant 0 : i32
    %c0_i32_0 = arith.constant 0 : i32
    %c0_i32_1 = arith.constant 0 : i32
    return %c0_i32, %c0_i32_0 : i32, i32
  }
  func.func @transform_11(%arg0: i32) -> (i32, i32) {
    %c0_i32 = arith.constant 0 : i32
    %c0_i32_0 = arith.constant 0 : i32
    %c0_i32_1 = arith.constant 0 : i32
    return %c0_i32, %c0_i32_0 : i32, i32
  }
  func.func @transform_12(%arg0: i32) -> (i32, i32) {
    %c0_i32 = arith.constant 0 : i32
    %c0_i32_0 = arith.constant 0 : i32
    %c0_i32_1 = arith.constant 0 : i32
    return %c0_i32, %c0_i32_0 : i32, i32
  }
  func.func @transform_13(%arg0: i32) -> (i32, i32, i32) {
    %c0_i32 = arith.constant 0 : i32
    %c0_i32_0 = arith.constant 0 : i32
    %c0_i32_1 = arith.constant 0 : i32
    return %arg0, %c0_i32, %c0_i32_0 : i32, i32, i32
  }
}

module attributes {stable_mosaic.version = 11 : i64} {
  func.func @block_kernel(%arg0: i32, %arg1: memref<2x8x32xf32, #tpu.memory_space<vmem>>, %arg2: memref<1x32xf32, #tpu.memory_space<vmem>>, %arg3: memref<1x32xf32, #tpu.memory_space<vmem>>, %arg4: memref<32x96xbf16, #tpu.memory_space<vmem>>, %arg5: memref<1x96xf32, #tpu.memory_space<vmem>>, %arg6: memref<32x32xbf16, #tpu.memory_space<vmem>>, %arg7: memref<1x32xf32, #tpu.memory_space<vmem>>, %arg8: memref<1x32xf32, #tpu.memory_space<vmem>>, %arg9: memref<1x32xf32, #tpu.memory_space<vmem>>, %arg10: memref<32x128xbf16, #tpu.memory_space<vmem>>, %arg11: memref<1x128xf32, #tpu.memory_space<vmem>>, %arg12: memref<128x32xbf16, #tpu.memory_space<vmem>>, %arg13: memref<1x32xf32, #tpu.memory_space<vmem>>, %arg14: memref<2x8x32xf32, #tpu.memory_space<vmem>>) attributes {dimension_semantics = [#tpu.dimension_semantics<parallel>], iteration_bounds = array<i64: 1>, scalar_prefetch = 0 : i64, scratch_operands = 0 : i64, tpu.core_type = #tpu.core_type<tc>, window_params = [{transform_indices = @transform_0, window_bounds = array<i64: 2, 8, 32>}, {pipeline_mode = #tpu.pipeline_mode<synchronous>, transform_indices = @transform_1, window_bounds = array<i64: 1, 32>}, {pipeline_mode = #tpu.pipeline_mode<synchronous>, transform_indices = @transform_2, window_bounds = array<i64: 1, 32>}, {pipeline_mode = #tpu.pipeline_mode<synchronous>, transform_indices = @transform_3, window_bounds = array<i64: 32, 96>}, {pipeline_mode = #tpu.pipeline_mode<synchronous>, transform_indices = @transform_4, window_bounds = array<i64: 1, 96>}, {pipeline_mode = #tpu.pipeline_mode<synchronous>, transform_indices = @transform_5, window_bounds = array<i64: 32, 32>}, {pipeline_mode = #tpu.pipeline_mode<synchronous>, transform_indices = @transform_6, window_bounds = array<i64: 1, 32>}, {pipeline_mode = #tpu.pipeline_mode<synchronous>, transform_indices = @transform_7, window_bounds = array<i64: 1, 32>}, {pipeline_mode = #tpu.pipeline_mode<synchronous>, transform_indices = @transform_8, window_bounds = array<i64: 1, 32>}, {pipeline_mode = #tpu.pipeline_mode<synchronous>, transform_indices = @transform_9, window_bounds = array<i64: 32, 128>}, {pipeline_mode = #tpu.pipeline_mode<synchronous>, transform_indices = @transform_10, window_bounds = array<i64: 1, 128>}, {pipeline_mode = #tpu.pipeline_mode<synchronous>, transform_indices = @transform_11, window_bounds = array<i64: 128, 32>}, {pipeline_mode = #tpu.pipeline_mode<synchronous>, transform_indices = @transform_12, window_bounds = array<i64: 1, 32>}, {transform_indices = @transform_13, window_bounds = array<i64: 2, 8, 32>}]} {
    %c0 = arith.constant 0 : index
    %c0_0 = arith.constant 0 : index
    %c0_1 = arith.constant 0 : index
    %0 = vector.load %arg1[%c0, %c0_0, %c0_1] : memref<2x8x32xf32, #tpu.memory_space<vmem>>, vector<2x8x32xf32>
    %1 = vector.shape_cast %0 : vector<2x8x32xf32> to vector<16x32xf32>
    %c0_2 = arith.constant 0 : index
    %c0_3 = arith.constant 0 : index
    %2 = vector.load %arg2[%c0_2, %c0_3] : memref<1x32xf32, #tpu.memory_space<vmem>>, vector<1x32xf32>
    %c0_4 = arith.constant 0 : index
    %c0_5 = arith.constant 0 : index
    %3 = vector.load %arg3[%c0_4, %c0_5] : memref<1x32xf32, #tpu.memory_space<vmem>>, vector<1x32xf32>
    %cst = arith.constant dense<0.000000e+00> : vector<16xf32>
    %4 = vector.multi_reduction <add>, %1, %cst [1] : vector<16x32xf32> to vector<16xf32>
    %5 = vector.shape_cast %4 : vector<16xf32> to vector<16x1xf32>
    %cst_6 = arith.constant 3.200000e+01 : f32
    %6 = vector.broadcast %cst_6 : f32 to vector<16x1xf32>
    %7 = arith.divf %5, %6 : vector<16x1xf32>
    %8 = vector.broadcast %7 : vector<16x1xf32> to vector<16x32xf32>
    %9 = arith.subf %1, %8 : vector<16x32xf32>
    %10 = arith.mulf %9, %9 : vector<16x32xf32>
    %cst_7 = arith.constant dense<0.000000e+00> : vector<16xf32>
    %11 = vector.multi_reduction <add>, %10, %cst_7 [1] : vector<16x32xf32> to vector<16xf32>
    %12 = vector.shape_cast %11 : vector<16xf32> to vector<16x1xf32>
    %cst_8 = arith.constant 3.200000e+01 : f32
    %13 = vector.broadcast %cst_8 : f32 to vector<16x1xf32>
    %14 = arith.divf %12, %13 : vector<16x1xf32>
    %cst_9 = arith.constant 9.99999974E-6 : f32
    %15 = vector.broadcast %cst_9 : f32 to vector<16x1xf32>
    %16 = arith.addf %14, %15 : vector<16x1xf32>
    %17 = math.rsqrt %16 : vector<16x1xf32>
    %18 = vector.broadcast %17 : vector<16x1xf32> to vector<16x32xf32>
    %19 = arith.mulf %9, %18 : vector<16x32xf32>
    %20 = vector.broadcast %2 : vector<1x32xf32> to vector<16x32xf32>
    %21 = arith.mulf %19, %20 : vector<16x32xf32>
    %22 = vector.broadcast %3 : vector<1x32xf32> to vector<16x32xf32>
    %23 = arith.addf %21, %22 : vector<16x32xf32>
    %24 = arith.truncf %23 : vector<16x32xf32> to vector<16x32xbf16>
    %c0_10 = arith.constant 0 : index
    %c0_11 = arith.constant 0 : index
    %25 = vector.load %arg4[%c0_10, %c0_11] : memref<32x96xbf16, #tpu.memory_space<vmem>>, vector<32x96xbf16>
    %cst_12 = arith.constant dense<0.000000e+00> : vector<16x96xf32>
    %26 = tpu.matmul %24, %25, %cst_12 {dimension_numbers = #tpu.dot_dimension_numbers<[1], [0], [0], [1], [0, 0, 1, 1], [], []>} : vector<16x32xbf16>, vector<32x96xbf16>, vector<16x96xf32> -> vector<16x96xf32>
    %c0_13 = arith.constant 0 : index
    %c0_14 = arith.constant 0 : index
    %27 = vector.load %arg5[%c0_13, %c0_14] : memref<1x96xf32, #tpu.memory_space<vmem>>, vector<1x96xf32>
    %28 = vector.broadcast %27 : vector<1x96xf32> to vector<16x96xf32>
    %29 = arith.addf %26, %28 : vector<16x96xf32>
    %30 = vector.extract_strided_slice %29 {offsets = [0, 0], sizes = [16, 32], strides = [1, 1]} : vector<16x96xf32> to vector<16x32xf32>
    %31 = vector.extract_strided_slice %29 {offsets = [0, 32], sizes = [16, 32], strides = [1, 1]} : vector<16x96xf32> to vector<16x32xf32>
    %32 = vector.extract_strided_slice %29 {offsets = [0, 64], sizes = [16, 32], strides = [1, 1]} : vector<16x96xf32> to vector<16x32xf32>
    %33 = arith.truncf %30 : vector<16x32xf32> to vector<16x32xbf16>
    %34 = vector.shape_cast %33 : vector<16x32xbf16> to vector<2x8x4x8xbf16>
    %35 = tpu.transpose %34, [0, 2, 1, 3] : vector<2x8x4x8xbf16> -> vector<2x4x8x8xbf16>
    %36 = vector.shape_cast %35 : vector<2x4x8x8xbf16> to vector<8x8x8xbf16>
    %37 = arith.truncf %31 : vector<16x32xf32> to vector<16x32xbf16>
    %38 = vector.shape_cast %37 : vector<16x32xbf16> to vector<2x8x4x8xbf16>
    %39 = tpu.transpose %38, [0, 2, 1, 3] : vector<2x8x4x8xbf16> -> vector<2x4x8x8xbf16>
    %40 = vector.shape_cast %39 : vector<2x4x8x8xbf16> to vector<8x8x8xbf16>
    %41 = arith.truncf %32 : vector<16x32xf32> to vector<16x32xbf16>
    %42 = vector.shape_cast %41 : vector<16x32xbf16> to vector<2x8x4x8xbf16>
    %43 = tpu.transpose %42, [0, 2, 1, 3] : vector<2x8x4x8xbf16> -> vector<2x4x8x8xbf16>
    %44 = vector.shape_cast %43 : vector<2x4x8x8xbf16> to vector<8x8x8xbf16>
    "tpu.trace_start"() <{level = 10 : i32, message = "htd,hsd->hts"}> : () -> ()
    %cst_15 = arith.constant dense<0.000000e+00> : vector<8x8x8xf32>
    %45 = tpu.matmul %36, %40, %cst_15 {dimension_numbers = #tpu.dot_dimension_numbers<[2], [2], [1], [1], [0, 0, 0, 1, 1, 1], [0], [0]>} : vector<8x8x8xbf16>, vector<8x8x8xbf16>, vector<8x8x8xf32> -> vector<8x8x8xf32>
    "tpu.trace_stop"() : () -> ()
    %46 = tpu.iota {dimensions = array<i32: 0>} : vector<8x8xi32>
    %47 = tpu.iota {dimensions = array<i32: 1>} : vector<8x8xi32>
    %48 = arith.cmpi sge, %46, %47 : vector<8x8xi32>
    %49 = vector.shape_cast %48 : vector<8x8xi1> to vector<1x8x8xi1>
    %cst_16 = arith.constant -1.000000e+30 : f32
    %50 = vector.shape_cast %49 : vector<1x8x8xi1> to vector<1x8x8xi1>
    %51 = vector.broadcast %50 : vector<1x8x8xi1> to vector<8x8x8xi1>
    %52 = vector.broadcast %cst_16 : f32 to vector<8x8x8xf32>
    %53 = arith.select %51, %45, %52 : vector<8x8x8xi1>, vector<8x8x8xf32>
    %cst_17 = arith.constant dense<0xFF800000> : vector<8x8xf32>
    %54 = vector.multi_reduction <maximumf>, %53, %cst_17 [2] : vector<8x8x8xf32> to vector<8x8xf32>
    %55 = vector.shape_cast %54 : vector<8x8xf32> to vector<8x8x1xf32>
    %56 = vector.broadcast %55 : vector<8x8x1xf32> to vector<8x8x8xf32>
    %57 = arith.subf %53, %56 : vector<8x8x8xf32>
    %58 = math.exp %57 : vector<8x8x8xf32>
    %cst_18 = arith.constant dense<0.000000e+00> : vector<8x8xf32>
    %59 = vector.multi_reduction <add>, %58, %cst_18 [2] : vector<8x8x8xf32> to vector<8x8xf32>
    %60 = vector.shape_cast %59 : vector<8x8xf32> to vector<8x8x1xf32>
    %61 = tpu.reciprocal %60 {approx = true} : vector<8x8x1xf32> -> vector<8x8x1xf32>
    %62 = vector.broadcast %61 : vector<8x8x1xf32> to vector<8x8x8xf32>
    %63 = arith.mulf %58, %62 : vector<8x8x8xf32>
    %64 = arith.truncf %63 : vector<8x8x8xf32> to vector<8x8x8xbf16>
    "tpu.trace_start"() <{level = 10 : i32, message = "hts,hsd->htd"}> : () -> ()
    %cst_19 = arith.constant dense<0.000000e+00> : vector<8x8x8xf32>
    %65 = tpu.matmul %64, %44, %cst_19 {dimension_numbers = #tpu.dot_dimension_numbers<[2], [1], [1], [2], [0, 0, 0, 1, 1, 2], [0], [0]>} : vector<8x8x8xbf16>, vector<8x8x8xbf16>, vector<8x8x8xf32> -> vector<8x8x8xf32>
    "tpu.trace_stop"() : () -> ()
    %66 = vector.shape_cast %65 : vector<8x8x8xf32> to vector<2x4x8x8xf32>
    %67 = tpu.transpose %66, [0, 2, 1, 3] : vector<2x4x8x8xf32> -> vector<2x8x4x8xf32>
    %68 = vector.shape_cast %67 : vector<2x8x4x8xf32> to vector<16x32xf32>
    %69 = arith.truncf %68 : vector<16x32xf32> to vector<16x32xbf16>
    %c0_20 = arith.constant 0 : index
    %c0_21 = arith.constant 0 : index
    %70 = vector.load %arg6[%c0_20, %c0_21] : memref<32x32xbf16, #tpu.memory_space<vmem>>, vector<32x32xbf16>
    %cst_22 = arith.constant dense<0.000000e+00> : vector<16x32xf32>
    %71 = tpu.matmul %69, %70, %cst_22 {dimension_numbers = #tpu.dot_dimension_numbers<[1], [0], [0], [1], [0, 0, 1, 1], [], []>} : vector<16x32xbf16>, vector<32x32xbf16>, vector<16x32xf32> -> vector<16x32xf32>
    %c0_23 = arith.constant 0 : index
    %c0_24 = arith.constant 0 : index
    %72 = vector.load %arg7[%c0_23, %c0_24] : memref<1x32xf32, #tpu.memory_space<vmem>>, vector<1x32xf32>
    %73 = vector.broadcast %72 : vector<1x32xf32> to vector<16x32xf32>
    %74 = arith.addf %71, %73 : vector<16x32xf32>
    %75 = arith.addf %1, %74 : vector<16x32xf32>
    %c0_25 = arith.constant 0 : index
    %c0_26 = arith.constant 0 : index
    %76 = vector.load %arg8[%c0_25, %c0_26] : memref<1x32xf32, #tpu.memory_space<vmem>>, vector<1x32xf32>
    %c0_27 = arith.constant 0 : index
    %c0_28 = arith.constant 0 : index
    %77 = vector.load %arg9[%c0_27, %c0_28] : memref<1x32xf32, #tpu.memory_space<vmem>>, vector<1x32xf32>
    %cst_29 = arith.constant dense<0.000000e+00> : vector<16xf32>
    %78 = vector.multi_reduction <add>, %75, %cst_29 [1] : vector<16x32xf32> to vector<16xf32>
    %79 = vector.shape_cast %78 : vector<16xf32> to vector<16x1xf32>
    %cst_30 = arith.constant 3.200000e+01 : f32
    %80 = vector.broadcast %cst_30 : f32 to vector<16x1xf32>
    %81 = arith.divf %79, %80 : vector<16x1xf32>
    %82 = vector.broadcast %81 : vector<16x1xf32> to vector<16x32xf32>
    %83 = arith.subf %75, %82 : vector<16x32xf32>
    %84 = arith.mulf %83, %83 : vector<16x32xf32>
    %cst_31 = arith.constant dense<0.000000e+00> : vector<16xf32>
    %85 = vector.multi_reduction <add>, %84, %cst_31 [1] : vector<16x32xf32> to vector<16xf32>
    %86 = vector.shape_cast %85 : vector<16xf32> to vector<16x1xf32>
    %cst_32 = arith.constant 3.200000e+01 : f32
    %87 = vector.broadcast %cst_32 : f32 to vector<16x1xf32>
    %88 = arith.divf %86, %87 : vector<16x1xf32>
    %cst_33 = arith.constant 9.99999974E-6 : f32
    %89 = vector.broadcast %cst_33 : f32 to vector<16x1xf32>
    %90 = arith.addf %88, %89 : vector<16x1xf32>
    %91 = math.rsqrt %90 : vector<16x1xf32>
    %92 = vector.broadcast %91 : vector<16x1xf32> to vector<16x32xf32>
    %93 = arith.mulf %83, %92 : vector<16x32xf32>
    %94 = vector.broadcast %76 : vector<1x32xf32> to vector<16x32xf32>
    %95 = arith.mulf %93, %94 : vector<16x32xf32>
    %96 = vector.broadcast %77 : vector<1x32xf32> to vector<16x32xf32>
    %97 = arith.addf %95, %96 : vector<16x32xf32>
    %98 = arith.truncf %97 : vector<16x32xf32> to vector<16x32xbf16>
    %c0_34 = arith.constant 0 : index
    %c0_35 = arith.constant 0 : index
    %99 = vector.load %arg10[%c0_34, %c0_35] : memref<32x128xbf16, #tpu.memory_space<vmem>>, vector<32x128xbf16>
    %cst_36 = arith.constant dense<0.000000e+00> : vector<16x128xf32>
    %100 = tpu.matmul %98, %99, %cst_36 {dimension_numbers = #tpu.dot_dimension_numbers<[1], [0], [0], [1], [0, 0, 1, 1], [], []>} : vector<16x32xbf16>, vector<32x128xbf16>, vector<16x128xf32> -> vector<16x128xf32>
    %c0_37 = arith.constant 0 : index
    %c0_38 = arith.constant 0 : index
    %101 = vector.load %arg11[%c0_37, %c0_38] : memref<1x128xf32, #tpu.memory_space<vmem>>, vector<1x128xf32>
    %102 = vector.broadcast %101 : vector<1x128xf32> to vector<16x128xf32>
    %103 = arith.addf %100, %102 : vector<16x128xf32>
    %cst_39 = arith.constant 5.000000e-01 : f32
    %104 = vector.broadcast %cst_39 : f32 to vector<16x128xf32>
    %105 = arith.mulf %104, %103 : vector<16x128xf32>
    %cst_40 = arith.constant 0.707106769 : f32
    %106 = vector.broadcast %cst_40 : f32 to vector<16x128xf32>
    %107 = arith.mulf %103, %106 : vector<16x128xf32>
    %cst_41 = arith.constant 0.000000e+00 : f32
    %108 = vector.broadcast %cst_41 : f32 to vector<16x128xf32>
    %109 = arith.cmpf oge, %107, %108 : vector<16x128xf32>
    %cst_42 = arith.constant 1.000000e+00 : f32
    %cst_43 = arith.constant -1.000000e+00 : f32
    %110 = vector.broadcast %cst_42 : f32 to vector<16x128xf32>
    %111 = vector.broadcast %cst_43 : f32 to vector<16x128xf32>
    %112 = arith.select %109, %110, %111 : vector<16x128xi1>, vector<16x128xf32>
    %113 = math.absf %107 : vector<16x128xf32>
    %cst_44 = arith.constant 0.327591091 : f32
    %114 = vector.broadcast %cst_44 : f32 to vector<16x128xf32>
    %115 = arith.mulf %114, %113 : vector<16x128xf32>
    %cst_45 = arith.constant 1.000000e+00 : f32
    %116 = vector.broadcast %cst_45 : f32 to vector<16x128xf32>
    %117 = arith.addf %116, %115 : vector<16x128xf32>
    %cst_46 = arith.constant 1.000000e+00 : f32
    %118 = vector.broadcast %cst_46 : f32 to vector<16x128xf32>
    %119 = arith.divf %118, %117 : vector<16x128xf32>
    %cst_47 = arith.constant 1.06140542 : f32
    %120 = vector.broadcast %cst_47 : f32 to vector<16x128xf32>
    %121 = arith.mulf %120, %119 : vector<16x128xf32>
    %cst_48 = arith.constant -1.45315206 : f32
    %122 = vector.broadcast %cst_48 : f32 to vector<16x128xf32>
    %123 = arith.addf %121, %122 : vector<16x128xf32>
    %124 = arith.mulf %123, %119 : vector<16x128xf32>
    %cst_49 = arith.constant 1.42141378 : f32
    %125 = vector.broadcast %cst_49 : f32 to vector<16x128xf32>
    %126 = arith.addf %124, %125 : vector<16x128xf32>
    %127 = arith.mulf %126, %119 : vector<16x128xf32>
    %cst_50 = arith.constant -0.284496725 : f32
    %128 = vector.broadcast %cst_50 : f32 to vector<16x128xf32>
    %129 = arith.addf %127, %128 : vector<16x128xf32>
    %130 = arith.mulf %129, %119 : vector<16x128xf32>
    %cst_51 = arith.constant 0.254829586 : f32
    %131 = vector.broadcast %cst_51 : f32 to vector<16x128xf32>
    %132 = arith.addf %130, %131 : vector<16x128xf32>
    %133 = arith.mulf %132, %119 : vector<16x128xf32>
    %cst_52 = arith.constant 0.000000e+00 : f32
    %134 = vector.broadcast %cst_52 : f32 to vector<16x128xf32>
    %135 = arith.subf %134, %113 : vector<16x128xf32>
    %136 = arith.mulf %135, %113 : vector<16x128xf32>
    %137 = math.exp %136 : vector<16x128xf32>
    %138 = arith.mulf %133, %137 : vector<16x128xf32>
    %cst_53 = arith.constant 1.000000e+00 : f32
    %139 = vector.broadcast %cst_53 : f32 to vector<16x128xf32>
    %140 = arith.subf %139, %138 : vector<16x128xf32>
    %141 = arith.mulf %112, %140 : vector<16x128xf32>
    %cst_54 = arith.constant 1.000000e+00 : f32
    %142 = vector.broadcast %cst_54 : f32 to vector<16x128xf32>
    %143 = arith.addf %142, %141 : vector<16x128xf32>
    %144 = arith.mulf %105, %143 : vector<16x128xf32>
    %145 = arith.truncf %144 : vector<16x128xf32> to vector<16x128xbf16>
    %c0_55 = arith.constant 0 : index
    %c0_56 = arith.constant 0 : index
    %146 = vector.load %arg12[%c0_55, %c0_56] : memref<128x32xbf16, #tpu.memory_space<vmem>>, vector<128x32xbf16>
    %cst_57 = arith.constant dense<0.000000e+00> : vector<16x32xf32>
    %147 = tpu.matmul %145, %146, %cst_57 {dimension_numbers = #tpu.dot_dimension_numbers<[1], [0], [0], [1], [0, 0, 1, 1], [], []>} : vector<16x128xbf16>, vector<128x32xbf16>, vector<16x32xf32> -> vector<16x32xf32>
    %c0_58 = arith.constant 0 : index
    %c0_59 = arith.constant 0 : index
    %148 = vector.load %arg13[%c0_58, %c0_59] : memref<1x32xf32, #tpu.memory_space<vmem>>, vector<1x32xf32>
    %149 = vector.broadcast %148 : vector<1x32xf32> to vector<16x32xf32>
    %150 = arith.addf %147, %149 : vector<16x32xf32>
    %151 = arith.addf %75, %150 : vector<16x32xf32>
    %152 = vector.shape_cast %151 : vector<16x32xf32> to vector<2x8x32xf32>
    %c0_60 = arith.constant 0 : index
    %c0_61 = arith.constant 0 : index
    %c0_62 = arith.constant 0 : index
    %153 = vector.load %arg14[%c0_60, %c0_61, %c0_62] : memref<2x8x32xf32, #tpu.memory_space<vmem>>, vector<2x8x32xf32>
    tpu.vector_store %arg14[%c0_60, %c0_61, %c0_62], %152 {strides = array<i32>} : memref<2x8x32xf32, #tpu.memory_space<vmem>>, vector<2x8x32xf32>,
    return
  }
  func.func @transform_0(%arg0: i32) -> (i32, i32, i32) {
    %c0_i32 = arith.constant 0 : i32
    %c0_i32_0 = arith.constant 0 : i32
    %c0_i32_1 = arith.constant 0 : i32
    return %arg0, %c0_i32, %c0_i32_0 : i32, i32, i32
  }
  func.func @transform_1(%arg0: i32) -> (i32, i32) {
    %c0_i32 = arith.constant 0 : i32
    %c0_i32_0 = arith.constant 0 : i32
    %c0_i32_1 = arith.constant 0 : i32
    return %c0_i32, %c0_i32_0 : i32, i32
  }
  func.func @transform_2(%arg0: i32) -> (i32, i32) {
    %c0_i32 = arith.constant 0 : i32
    %c0_i32_0 = arith.constant 0 : i32
    %c0_i32_1 = arith.constant 0 : i32
    return %c0_i32, %c0_i32_0 : i32, i32
  }
  func.func @transform_3(%arg0: i32) -> (i32, i32) {
    %c0_i32 = arith.constant 0 : i32
    %c0_i32_0 = arith.constant 0 : i32
    %c0_i32_1 = arith.constant 0 : i32
    return %c0_i32, %c0_i32_0 : i32, i32
  }
  func.func @transform_4(%arg0: i32) -> (i32, i32) {
    %c0_i32 = arith.constant 0 : i32
    %c0_i32_0 = arith.constant 0 : i32
    %c0_i32_1 = arith.constant 0 : i32
    return %c0_i32, %c0_i32_0 : i32, i32
  }
  func.func @transform_5(%arg0: i32) -> (i32, i32) {
    %c0_i32 = arith.constant 0 : i32
    %c0_i32_0 = arith.constant 0 : i32
    %c0_i32_1 = arith.constant 0 : i32
    return %c0_i32, %c0_i32_0 : i32, i32
  }
  func.func @transform_6(%arg0: i32) -> (i32, i32) {
    %c0_i32 = arith.constant 0 : i32
    %c0_i32_0 = arith.constant 0 : i32
    %c0_i32_1 = arith.constant 0 : i32
    return %c0_i32, %c0_i32_0 : i32, i32
  }
  func.func @transform_7(%arg0: i32) -> (i32, i32) {
    %c0_i32 = arith.constant 0 : i32
    %c0_i32_0 = arith.constant 0 : i32
    %c0_i32_1 = arith.constant 0 : i32
    return %c0_i32, %c0_i32_0 : i32, i32
  }
  func.func @transform_8(%arg0: i32) -> (i32, i32) {
    %c0_i32 = arith.constant 0 : i32
    %c0_i32_0 = arith.constant 0 : i32
    %c0_i32_1 = arith.constant 0 : i32
    return %c0_i32, %c0_i32_0 : i32, i32
  }
  func.func @transform_9(%arg0: i32) -> (i32, i32) {
    %c0_i32 = arith.constant 0 : i32
    %c0_i32_0 = arith.constant 0 : i32
    %c0_i32_1 = arith.constant 0 : i32
    return %c0_i32, %c0_i32_0 : i32, i32
  }
  func.func @transform_10(%arg0: i32) -> (i32, i32) {
    %c0_i32 = arith.constant 0 : i32
    %c0_i32_0 = arith.constant 0 : i32
    %c0_i32_1 = arith.constant 0 : i32
    return %c0_i32, %c0_i32_0 : i32, i32
  }
  func.func @transform_11(%arg0: i32) -> (i32, i32) {
    %c0_i32 = arith.constant 0 : i32
    %c0_i32_0 = arith.constant 0 : i32
    %c0_i32_1 = arith.constant 0 : i32
    return %c0_i32, %c0_i32_0 : i32, i32
  }
  func.func @transform_12(%arg0: i32) -> (i32, i32) {
    %c0_i32 = arith.constant 0 : i32
    %c0_i32_0 = arith.constant 0 : i32
    %c0_i32_1 = arith.constant 0 : i32
    return %c0_i32, %c0_i32_0 : i32, i32
  }
  func.func @transform_13(%arg0: i32) -> (i32, i32, i32) {
    %c0_i32 = arith.constant 0 : i32
    %c0_i32_0 = arith.constant 0 : i32
    %c0_i32_1 = arith.constant 0 : i32
    return %arg0, %c0_i32, %c0_i32_0 : i32, i32, i32
  }
}

</mosaic_0001>

<llo_original>
// kernel: tpu_custom_call.1
$region0: #{tpu_custom_call.1}
  #allocation0 [shape = 'u32[]', space=smem, size = 0x4, offset = 0x4, fixed_abs, tag = 'smem constant byte address 0x4 - core index']
  #allocation1 [shape = 'u32[144,128]{1,0:T(1,128)}', space=vmem, size = 0x12000, scoped, tag = 'internal scratch']
  %s0 = inlined_call_operand.vmem [shape: f32[2,8,32], index: 0, kind: input, shape index: {}]
  %s1 = inlined_call_operand.vmem [shape: f32[1,32], index: 1, kind: input, shape index: {}]
  %s2 = inlined_call_operand.vmem [shape: f32[1,32], index: 2, kind: input, shape index: {}]
  %s3 = inlined_call_operand.vmem [shape: bf16[32,96], index: 3, kind: input, shape index: {}]
  %s4 = inlined_call_operand.vmem [shape: f32[1,96], index: 4, kind: input, shape index: {}]
  %s5 = inlined_call_operand.vmem [shape: bf16[32,32], index: 5, kind: input, shape index: {}]
  %s6 = inlined_call_operand.vmem [shape: f32[1,32], index: 6, kind: input, shape index: {}]
  %s7 = inlined_call_operand.vmem [shape: f32[1,32], index: 7, kind: input, shape index: {}]
  %s8 = inlined_call_operand.vmem [shape: f32[1,32], index: 8, kind: input, shape index: {}]
  %s9 = inlined_call_operand.vmem [shape: bf16[32,128], index: 9, kind: input, shape index: {}]
  %s10 = inlined_call_operand.vmem [shape: f32[1,128], index: 10, kind: input, shape index: {}]
  %s11 = inlined_call_operand.vmem [shape: bf16[128,32], index: 11, kind: input, shape index: {}]
  %s12 = inlined_call_operand.vmem [shape: f32[1,32], index: 12, kind: input, shape index: {}]
  %s13 = inlined_call_operand.hbm [shape: f32[2,8,32], index: 13, kind: output, shape index: {}]
  %s14 = sld [smem:[#allocation0]]
  $region62: #{tpu_custom_call.1} parent=0
    _
  %s16 = ssub.s32 1, %s14
  %s17 = scalar_select 0, %s16, %s14
  $region1: #{tpu_custom_call.1} parent=0
    #allocation2 [shape = 'u8[8192]{0}', space=vmem, size = 0x2000, scoped, tag = 'output window, operand 0, single buffered']
    #allocation3 [shape = 's32[1]{0}', space=sflag, size = 0x4, scoped, tag = 'scoped memory for tpu_custom_call.1']
    %18 = vsyncpa [#allocation3], 0
    // Predicated region
    $region2: #{tpu_custom_call.1} parent=1 // pred_check
      _
    $region3: #{tpu_custom_call.1} parent=1 // pred_check_branch
      %20 = sbr.rel (0) target = $region5
    $region4: #{tpu_custom_call.1} parent=1 // pred_region
      _
    $region5: #{tpu_custom_call.1} parent=1 // pred_fallthru
      _
    // Predicated region
    $region6: #{tpu_custom_call.1} parent=1 // pred_check
      _
    $region7: #{tpu_custom_call.1} parent=1 // pred_check_branch
      %22 = sbr.rel (0) target = $region9
    $region8: #{tpu_custom_call.1} parent=1 // pred_region
      _
    $region9: #{tpu_custom_call.1} parent=1 // pred_fallthru
      _
    // Predicated region
    $region10: #{tpu_custom_call.1} parent=1 // pred_check
      _
    $region11: #{tpu_custom_call.1} parent=1 // pred_check_branch
      %24 = sbr.rel (0) target = $region13
    $region12: #{tpu_custom_call.1} parent=1 // pred_region
      _
    $region13: #{tpu_custom_call.1} parent=1 // pred_fallthru
      _
    // Predicated region
    $region14: #{tpu_custom_call.1} parent=1 // pred_check
      _
    $region15: #{tpu_custom_call.1} parent=1 // pred_check_branch
      %26 = sbr.rel (0) target = $region17
    $region16: #{tpu_custom_call.1} parent=1 // pred_region
      _
    $region17: #{tpu_custom_call.1} parent=1 // pred_fallthru
      _
    // Predicated region
    $region18: #{tpu_custom_call.1} parent=1 // pred_check
      _
    $region19: #{tpu_custom_call.1} parent=1 // pred_check_branch
      %28 = sbr.rel (0) target = $region21
    $region20: #{tpu_custom_call.1} parent=1 // pred_region
      _
    $region21: #{tpu_custom_call.1} parent=1 // pred_fallthru
      _
    // Predicated region
    $region22: #{tpu_custom_call.1} parent=1 // pred_check
      _
    $region23: #{tpu_custom_call.1} parent=1 // pred_check_branch
      %30 = sbr.rel (0) target = $region25
    $region24: #{tpu_custom_call.1} parent=1 // pred_region
      _
    $region25: #{tpu_custom_call.1} parent=1 // pred_fallthru
      _
    // Predicated region
    $region26: #{tpu_custom_call.1} parent=1 // pred_check
      _
    $region27: #{tpu_custom_call.1} parent=1 // pred_check_branch
      %32 = sbr.rel (0) target = $region29
    $region28: #{tpu_custom_call.1} parent=1 // pred_region
      _
    $region29: #{tpu_custom_call.1} parent=1 // pred_fallthru
      _
    // Predicated region
    $region30: #{tpu_custom_call.1} parent=1 // pred_check
      _
    $region31: #{tpu_custom_call.1} parent=1 // pred_check_branch
      %34 = sbr.rel (0) target = $region33
    $region32: #{tpu_custom_call.1} parent=1 // pred_region
      _
    $region33: #{tpu_custom_call.1} parent=1 // pred_fallthru
      _
    // Predicated region
    $region34: #{tpu_custom_call.1} parent=1 // pred_check
      _
    $region35: #{tpu_custom_call.1} parent=1 // pred_check_branch
      %36 = sbr.rel (0) target = $region37
    $region36: #{tpu_custom_call.1} parent=1 // pred_region
      _
    $region37: #{tpu_custom_call.1} parent=1 // pred_fallthru
      _
    // Predicated region
    $region38: #{tpu_custom_call.1} parent=1 // pred_check
      _
    $region39: #{tpu_custom_call.1} parent=1 // pred_check_branch
      %38 = sbr.rel (0) target = $region41
    $region40: #{tpu_custom_call.1} parent=1 // pred_region
      _
    $region41: #{tpu_custom_call.1} parent=1 // pred_fallthru
      _
    // Predicated region
    $region42: #{tpu_custom_call.1} parent=1 // pred_check
      _
    $region43: #{tpu_custom_call.1} parent=1 // pred_check_branch
      %40 = sbr.rel (0) target = $region45
    $region44: #{tpu_custom_call.1} parent=1 // pred_region
      _
    $region45: #{tpu_custom_call.1} parent=1 // pred_fallthru
      _
    // Predicated region
    $region46: #{tpu_custom_call.1} parent=1 // pred_check
      _
    $region47: #{tpu_custom_call.1} parent=1 // pred_check_branch
      %42 = sbr.rel (0) target = $region49
    $region48: #{tpu_custom_call.1} parent=1 // pred_region
      _
    $region49: #{tpu_custom_call.1} parent=1 // pred_fallthru
      _
    // Predicated region
    $region50: #{tpu_custom_call.1} parent=1 // pred_check
      _
    $region51: #{tpu_custom_call.1} parent=1 // pred_check_branch
      %44 = sbr.rel (0) target = $region53
    $region52: #{tpu_custom_call.1} parent=1 // pred_region
      _
    $region53: #{tpu_custom_call.1} parent=1 // pred_fallthru
      _
    %v46 = vld [vmem:[%s0] sm:$0xff]
    %v47 = vld [vmem:[%s0 + $0x8] sm:$0xff]
    %v48 = vld [vmem:[%s1] sm:$0x1]
    %v49 = vld [vmem:[%s2] sm:$0x1]
    %vm50 = vcmask 261120
    %v51 = vsel %vm50, %v46, 0.0
    %52 = vadd.xlane.f32.xlu0 %v51
    %v53 = vpop.xlane.xlu0 %52
    %v54 = vsel %vm50, %v47, 0.0
    %55 = vadd.xlane.f32.xlu0 %v54
    %v56 = vpop.xlane.xlu0 %55
    %v57 = vrcp.pop 32.0
    %v58 = vmul.f32 %v53, %v57
    %v59 = vmul.f32 %v56, %v57
    %v60 = vsub.f32 %v46, %v58
    %v61 = vsub.f32 %v47, %v59
    %v62 = vmul.f32 %v60, %v60
    %v63 = vmul.f32 %v61, %v61
    %v64 = vsel %vm50, %v62, 0.0
    %65 = vadd.xlane.f32.xlu0 %v64
    %v66 = vpop.xlane.xlu0 %65
    %v67 = vsel %vm50, %v63, 0.0
    %68 = vadd.xlane.f32.xlu0 %v67
    %v69 = vpop.xlane.xlu0 %68
    %v70 = vmul.f32 %v66, %v57
    %v71 = vmul.f32 %v69, %v57
    %v72 = vadd.f32 %v70, 1e-05
    %v73 = vadd.f32 %v71, 1e-05
    %v74 = vrsqrt.pop %v72
    %v75 = vrsqrt.pop %v73
    %v76 = vmul.f32 %v60, %v74
    %v77 = vmul.f32 %v61, %v75
    %v79 = vlaneseq
    %v80 = vshrl.u32 %v79, 7
    %v81 = vsub.s32 0, %v80
    %v82 = vrot.slane %v48, %v81
    %v84 = vmul.f32 %v76, %v82
    %v85 = vmul.f32 %v77, %v82
    %v87 = vlaneseq
    %v88 = vshrl.u32 %v87, 7
    %v89 = vsub.s32 0, %v88
    %v90 = vrot.slane %v49, %v89
    %v92 = vadd.f32 %v84, %v90
    %v93 = vadd.f32 %v85, %v90
    %v94 = vpack.c.bf16 %v93, %v92
    %v95 = vld [vmem:[%s3] sm:$0xf]
    %v96 = vld [vmem:[%s3 + $0x4] sm:$0xf]
    %v97 = vld [vmem:[%s3 + $0x8] sm:$0xf]
    %v98 = vld [vmem:[%s3 + $0xc] sm:$0xf]
    %v99 = vld [vmem:[%s4] sm:$0x1]
    %v101 = vlaneseq
    %v102 = vshrl.u32 %v101, 7
    %v103 = vsub.s32 0, %v102
    %v104 = vrot.slane %v99, %v103
    %v110 = vunpack.c.l.b16 %v95
    %v111 = vunpack.c.l.b16 %v96
    %v112 = vunpack.c.l.b16 %v97
    %v113 = vunpack.c.l.b16 %v98
    %v114 = vpack.c.b16 %v111, %v110
    %v115 = vpack.c.b16 %v113, %v112
    %v119 = vsel %vm50, %v94, 0
    %121 = vmatprep.subr.bf16.mxu0 0
    %122 = vmatpush1.bf16.msra.mxu0 0
    %123 = vmatprep.subr.bf16.mxu0 0
    %124 = vmatpush1.bf16.msra.mxu0 0
    %125 = vmatprep.subr.bf16.mxu0 0
    %126 = vmatpush1.bf16.msra.mxu0 0
    %127 = vmatprep.subr.bf16.mxu0 0
    %128 = vmatpush1.bf16.msra.mxu0 0
    %129 = vmatprep.subr.bf16.mxu0 0
    %130 = vmatpush1.bf16.msra.mxu0 0
    %131 = vmatprep.subr.bf16.mxu0 0
    %132 = vmatpush1.bf16.msra.mxu0 0
    %133 = vmatprep.subr.bf16.mxu0 0
    %134 = vmatpush1.bf16.msra.mxu0 %v115
    %135 = vmatprep.subr.bf16.mxu0 0
    %136 = vmatpush1.bf16.msra.mxu0 %v114
    %137 = vmatprep.subr.bf16.mxu0 0
    %138 = vmatpush2.bf16.msra.mxu0 0
    %139 = vmatprep.subr.bf16.mxu0 0
    %140 = vmatpush2.bf16.msra.mxu0 0
    %141 = vmatprep.subr.bf16.mxu0 0
    %142 = vmatpush2.bf16.msra.mxu0 0
    %143 = vmatprep.subr.bf16.mxu0 0
    %144 = vmatpush2.bf16.msra.mxu0 0
    %145 = vmatprep.subr.bf16.mxu0 0
    %146 = vmatpush2.bf16.msra.mxu0 0
    %147 = vmatprep.subr.bf16.mxu0 0
    %148 = vmatpush2.bf16.msra.mxu0 0
    %149 = vmatprep.subr.bf16.mxu0 0
    %150 = vmatpush2.bf16.msra.mxu0 0
    %151 = vmatprep.subr.bf16.mxu0 0
    %152 = vmatpush2.bf16.msra.mxu0 0
    %153 = vmatprep.mubr.bf16.mxu0 0
    %154 = vmatmul.mubr.bf16.gmra.mxu0 %v119
    %v155 = vpop.f32.mrf.mxu0
    %v156 = vadd.f32 %v104, %v155
    %v157 = vpop.f32.mrf.mxu0
    %v158 = vpop.f32.mrf.mxu0
    %v159 = vadd.f32 %v104, %v158
    %v160 = vpop.f32.mrf.mxu0
    %161 = vdwg.mxu0
    %v162 = vpack.c.bf16 %v159, %v156
    %164 = vrot.lane.b32.xlu0 %v162, 120
    %v165 = vpop.permute.xlu0 %164
    %166 = vrot.lane.b32.xlu0 %v162, 112
    %v167 = vpop.permute.xlu0 %166
    %168 = vrot.lane.b32.xlu0 %v162, 104
    %v169 = vpop.permute.xlu0 %168
    %v172 = vpack.i.b16 %v165, %v162
    %v174 = vshrl.u32 %v162, 16
    %v175 = vshrl.u32 %v165, 16
    %v176 = vpack.i.b16 %v175, %v174
    %v180 = vpack.i.b16 %v169, %v167
    %v182 = vshrl.u32 %v167, 16
    %v183 = vshrl.u32 %v169, 16
    %v184 = vpack.i.b16 %v183, %v182
    %v187 = vpack.i.b16 0, 0
    %v189 = vshrl.u32 0, 16
    %v190 = vpack.i.b16 %v189, %v189
    %v192 = vcombine.high %v172, %v187
    %v194 = vunpack.c.l.s4 1983009808
    %v195 = vunpack.c.0.s8 %v194
    %v196 = vlaneseq
    %v197 = vshrl.u32 %v196, 7
    %v198 = vsub.s32 %v195, %v197
    %v199 = vrot.slane %v172, %v198
    %v201 = vunpack.c.l.s4 1983009808
    %v202 = vunpack.c.0.s8 %v201
    %v203 = vlaneseq
    %v204 = vshrl.u32 %v203, 7
    %v205 = vsub.s32 %v202, %v204
    %v206 = vrot.slane %v192, %v205
    %v207 = vcombine.high %v180, %v187
    %v209 = vunpack.c.l.s4 1983009808
    %v210 = vunpack.c.0.s8 %v209
    %v211 = vlaneseq
    %v212 = vshrl.u32 %v211, 7
    %v213 = vsub.s32 %v210, %v212
    %v214 = vrot.slane %v180, %v213
    %v216 = vunpack.c.l.s4 1983009808
    %v217 = vunpack.c.0.s8 %v216
    %v218 = vlaneseq
    %v219 = vshrl.u32 %v218, 7
    %v220 = vsub.s32 %v217, %v219
    %v221 = vrot.slane %v207, %v220
    %v222 = vcombine.low %v199, %v214
    %v223 = vcombine.high %v199, %v214
    %v225 = vunpack.c.l.s4 1934713408
    %v226 = vunpack.c.0.s8 %v225
    %v227 = vlaneseq
    %v228 = vshrl.u32 %v227, 7
    %v229 = vsub.s32 %v226, %v228
    %v230 = vrot.slane %v222, %v229
    %v232 = vunpack.c.l.s4 1934713408
    %v233 = vunpack.c.0.s8 %v232
    %v234 = vlaneseq
    %v235 = vshrl.u32 %v234, 7
    %v236 = vsub.s32 %v233, %v235
    %v237 = vrot.slane %v223, %v236
    %v238 = vcombine.low %v206, %v221
    %v239 = vcombine.high %v206, %v221
    %v241 = vunpack.c.l.s4 1934713408
    %v242 = vunpack.c.0.s8 %v241
    %v243 = vlaneseq
    %v244 = vshrl.u32 %v243, 7
    %v245 = vsub.s32 %v242, %v244
    %v246 = vrot.slane %v238, %v245
    %v248 = vunpack.c.l.s4 1934713408
    %v249 = vunpack.c.0.s8 %v248
    %v250 = vlaneseq
    %v251 = vshrl.u32 %v250, 7
    %v252 = vsub.s32 %v249, %v251
    %v253 = vrot.slane %v239, %v252
    %v254 = vcombine.high %v230, 0
    %v255 = vcombine.high %v237, 0
    %v256 = vcombine.high %v246, 0
    %v257 = vcombine.high %v253, 0
    %v258 = vcombine.high %v176, %v190
    %v260 = vunpack.c.l.s4 1983009808
    %v261 = vunpack.c.0.s8 %v260
    %v262 = vlaneseq
    %v263 = vshrl.u32 %v262, 7
    %v264 = vsub.s32 %v261, %v263
    %v265 = vrot.slane %v176, %v264
    %v267 = vunpack.c.l.s4 1983009808
    %v268 = vunpack.c.0.s8 %v267
    %v269 = vlaneseq
    %v270 = vshrl.u32 %v269, 7
    %v271 = vsub.s32 %v268, %v270
    %v272 = vrot.slane %v258, %v271
    %v273 = vcombine.high %v184, %v190
    %v275 = vunpack.c.l.s4 1983009808
    %v276 = vunpack.c.0.s8 %v275
    %v277 = vlaneseq
    %v278 = vshrl.u32 %v277, 7
    %v279 = vsub.s32 %v276, %v278
    %v280 = vrot.slane %v184, %v279
    %v282 = vunpack.c.l.s4 1983009808
    %v283 = vunpack.c.0.s8 %v282
    %v284 = vlaneseq
    %v285 = vshrl.u32 %v284, 7
    %v286 = vsub.s32 %v283, %v285
    %v287 = vrot.slane %v273, %v286
    %v288 = vcombine.low %v265, %v280
    %v289 = vcombine.high %v265, %v280
    %v291 = vunpack.c.l.s4 1934713408
    %v292 = vunpack.c.0.s8 %v291
    %v293 = vlaneseq
    %v294 = vshrl.u32 %v293, 7
    %v295 = vsub.s32 %v292, %v294
    %v296 = vrot.slane %v288, %v295
    %v298 = vunpack.c.l.s4 1934713408
    %v299 = vunpack.c.0.s8 %v298
    %v300 = vlaneseq
    %v301 = vshrl.u32 %v300, 7
    %v302 = vsub.s32 %v299, %v301
    %v303 = vrot.slane %v289, %v302
    %v304 = vcombine.low %v272, %v287
    %v305 = vcombine.high %v272, %v287
    %v307 = vunpack.c.l.s4 1934713408
    %v308 = vunpack.c.0.s8 %v307
    %v309 = vlaneseq
    %v310 = vshrl.u32 %v309, 7
    %v311 = vsub.s32 %v308, %v310
    %v312 = vrot.slane %v304, %v311
    %v314 = vunpack.c.l.s4 1934713408
    %v315 = vunpack.c.0.s8 %v314
    %v316 = vlaneseq
    %v317 = vshrl.u32 %v316, 7
    %v318 = vsub.s32 %v315, %v317
    %v319 = vrot.slane %v305, %v318
    %v320 = vcombine.high %v296, 0
    %v321 = vcombine.high %v303, 0
    %v322 = vcombine.high %v312, 0
    %v323 = vcombine.high %v319, 0
    %v324 = vcombine.low %v230, %v237
    %v326 = vunpack.c.l.s4 1983009808
    %v327 = vunpack.c.0.s8 %v326
    %v328 = vlaneseq
    %v329 = vshrl.u32 %v328, 7
    %v330 = vsub.s32 %v327, %v329
    %v331 = vrot.slane %v324, %v330
    %v332 = vcombine.low %v254, %v255
    %v334 = vunpack.c.l.s4 1983009808
    %v335 = vunpack.c.0.s8 %v334
    %v336 = vlaneseq
    %v337 = vshrl.u32 %v336, 7
    %v338 = vsub.s32 %v335, %v337
    %v339 = vrot.slane %v332, %v338
    %v340 = vcombine.low %v331, %v339
    %v342 = vunpack.c.l.s4 1934713408
    %v343 = vunpack.c.0.s8 %v342
    %v344 = vlaneseq
    %v345 = vshrl.u32 %v344, 7
    %v346 = vsub.s32 %v343, %v345
    %v347 = vrot.slane %v340, %v346
    %v348 = vcombine.high %v347, 0
    %v349 = vcombine.low %v296, %v303
    %v351 = vunpack.c.l.s4 1983009808
    %v352 = vunpack.c.0.s8 %v351
    %v353 = vlaneseq
    %v354 = vshrl.u32 %v353, 7
    %v355 = vsub.s32 %v352, %v354
    %v356 = vrot.slane %v349, %v355
    %v357 = vcombine.low %v320, %v321
    %v359 = vunpack.c.l.s4 1983009808
    %v360 = vunpack.c.0.s8 %v359
    %v361 = vlaneseq
    %v362 = vshrl.u32 %v361, 7
    %v363 = vsub.s32 %v360, %v362
    %v364 = vrot.slane %v357, %v363
    %v365 = vcombine.low %v356, %v364
    %v367 = vunpack.c.l.s4 1934713408
    %v368 = vunpack.c.0.s8 %v367
    %v369 = vlaneseq
    %v370 = vshrl.u32 %v369, 7
    %v371 = vsub.s32 %v368, %v370
    %v372 = vrot.slane %v365, %v371
    %v373 = vcombine.high %v372, 0
    %v374 = vcombine.low %v246, %v253
    %v376 = vunpack.c.l.s4 1983009808
    %v377 = vunpack.c.0.s8 %v376
    %v378 = vlaneseq
    %v379 = vshrl.u32 %v378, 7
    %v380 = vsub.s32 %v377, %v379
    %v381 = vrot.slane %v374, %v380
    %v382 = vcombine.low %v256, %v257
    %v384 = vunpack.c.l.s4 1983009808
    %v385 = vunpack.c.0.s8 %v384
    %v386 = vlaneseq
    %v387 = vshrl.u32 %v386, 7
    %v388 = vsub.s32 %v385, %v387
    %v389 = vrot.slane %v382, %v388
    %v390 = vcombine.low %v381, %v389
    %v392 = vunpack.c.l.s4 1934713408
    %v393 = vunpack.c.0.s8 %v392
    %v394 = vlaneseq
    %v395 = vshrl.u32 %v394, 7
    %v396 = vsub.s32 %v393, %v395
    %v397 = vrot.slane %v390, %v396
    %v398 = vcombine.high %v397, 0
    %v399 = vcombine.low %v312, %v319
    %v401 = vunpack.c.l.s4 1983009808
    %v402 = vunpack.c.0.s8 %v401
    %v403 = vlaneseq
    %v404 = vshrl.u32 %v403, 7
    %v405 = vsub.s32 %v402, %v404
    %v406 = vrot.slane %v399, %v405
    %v407 = vcombine.low %v322, %v323
    %v409 = vunpack.c.l.s4 1983009808
    %v410 = vunpack.c.0.s8 %v409
    %v411 = vlaneseq
    %v412 = vshrl.u32 %v411, 7
    %v413 = vsub.s32 %v410, %v412
    %v414 = vrot.slane %v407, %v413
    %v415 = vcombine.low %v406, %v414
    %v417 = vunpack.c.l.s4 1934713408
    %v418 = vunpack.c.0.s8 %v417
    %v419 = vlaneseq
    %v420 = vshrl.u32 %v419, 7
    %v421 = vsub.s32 %v418, %v420
    %v422 = vrot.slane %v415, %v421
    %v423 = vcombine.high %v422, 0
    %v426 = vpack.i.b16 %v372, %v347
    %v427 = vshrl.u32 %v347, 16
    %v428 = vshrl.u32 %v372, 16
    %v429 = vpack.i.b16 %v428, %v427
    %v432 = vpack.i.b16 %v373, %v348
    %v433 = vshrl.u32 %v348, 16
    %v434 = vshrl.u32 %v373, 16
    %v435 = vpack.i.b16 %v434, %v433
    %v438 = vpack.i.b16 %v422, %v397
    %v439 = vshrl.u32 %v397, 16
    %v440 = vshrl.u32 %v422, 16
    %v441 = vpack.i.b16 %v440, %v439
    %v444 = vpack.i.b16 %v423, %v398
    %v445 = vshrl.u32 %v398, 16
    %v446 = vshrl.u32 %v423, 16
    %v447 = vpack.i.b16 %v446, %v445
    %448 = vrot.lane.b32.xlu0 %v162, 96
    %v449 = vpop.permute.xlu0 %448
    %450 = vrot.lane.b32.xlu0 %v165, 96
    %v451 = vpop.permute.xlu0 %450
    %452 = vrot.lane.b32.xlu0 %v167, 96
    %v453 = vpop.permute.xlu0 %452
    %454 = vrot.lane.b32.xlu0 %v169, 96
    %v455 = vpop.permute.xlu0 %454
    %v458 = vpack.i.b16 %v451, %v449
    %v460 = vshrl.u32 %v449, 16
    %v461 = vshrl.u32 %v451, 16
    %v462 = vpack.i.b16 %v461, %v460
    %v466 = vpack.i.b16 %v455, %v453
    %v468 = vshrl.u32 %v453, 16
    %v469 = vshrl.u32 %v455, 16
    %v470 = vpack.i.b16 %v469, %v468
    %v472 = vcombine.high %v458, %v187
    %v474 = vunpack.c.l.s4 1983009808
    %v475 = vunpack.c.0.s8 %v474
    %v476 = vlaneseq
    %v477 = vshrl.u32 %v476, 7
    %v478 = vsub.s32 %v475, %v477
    %v479 = vrot.slane %v458, %v478
    %v481 = vunpack.c.l.s4 1983009808
    %v482 = vunpack.c.0.s8 %v481
    %v483 = vlaneseq
    %v484 = vshrl.u32 %v483, 7
    %v485 = vsub.s32 %v482, %v484
    %v486 = vrot.slane %v472, %v485
    %v487 = vcombine.high %v466, %v187
    %v489 = vunpack.c.l.s4 1983009808
    %v490 = vunpack.c.0.s8 %v489
    %v491 = vlaneseq
    %v492 = vshrl.u32 %v491, 7
    %v493 = vsub.s32 %v490, %v492
    %v494 = vrot.slane %v466, %v493
    %v496 = vunpack.c.l.s4 1983009808
    %v497 = vunpack.c.0.s8 %v496
    %v498 = vlaneseq
    %v499 = vshrl.u32 %v498, 7
    %v500 = vsub.s32 %v497, %v499
    %v501 = vrot.slane %v487, %v500
    %v502 = vcombine.low %v479, %v494
    %v503 = vcombine.high %v479, %v494
    %v505 = vunpack.c.l.s4 1934713408
    %v506 = vunpack.c.0.s8 %v505
    %v507 = vlaneseq
    %v508 = vshrl.u32 %v507, 7
    %v509 = vsub.s32 %v506, %v508
    %v510 = vrot.slane %v502, %v509
    %v512 = vunpack.c.l.s4 1934713408
    %v513 = vunpack.c.0.s8 %v512
    %v514 = vlaneseq
    %v515 = vshrl.u32 %v514, 7
    %v516 = vsub.s32 %v513, %v515
    %v517 = vrot.slane %v503, %v516
    %v518 = vcombine.low %v486, %v501
    %v519 = vcombine.high %v486, %v501
    %v521 = vunpack.c.l.s4 1934713408
    %v522 = vunpack.c.0.s8 %v521
    %v523 = vlaneseq
    %v524 = vshrl.u32 %v523, 7
    %v525 = vsub.s32 %v522, %v524
    %v526 = vrot.slane %v518, %v525
    %v528 = vunpack.c.l.s4 1934713408
    %v529 = vunpack.c.0.s8 %v528
    %v530 = vlaneseq
    %v531 = vshrl.u32 %v530, 7
    %v532 = vsub.s32 %v529, %v531
    %v533 = vrot.slane %v519, %v532
    %v534 = vcombine.high %v510, 0
    %v535 = vcombine.high %v517, 0
    %v536 = vcombine.high %v526, 0
    %v537 = vcombine.high %v533, 0
    %v538 = vcombine.high %v462, %v190
    %v540 = vunpack.c.l.s4 1983009808
    %v541 = vunpack.c.0.s8 %v540
    %v542 = vlaneseq
    %v543 = vshrl.u32 %v542, 7
    %v544 = vsub.s32 %v541, %v543
    %v545 = vrot.slane %v462, %v544
    %v547 = vunpack.c.l.s4 1983009808
    %v548 = vunpack.c.0.s8 %v547
    %v549 = vlaneseq
    %v550 = vshrl.u32 %v549, 7
    %v551 = vsub.s32 %v548, %v550
    %v552 = vrot.slane %v538, %v551
    %v553 = vcombine.high %v470, %v190
    %v555 = vunpack.c.l.s4 1983009808
    %v556 = vunpack.c.0.s8 %v555
    %v557 = vlaneseq
    %v558 = vshrl.u32 %v557, 7
    %v559 = vsub.s32 %v556, %v558
    %v560 = vrot.slane %v470, %v559
    %v562 = vunpack.c.l.s4 1983009808
    %v563 = vunpack.c.0.s8 %v562
    %v564 = vlaneseq
    %v565 = vshrl.u32 %v564, 7
    %v566 = vsub.s32 %v563, %v565
    %v567 = vrot.slane %v553, %v566
    %v568 = vcombine.low %v545, %v560
    %v569 = vcombine.high %v545, %v560
    %v571 = vunpack.c.l.s4 1934713408
    %v572 = vunpack.c.0.s8 %v571
    %v573 = vlaneseq
    %v574 = vshrl.u32 %v573, 7
    %v575 = vsub.s32 %v572, %v574
    %v576 = vrot.slane %v568, %v575
    %v578 = vunpack.c.l.s4 1934713408
    %v579 = vunpack.c.0.s8 %v578
    %v580 = vlaneseq
    %v581 = vshrl.u32 %v580, 7
    %v582 = vsub.s32 %v579, %v581
    %v583 = vrot.slane %v569, %v582
    %v584 = vcombine.low %v552, %v567
    %v585 = vcombine.high %v552, %v567
    %v587 = vunpack.c.l.s4 1934713408
    %v588 = vunpack.c.0.s8 %v587
    %v589 = vlaneseq
    %v590 = vshrl.u32 %v589, 7
    %v591 = vsub.s32 %v588, %v590
    %v592 = vrot.slane %v584, %v591
    %v594 = vunpack.c.l.s4 1934713408
    %v595 = vunpack.c.0.s8 %v594
    %v596 = vlaneseq
    %v597 = vshrl.u32 %v596, 7
    %v598 = vsub.s32 %v595, %v597
    %v599 = vrot.slane %v585, %v598
    %v600 = vcombine.high %v576, 0
    %v601 = vcombine.high %v583, 0
    %v602 = vcombine.high %v592, 0
    %v603 = vcombine.high %v599, 0
    %v604 = vcombine.low %v510, %v517
    %v606 = vunpack.c.l.s4 1983009808
    %v607 = vunpack.c.0.s8 %v606
    %v608 = vlaneseq
    %v609 = vshrl.u32 %v608, 7
    %v610 = vsub.s32 %v607, %v609
    %v611 = vrot.slane %v604, %v610
    %v612 = vcombine.low %v534, %v535
    %v614 = vunpack.c.l.s4 1983009808
    %v615 = vunpack.c.0.s8 %v614
    %v616 = vlaneseq
    %v617 = vshrl.u32 %v616, 7
    %v618 = vsub.s32 %v615, %v617
    %v619 = vrot.slane %v612, %v618
    %v620 = vcombine.low %v611, %v619
    %v622 = vunpack.c.l.s4 1934713408
    %v623 = vunpack.c.0.s8 %v622
    %v624 = vlaneseq
    %v625 = vshrl.u32 %v624, 7
    %v626 = vsub.s32 %v623, %v625
    %v627 = vrot.slane %v620, %v626
    %v628 = vcombine.high %v627, 0
    %v629 = vcombine.low %v576, %v583
    %v631 = vunpack.c.l.s4 1983009808
    %v632 = vunpack.c.0.s8 %v631
    %v633 = vlaneseq
    %v634 = vshrl.u32 %v633, 7
    %v635 = vsub.s32 %v632, %v634
    %v636 = vrot.slane %v629, %v635
    %v637 = vcombine.low %v600, %v601
    %v639 = vunpack.c.l.s4 1983009808
    %v640 = vunpack.c.0.s8 %v639
    %v641 = vlaneseq
    %v642 = vshrl.u32 %v641, 7
    %v643 = vsub.s32 %v640, %v642
    %v644 = vrot.slane %v637, %v643
    %v645 = vcombine.low %v636, %v644
    %v647 = vunpack.c.l.s4 1934713408
    %v648 = vunpack.c.0.s8 %v647
    %v649 = vlaneseq
    %v650 = vshrl.u32 %v649, 7
    %v651 = vsub.s32 %v648, %v650
    %v652 = vrot.slane %v645, %v651
    %v653 = vcombine.high %v652, 0
    %v654 = vcombine.low %v526, %v533
    %v656 = vunpack.c.l.s4 1983009808
    %v657 = vunpack.c.0.s8 %v656
    %v658 = vlaneseq
    %v659 = vshrl.u32 %v658, 7
    %v660 = vsub.s32 %v657, %v659
    %v661 = vrot.slane %v654, %v660
    %v662 = vcombine.low %v536, %v537
    %v664 = vunpack.c.l.s4 1983009808
    %v665 = vunpack.c.0.s8 %v664
    %v666 = vlaneseq
    %v667 = vshrl.u32 %v666, 7
    %v668 = vsub.s32 %v665, %v667
    %v669 = vrot.slane %v662, %v668
    %v670 = vcombine.low %v661, %v669
    %v672 = vunpack.c.l.s4 1934713408
    %v673 = vunpack.c.0.s8 %v672
    %v674 = vlaneseq
    %v675 = vshrl.u32 %v674, 7
    %v676 = vsub.s32 %v673, %v675
    %v677 = vrot.slane %v670, %v676
    %v678 = vcombine.high %v677, 0
    %v679 = vcombine.low %v592, %v599
    %v681 = vunpack.c.l.s4 1983009808
    %v682 = vunpack.c.0.s8 %v681
    %v683 = vlaneseq
    %v684 = vshrl.u32 %v683, 7
    %v685 = vsub.s32 %v682, %v684
    %v686 = vrot.slane %v679, %v685
    %v687 = vcombine.low %v602, %v603
    %v689 = vunpack.c.l.s4 1983009808
    %v690 = vunpack.c.0.s8 %v689
    %v691 = vlaneseq
    %v692 = vshrl.u32 %v691, 7
    %v693 = vsub.s32 %v690, %v692
    %v694 = vrot.slane %v687, %v693
    %v695 = vcombine.low %v686, %v694
    %v697 = vunpack.c.l.s4 1934713408
    %v698 = vunpack.c.0.s8 %v697
    %v699 = vlaneseq
    %v700 = vshrl.u32 %v699, 7
    %v701 = vsub.s32 %v698, %v700
    %v702 = vrot.slane %v695, %v701
    %v703 = vcombine.high %v702, 0
    %v706 = vpack.i.b16 %v652, %v627
    %v707 = vshrl.u32 %v627, 16
    %v708 = vshrl.u32 %v652, 16
    %v709 = vpack.i.b16 %v708, %v707
    %v712 = vpack.i.b16 %v653, %v628
    %v713 = vshrl.u32 %v628, 16
    %v714 = vshrl.u32 %v653, 16
    %v715 = vpack.i.b16 %v714, %v713
    %v718 = vpack.i.b16 %v702, %v677
    %v719 = vshrl.u32 %v677, 16
    %v720 = vshrl.u32 %v702, 16
    %v721 = vpack.i.b16 %v720, %v719
    %v724 = vpack.i.b16 %v703, %v678
    %v725 = vshrl.u32 %v678, 16
    %v726 = vshrl.u32 %v703, 16
    %v727 = vpack.i.b16 %v726, %v725
    %728 = vrot.lane.b32.xlu0 %v162, 64
    %v729 = vpop.permute.xlu0 %728
    %730 = vrot.lane.b32.xlu0 %v165, 64
    %v731 = vpop.permute.xlu0 %730
    %732 = vrot.lane.b32.xlu0 %v167, 64
    %v733 = vpop.permute.xlu0 %732
    %734 = vrot.lane.b32.xlu0 %v169, 64
    %v735 = vpop.permute.xlu0 %734
    %v738 = vpack.i.b16 %v731, %v729
    %v740 = vshrl.u32 %v729, 16
    %v741 = vshrl.u32 %v731, 16
    %v742 = vpack.i.b16 %v741, %v740
    %v746 = vpack.i.b16 %v735, %v733
    %v748 = vshrl.u32 %v733, 16
    %v749 = vshrl.u32 %v735, 16
    %v750 = vpack.i.b16 %v749, %v748
    %v752 = vcombine.high %v738, %v187
    %v754 = vunpack.c.l.s4 1983009808
    %v755 = vunpack.c.0.s8 %v754
    %v756 = vlaneseq
    %v757 = vshrl.u32 %v756, 7
    %v758 = vsub.s32 %v755, %v757
    %v759 = vrot.slane %v738, %v758
    %v761 = vunpack.c.l.s4 1983009808
    %v762 = vunpack.c.0.s8 %v761
    %v763 = vlaneseq
    %v764 = vshrl.u32 %v763, 7
    %v765 = vsub.s32 %v762, %v764
    %v766 = vrot.slane %v752, %v765
    %v767 = vcombine.high %v746, %v187
    %v769 = vunpack.c.l.s4 1983009808
    %v770 = vunpack.c.0.s8 %v769
    %v771 = vlaneseq
    %v772 = vshrl.u32 %v771, 7
    %v773 = vsub.s32 %v770, %v772
    %v774 = vrot.slane %v746, %v773
    %v776 = vunpack.c.l.s4 1983009808
    %v777 = vunpack.c.0.s8 %v776
    %v778 = vlaneseq
    %v779 = vshrl.u32 %v778, 7
    %v780 = vsub.s32 %v777, %v779
    %v781 = vrot.slane %v767, %v780
    %v782 = vcombine.low %v759, %v774
    %v783 = vcombine.high %v759, %v774
    %v785 = vunpack.c.l.s4 1934713408
    %v786 = vunpack.c.0.s8 %v785
    %v787 = vlaneseq
    %v788 = vshrl.u32 %v787, 7
    %v789 = vsub.s32 %v786, %v788
    %v790 = vrot.slane %v782, %v789
    %v792 = vunpack.c.l.s4 1934713408
    %v793 = vunpack.c.0.s8 %v792
    %v794 = vlaneseq
    %v795 = vshrl.u32 %v794, 7
    %v796 = vsub.s32 %v793, %v795
    %v797 = vrot.slane %v783, %v796
    %v798 = vcombine.low %v766, %v781
    %v799 = vcombine.high %v766, %v781
    %v801 = vunpack.c.l.s4 1934713408
    %v802 = vunpack.c.0.s8 %v801
    %v803 = vlaneseq
    %v804 = vshrl.u32 %v803, 7
    %v805 = vsub.s32 %v802, %v804
    %v806 = vrot.slane %v798, %v805
    %v808 = vunpack.c.l.s4 1934713408
    %v809 = vunpack.c.0.s8 %v808
    %v810 = vlaneseq
    %v811 = vshrl.u32 %v810, 7
    %v812 = vsub.s32 %v809, %v811
    %v813 = vrot.slane %v799, %v812
    %v814 = vcombine.high %v790, 0
    %v815 = vcombine.high %v797, 0
    %v816 = vcombine.high %v806, 0
    %v817 = vcombine.high %v813, 0
    %v818 = vcombine.high %v742, %v190
    %v820 = vunpack.c.l.s4 1983009808
    %v821 = vunpack.c.0.s8 %v820
    %v822 = vlaneseq
    %v823 = vshrl.u32 %v822, 7
    %v824 = vsub.s32 %v821, %v823
    %v825 = vrot.slane %v742, %v824
    %v827 = vunpack.c.l.s4 1983009808
    %v828 = vunpack.c.0.s8 %v827
    %v829 = vlaneseq
    %v830 = vshrl.u32 %v829, 7
    %v831 = vsub.s32 %v828, %v830
    %v832 = vrot.slane %v818, %v831
    %v833 = vcombine.high %v750, %v190
    %v835 = vunpack.c.l.s4 1983009808
    %v836 = vunpack.c.0.s8 %v835
    %v837 = vlaneseq
    %v838 = vshrl.u32 %v837, 7
    %v839 = vsub.s32 %v836, %v838
    %v840 = vrot.slane %v750, %v839
    %v842 = vunpack.c.l.s4 1983009808
    %v843 = vunpack.c.0.s8 %v842
    %v844 = vlaneseq
    %v845 = vshrl.u32 %v844, 7
    %v846 = vsub.s32 %v843, %v845
    %v847 = vrot.slane %v833, %v846
    %v848 = vcombine.low %v825, %v840
    %v849 = vcombine.high %v825, %v840
    %v851 = vunpack.c.l.s4 1934713408
    %v852 = vunpack.c.0.s8 %v851
    %v853 = vlaneseq
    %v854 = vshrl.u32 %v853, 7
    %v855 = vsub.s32 %v852, %v854
    %v856 = vrot.slane %v848, %v855
    %v858 = vunpack.c.l.s4 1934713408
    %v859 = vunpack.c.0.s8 %v858
    %v860 = vlaneseq
    %v861 = vshrl.u32 %v860, 7
    %v862 = vsub.s32 %v859, %v861
    %v863 = vrot.slane %v849, %v862
    %v864 = vcombine.low %v832, %v847
    %v865 = vcombine.high %v832, %v847
    %v867 = vunpack.c.l.s4 1934713408
    %v868 = vunpack.c.0.s8 %v867
    %v869 = vlaneseq
    %v870 = vshrl.u32 %v869, 7
    %v871 = vsub.s32 %v868, %v870
    %v872 = vrot.slane %v864, %v871
    %v874 = vunpack.c.l.s4 1934713408
    %v875 = vunpack.c.0.s8 %v874
    %v876 = vlaneseq
    %v877 = vshrl.u32 %v876, 7
    %v878 = vsub.s32 %v875, %v877
    %v879 = vrot.slane %v865, %v878
    %v880 = vcombine.high %v856, 0
    %v881 = vcombine.high %v863, 0
    %v882 = vcombine.high %v872, 0
    %v883 = vcombine.high %v879, 0
    %v884 = vcombine.low %v790, %v797
    %v886 = vunpack.c.l.s4 1983009808
    %v887 = vunpack.c.0.s8 %v886
    %v888 = vlaneseq
    %v889 = vshrl.u32 %v888, 7
    %v890 = vsub.s32 %v887, %v889
    %v891 = vrot.slane %v884, %v890
    %v892 = vcombine.low %v814, %v815
    %v894 = vunpack.c.l.s4 1983009808
    %v895 = vunpack.c.0.s8 %v894
    %v896 = vlaneseq
    %v897 = vshrl.u32 %v896, 7
    %v898 = vsub.s32 %v895, %v897
    %v899 = vrot.slane %v892, %v898
    %v900 = vcombine.low %v891, %v899
    %v902 = vunpack.c.l.s4 1934713408
    %v903 = vunpack.c.0.s8 %v902
    %v904 = vlaneseq
    %v905 = vshrl.u32 %v904, 7
    %v906 = vsub.s32 %v903, %v905
    %v907 = vrot.slane %v900, %v906
    %v908 = vcombine.high %v907, 0
    %v909 = vcombine.low %v856, %v863
    %v911 = vunpack.c.l.s4 1983009808
    %v912 = vunpack.c.0.s8 %v911
    %v913 = vlaneseq
    %v914 = vshrl.u32 %v913, 7
    %v915 = vsub.s32 %v912, %v914
    %v916 = vrot.slane %v909, %v915
    %v917 = vcombine.low %v880, %v881
    %v919 = vunpack.c.l.s4 1983009808
    %v920 = vunpack.c.0.s8 %v919
    %v921 = vlaneseq
    %v922 = vshrl.u32 %v921, 7
    %v923 = vsub.s32 %v920, %v922
    %v924 = vrot.slane %v917, %v923
    %v925 = vcombine.low %v916, %v924
    %v927 = vunpack.c.l.s4 1934713408
    %v928 = vunpack.c.0.s8 %v927
    %v929 = vlaneseq
    %v930 = vshrl.u32 %v929, 7
    %v931 = vsub.s32 %v928, %v930
    %v932 = vrot.slane %v925, %v931
    %v933 = vcombine.high %v932, 0
    %v934 = vcombine.low %v806, %v813
    %v936 = vunpack.c.l.s4 1983009808
    %v937 = vunpack.c.0.s8 %v936
    %v938 = vlaneseq
    %v939 = vshrl.u32 %v938, 7
    %v940 = vsub.s32 %v937, %v939
    %v941 = vrot.slane %v934, %v940
    %v942 = vcombine.low %v816, %v817
    %v944 = vunpack.c.l.s4 1983009808
    %v945 = vunpack.c.0.s8 %v944
    %v946 = vlaneseq
    %v947 = vshrl.u32 %v946, 7
    %v948 = vsub.s32 %v945, %v947
    %v949 = vrot.slane %v942, %v948
    %v950 = vcombine.low %v941, %v949
    %v952 = vunpack.c.l.s4 1934713408
    %v953 = vunpack.c.0.s8 %v952
    %v954 = vlaneseq
    %v955 = vshrl.u32 %v954, 7
    %v956 = vsub.s32 %v953, %v955
    %v957 = vrot.slane %v950, %v956
    %v958 = vcombine.high %v957, 0
    %v959 = vcombine.low %v872, %v879
    %v961 = vunpack.c.l.s4 1983009808
    %v962 = vunpack.c.0.s8 %v961
    %v963 = vlaneseq
    %v964 = vshrl.u32 %v963, 7
    %v965 = vsub.s32 %v962, %v964
    %v966 = vrot.slane %v959, %v965
    %v967 = vcombine.low %v882, %v883
    %v969 = vunpack.c.l.s4 1983009808
    %v970 = vunpack.c.0.s8 %v969
    %v971 = vlaneseq
    %v972 = vshrl.u32 %v971, 7
    %v973 = vsub.s32 %v970, %v972
    %v974 = vrot.slane %v967, %v973
    %v975 = vcombine.low %v966, %v974
    %v977 = vunpack.c.l.s4 1934713408
    %v978 = vunpack.c.0.s8 %v977
    %v979 = vlaneseq
    %v980 = vshrl.u32 %v979, 7
    %v981 = vsub.s32 %v978, %v980
    %v982 = vrot.slane %v975, %v981
    %v983 = vcombine.high %v982, 0
    %v986 = vpack.i.b16 %v932, %v907
    %v987 = vshrl.u32 %v907, 16
    %v988 = vshrl.u32 %v932, 16
    %v989 = vpack.i.b16 %v988, %v987
    %v992 = vpack.i.b16 %v933, %v908
    %v993 = vshrl.u32 %v908, 16
    %v994 = vshrl.u32 %v933, 16
    %v995 = vpack.i.b16 %v994, %v993
    %v998 = vpack.i.b16 %v982, %v957
    %v999 = vshrl.u32 %v957, 16
    %v1000 = vshrl.u32 %v982, 16
    %v1001 = vpack.i.b16 %v1000, %v999
    %v1004 = vpack.i.b16 %v983, %v958
    %v1005 = vshrl.u32 %v958, 16
    %v1006 = vshrl.u32 %v983, 16
    %v1007 = vpack.i.b16 %v1006, %v1005
    %vm1008 = vcmask 64512
    %v1010 = vsel %vm1008, %v426, 0
    %v1013 = vsel %vm1008, %v706, 0
    %1015 = vmatprep.subr.bf16.mxu0 0
    %1016 = vmatpush1.bf16.xpose.msra.mxu0 0
    %1017 = vmatprep.subr.bf16.mxu0 0
    %1018 = vmatpush1.bf16.xpose.msra.mxu0 0
    %1019 = vmatprep.subr.bf16.mxu0 0
    %1020 = vmatpush1.bf16.xpose.msra.mxu0 0
    %1021 = vmatprep.subr.bf16.mxu0 0
    %1022 = vmatpush1.bf16.xpose.msra.mxu0 0
    %1023 = vmatprep.subr.bf16.mxu0 0
    %1024 = vmatpush1.bf16.xpose.msra.mxu0 0
    %1025 = vmatprep.subr.bf16.mxu0 0
    %1026 = vmatpush1.bf16.xpose.msra.mxu0 0
    %1027 = vmatprep.subr.bf16.mxu0 0
    %1028 = vmatpush1.bf16.xpose.msra.mxu0 0
    %1029 = vmatprep.subr.bf16.mxu0 0
    %1030 = vmatpush1.bf16.xpose.msra.mxu0 %v1013
    %1031 = vmatprep.subr.bf16.mxu0 0
    %1032 = vmatpush2.bf16.xpose.msra.mxu0 0
    %1033 = vmatprep.subr.bf16.mxu0 0
    %1034 = vmatpush2.bf16.xpose.msra.mxu0 0
    %1035 = vmatprep.subr.bf16.mxu0 0
    %1036 = vmatpush2.bf16.xpose.msra.mxu0 0
    %1037 = vmatprep.subr.bf16.mxu0 0
    %1038 = vmatpush2.bf16.xpose.msra.mxu0 0
    %1039 = vmatprep.subr.bf16.mxu0 0
    %1040 = vmatpush2.bf16.xpose.msra.mxu0 0
    %1041 = vmatprep.subr.bf16.mxu0 0
    %1042 = vmatpush2.bf16.xpose.msra.mxu0 0
    %1043 = vmatprep.subr.bf16.mxu0 0
    %1044 = vmatpush2.bf16.xpose.msra.mxu0 0
    %1045 = vmatprep.subr.bf16.mxu0 0
    %1046 = vmatpush2.bf16.xpose.msra.mxu0 0
    %1047 = vmatprep.mubr.bf16.mxu0 0
    %1048 = vmatmul.mubr.bf16.gmra.mxu0 %v1010
    %v1049 = vpop.f32.mrf.mxu0
    %v1050 = vadd.f32 0.0, %v1049
    %v1051 = vpop.f32.mrf.mxu0
    %v1052 = vpop.f32.mrf.mxu0
    %v1053 = vpop.f32.mrf.mxu0
    %1054 = vdwg.mxu0
    %v1056 = vsel %vm1008, %v429, 0
    %v1059 = vsel %vm1008, %v709, 0
    %1061 = vmatprep.subr.bf16.mxu0 0
    %1062 = vmatpush1.bf16.xpose.msra.mxu0 0
    %1063 = vmatprep.subr.bf16.mxu0 0
    %1064 = vmatpush1.bf16.xpose.msra.mxu0 0
    %1065 = vmatprep.subr.bf16.mxu0 0
    %1066 = vmatpush1.bf16.xpose.msra.mxu0 0
    %1067 = vmatprep.subr.bf16.mxu0 0
    %1068 = vmatpush1.bf16.xpose.msra.mxu0 0
    %1069 = vmatprep.subr.bf16.mxu0 0
    %1070 = vmatpush1.bf16.xpose.msra.mxu0 0
    %1071 = vmatprep.subr.bf16.mxu0 0
    %1072 = vmatpush1.bf16.xpose.msra.mxu0 0
    %1073 = vmatprep.subr.bf16.mxu0 0
    %1074 = vmatpush1.bf16.xpose.msra.mxu0 0
    %1075 = vmatprep.subr.bf16.mxu0 0
    %1076 = vmatpush1.bf16.xpose.msra.mxu0 %v1059
    %1077 = vmatprep.subr.bf16.mxu0 0
    %1078 = vmatpush2.bf16.xpose.msra.mxu0 0
    %1079 = vmatprep.subr.bf16.mxu0 0
    %1080 = vmatpush2.bf16.xpose.msra.mxu0 0
    %1081 = vmatprep.subr.bf16.mxu0 0
    %1082 = vmatpush2.bf16.xpose.msra.mxu0 0
    %1083 = vmatprep.subr.bf16.mxu0 0
    %1084 = vmatpush2.bf16.xpose.msra.mxu0 0
    %1085 = vmatprep.subr.bf16.mxu0 0
    %1086 = vmatpush2.bf16.xpose.msra.mxu0 0
    %1087 = vmatprep.subr.bf16.mxu0 0
    %1088 = vmatpush2.bf16.xpose.msra.mxu0 0
    %1089 = vmatprep.subr.bf16.mxu0 0
    %1090 = vmatpush2.bf16.xpose.msra.mxu0 0
    %1091 = vmatprep.subr.bf16.mxu0 0
    %1092 = vmatpush2.bf16.xpose.msra.mxu0 0
    %1093 = vmatprep.mubr.bf16.mxu0 0
    %1094 = vmatmul.mubr.bf16.gmra.mxu0 %v1056
    %v1095 = vpop.f32.mrf.mxu0
    %v1096 = vadd.f32 0.0, %v1095
    %v1097 = vpop.f32.mrf.mxu0
    %v1098 = vpop.f32.mrf.mxu0
    %v1099 = vpop.f32.mrf.mxu0
    %1100 = vdwg.mxu0
    %v1102 = vsel %vm1008, %v432, 0
    %v1105 = vsel %vm1008, %v712, 0
    %1107 = vmatprep.subr.bf16.mxu0 0
    %1108 = vmatpush1.bf16.xpose.msra.mxu0 0
    %1109 = vmatprep.subr.bf16.mxu0 0
    %1110 = vmatpush1.bf16.xpose.msra.mxu0 0
    %1111 = vmatprep.subr.bf16.mxu0 0
    %1112 = vmatpush1.bf16.xpose.msra.mxu0 0
    %1113 = vmatprep.subr.bf16.mxu0 0
    %1114 = vmatpush1.bf16.xpose.msra.mxu0 0
    %1115 = vmatprep.subr.bf16.mxu0 0
    %1116 = vmatpush1.bf16.xpose.msra.mxu0 0
    %1117 = vmatprep.subr.bf16.mxu0 0
    %1118 = vmatpush1.bf16.xpose.msra.mxu0 0
    %1119 = vmatprep.subr.bf16.mxu0 0
    %1120 = vmatpush1.bf16.xpose.msra.mxu0 0
    %1121 = vmatprep.subr.bf16.mxu0 0
    %1122 = vmatpush1.bf16.xpose.msra.mxu0 %v1105
    %1123 = vmatprep.subr.bf16.mxu0 0
    %1124 = vmatpush2.bf16.xpose.msra.mxu0 0
    %1125 = vmatprep.subr.bf16.mxu0 0
    %1126 = vmatpush2.bf16.xpose.msra.mxu0 0
    %1127 = vmatprep.subr.bf16.mxu0 0
    %1128 = vmatpush2.bf16.xpose.msra.mxu0 0
    %1129 = vmatprep.subr.bf16.mxu0 0
    %1130 = vmatpush2.bf16.xpose.msra.mxu0 0
    %1131 = vmatprep.subr.bf16.mxu0 0
    %1132 = vmatpush2.bf16.xpose.msra.mxu0 0
    %1133 = vmatprep.subr.bf16.mxu0 0
    %1134 = vmatpush2.bf16.xpose.msra.mxu0 0
    %1135 = vmatprep.subr.bf16.mxu0 0
    %1136 = vmatpush2.bf16.xpose.msra.mxu0 0
    %1137 = vmatprep.subr.bf16.mxu0 0
    %1138 = vmatpush2.bf16.xpose.msra.mxu0 0
    %1139 = vmatprep.mubr.bf16.mxu0 0
    %1140 = vmatmul.mubr.bf16.gmra.mxu0 %v1102
    %v1141 = vpop.f32.mrf.mxu0
    %v1142 = vadd.f32 0.0, %v1141
    %v1143 = vpop.f32.mrf.mxu0
    %v1144 = vpop.f32.mrf.mxu0
    %v1145 = vpop.f32.mrf.mxu0
    %1146 = vdwg.mxu0
    %v1148 = vsel %vm1008, %v435, 0
    %v1151 = vsel %vm1008, %v715, 0
    %1153 = vmatprep.subr.bf16.mxu0 0
    %1154 = vmatpush1.bf16.xpose.msra.mxu0 0
    %1155 = vmatprep.subr.bf16.mxu0 0
    %1156 = vmatpush1.bf16.xpose.msra.mxu0 0
    %1157 = vmatprep.subr.bf16.mxu0 0
    %1158 = vmatpush1.bf16.xpose.msra.mxu0 0
    %1159 = vmatprep.subr.bf16.mxu0 0
    %1160 = vmatpush1.bf16.xpose.msra.mxu0 0
    %1161 = vmatprep.subr.bf16.mxu0 0
    %1162 = vmatpush1.bf16.xpose.msra.mxu0 0
    %1163 = vmatprep.subr.bf16.mxu0 0
    %1164 = vmatpush1.bf16.xpose.msra.mxu0 0
    %1165 = vmatprep.subr.bf16.mxu0 0
    %1166 = vmatpush1.bf16.xpose.msra.mxu0 0
    %1167 = vmatprep.subr.bf16.mxu0 0
    %1168 = vmatpush1.bf16.xpose.msra.mxu0 %v1151
    %1169 = vmatprep.subr.bf16.mxu0 0
    %1170 = vmatpush2.bf16.xpose.msra.mxu0 0
    %1171 = vmatprep.subr.bf16.mxu0 0
    %1172 = vmatpush2.bf16.xpose.msra.mxu0 0
    %1173 = vmatprep.subr.bf16.mxu0 0
    %1174 = vmatpush2.bf16.xpose.msra.mxu0 0
    %1175 = vmatprep.subr.bf16.mxu0 0
    %1176 = vmatpush2.bf16.xpose.msra.mxu0 0
    %1177 = vmatprep.subr.bf16.mxu0 0
    %1178 = vmatpush2.bf16.xpose.msra.mxu0 0
    %1179 = vmatprep.subr.bf16.mxu0 0
    %1180 = vmatpush2.bf16.xpose.msra.mxu0 0
    %1181 = vmatprep.subr.bf16.mxu0 0
    %1182 = vmatpush2.bf16.xpose.msra.mxu0 0
    %1183 = vmatprep.subr.bf16.mxu0 0
    %1184 = vmatpush2.bf16.xpose.msra.mxu0 0
    %1185 = vmatprep.mubr.bf16.mxu0 0
    %1186 = vmatmul.mubr.bf16.gmra.mxu0 %v1148
    %v1187 = vpop.f32.mrf.mxu0
    %v1188 = vadd.f32 0.0, %v1187
    %v1189 = vpop.f32.mrf.mxu0
    %v1190 = vpop.f32.mrf.mxu0
    %v1191 = vpop.f32.mrf.mxu0
    %1192 = vdwg.mxu0
    %v1194 = vsel %vm1008, %v438, 0
    %v1197 = vsel %vm1008, %v718, 0
    %1199 = vmatprep.subr.bf16.mxu0 0
    %1200 = vmatpush1.bf16.xpose.msra.mxu0 0
    %1201 = vmatprep.subr.bf16.mxu0 0
    %1202 = vmatpush1.bf16.xpose.msra.mxu0 0
    %1203 = vmatprep.subr.bf16.mxu0 0
    %1204 = vmatpush1.bf16.xpose.msra.mxu0 0
    %1205 = vmatprep.subr.bf16.mxu0 0
    %1206 = vmatpush1.bf16.xpose.msra.mxu0 0
    %1207 = vmatprep.subr.bf16.mxu0 0
    %1208 = vmatpush1.bf16.xpose.msra.mxu0 0
    %1209 = vmatprep.subr.bf16.mxu0 0
    %1210 = vmatpush1.bf16.xpose.msra.mxu0 0
    %1211 = vmatprep.subr.bf16.mxu0 0
    %1212 = vmatpush1.bf16.xpose.msra.mxu0 0
    %1213 = vmatprep.subr.bf16.mxu0 0
    %1214 = vmatpush1.bf16.xpose.msra.mxu0 %v1197
    %1215 = vmatprep.subr.bf16.mxu0 0
    %1216 = vmatpush2.bf16.xpose.msra.mxu0 0
    %1217 = vmatprep.subr.bf16.mxu0 0
    %1218 = vmatpush2.bf16.xpose.msra.mxu0 0
    %1219 = vmatprep.subr.bf16.mxu0 0
    %1220 = vmatpush2.bf16.xpose.msra.mxu0 0
    %1221 = vmatprep.subr.bf16.mxu0 0
    %1222 = vmatpush2.bf16.xpose.msra.mxu0 0
    %1223 = vmatprep.subr.bf16.mxu0 0
    %1224 = vmatpush2.bf16.xpose.msra.mxu0 0
    %1225 = vmatprep.subr.bf16.mxu0 0
    %1226 = vmatpush2.bf16.xpose.msra.mxu0 0
    %1227 = vmatprep.subr.bf16.mxu0 0
    %1228 = vmatpush2.bf16.xpose.msra.mxu0 0
    %1229 = vmatprep.subr.bf16.mxu0 0
    %1230 = vmatpush2.bf16.xpose.msra.mxu0 0
    %1231 = vmatprep.mubr.bf16.mxu0 0
    %1232 = vmatmul.mubr.bf16.gmra.mxu0 %v1194
    %v1233 = vpop.f32.mrf.mxu0
    %v1234 = vadd.f32 0.0, %v1233
    %v1235 = vpop.f32.mrf.mxu0
    %v1236 = vpop.f32.mrf.mxu0
    %v1237 = vpop.f32.mrf.mxu0
    %1238 = vdwg.mxu0
    %v1240 = vsel %vm1008, %v441, 0
    %v1243 = vsel %vm1008, %v721, 0
    %1245 = vmatprep.subr.bf16.mxu0 0
    %1246 = vmatpush1.bf16.xpose.msra.mxu0 0
    %1247 = vmatprep.subr.bf16.mxu0 0
    %1248 = vmatpush1.bf16.xpose.msra.mxu0 0
    %1249 = vmatprep.subr.bf16.mxu0 0
    %1250 = vmatpush1.bf16.xpose.msra.mxu0 0
    %1251 = vmatprep.subr.bf16.mxu0 0
    %1252 = vmatpush1.bf16.xpose.msra.mxu0 0
    %1253 = vmatprep.subr.bf16.mxu0 0
    %1254 = vmatpush1.bf16.xpose.msra.mxu0 0
    %1255 = vmatprep.subr.bf16.mxu0 0
    %1256 = vmatpush1.bf16.xpose.msra.mxu0 0
    %1257 = vmatprep.subr.bf16.mxu0 0
    %1258 = vmatpush1.bf16.xpose.msra.mxu0 0
    %1259 = vmatprep.subr.bf16.mxu0 0
    %1260 = vmatpush1.bf16.xpose.msra.mxu0 %v1243
    %1261 = vmatprep.subr.bf16.mxu0 0
    %1262 = vmatpush2.bf16.xpose.msra.mxu0 0
    %1263 = vmatprep.subr.bf16.mxu0 0
    %1264 = vmatpush2.bf16.xpose.msra.mxu0 0
    %1265 = vmatprep.subr.bf16.mxu0 0
    %1266 = vmatpush2.bf16.xpose.msra.mxu0 0
    %1267 = vmatprep.subr.bf16.mxu0 0
    %1268 = vmatpush2.bf16.xpose.msra.mxu0 0
    %1269 = vmatprep.subr.bf16.mxu0 0
    %1270 = vmatpush2.bf16.xpose.msra.mxu0 0
    %1271 = vmatprep.subr.bf16.mxu0 0
    %1272 = vmatpush2.bf16.xpose.msra.mxu0 0
    %1273 = vmatprep.subr.bf16.mxu0 0
    %1274 = vmatpush2.bf16.xpose.msra.mxu0 0
    %1275 = vmatprep.subr.bf16.mxu0 0
    %1276 = vmatpush2.bf16.xpose.msra.mxu0 0
    %1277 = vmatprep.mubr.bf16.mxu0 0
    %1278 = vmatmul.mubr.bf16.gmra.mxu0 %v1240
    %v1279 = vpop.f32.mrf.mxu0
    %v1280 = vadd.f32 0.0, %v1279
    %v1281 = vpop.f32.mrf.mxu0
    %v1282 = vpop.f32.mrf.mxu0
    %v1283 = vpop.f32.mrf.mxu0
    %1284 = vdwg.mxu0
    %v1286 = vsel %vm1008, %v444, 0
    %v1289 = vsel %vm1008, %v724, 0
    %1291 = vmatprep.subr.bf16.mxu0 0
    %1292 = vmatpush1.bf16.xpose.msra.mxu0 0
    %1293 = vmatprep.subr.bf16.mxu0 0
    %1294 = vmatpush1.bf16.xpose.msra.mxu0 0
    %1295 = vmatprep.subr.bf16.mxu0 0
    %1296 = vmatpush1.bf16.xpose.msra.mxu0 0
    %1297 = vmatprep.subr.bf16.mxu0 0
    %1298 = vmatpush1.bf16.xpose.msra.mxu0 0
    %1299 = vmatprep.subr.bf16.mxu0 0
    %1300 = vmatpush1.bf16.xpose.msra.mxu0 0
    %1301 = vmatprep.subr.bf16.mxu0 0
    %1302 = vmatpush1.bf16.xpose.msra.mxu0 0
    %1303 = vmatprep.subr.bf16.mxu0 0
    %1304 = vmatpush1.bf16.xpose.msra.mxu0 0
    %1305 = vmatprep.subr.bf16.mxu0 0
    %1306 = vmatpush1.bf16.xpose.msra.mxu0 %v1289
    %1307 = vmatprep.subr.bf16.mxu0 0
    %1308 = vmatpush2.bf16.xpose.msra.mxu0 0
    %1309 = vmatprep.subr.bf16.mxu0 0
    %1310 = vmatpush2.bf16.xpose.msra.mxu0 0
    %1311 = vmatprep.subr.bf16.mxu0 0
    %1312 = vmatpush2.bf16.xpose.msra.mxu0 0
    %1313 = vmatprep.subr.bf16.mxu0 0
    %1314 = vmatpush2.bf16.xpose.msra.mxu0 0
    %1315 = vmatprep.subr.bf16.mxu0 0
    %1316 = vmatpush2.bf16.xpose.msra.mxu0 0
    %1317 = vmatprep.subr.bf16.mxu0 0
    %1318 = vmatpush2.bf16.xpose.msra.mxu0 0
    %1319 = vmatprep.subr.bf16.mxu0 0
    %1320 = vmatpush2.bf16.xpose.msra.mxu0 0
    %1321 = vmatprep.subr.bf16.mxu0 0
    %1322 = vmatpush2.bf16.xpose.msra.mxu0 0
    %1323 = vmatprep.mubr.bf16.mxu0 0
    %1324 = vmatmul.mubr.bf16.gmra.mxu0 %v1286
    %v1325 = vpop.f32.mrf.mxu0
    %v1326 = vadd.f32 0.0, %v1325
    %v1327 = vpop.f32.mrf.mxu0
    %v1328 = vpop.f32.mrf.mxu0
    %v1329 = vpop.f32.mrf.mxu0
    %1330 = vdwg.mxu0
    %v1332 = vsel %vm1008, %v447, 0
    %v1335 = vsel %vm1008, %v727, 0
    %1337 = vmatprep.subr.bf16.mxu0 0
    %1338 = vmatpush1.bf16.xpose.msra.mxu0 0
    %1339 = vmatprep.subr.bf16.mxu0 0
    %1340 = vmatpush1.bf16.xpose.msra.mxu0 0
    %1341 = vmatprep.subr.bf16.mxu0 0
    %1342 = vmatpush1.bf16.xpose.msra.mxu0 0
    %1343 = vmatprep.subr.bf16.mxu0 0
    %1344 = vmatpush1.bf16.xpose.msra.mxu0 0
    %1345 = vmatprep.subr.bf16.mxu0 0
    %1346 = vmatpush1.bf16.xpose.msra.mxu0 0
    %1347 = vmatprep.subr.bf16.mxu0 0
    %1348 = vmatpush1.bf16.xpose.msra.mxu0 0
    %1349 = vmatprep.subr.bf16.mxu0 0
    %1350 = vmatpush1.bf16.xpose.msra.mxu0 0
    %1351 = vmatprep.subr.bf16.mxu0 0
    %1352 = vmatpush1.bf16.xpose.msra.mxu0 %v1335
    %1353 = vmatprep.subr.bf16.mxu0 0
    %1354 = vmatpush2.bf16.xpose.msra.mxu0 0
    %1355 = vmatprep.subr.bf16.mxu0 0
    %1356 = vmatpush2.bf16.xpose.msra.mxu0 0
    %1357 = vmatprep.subr.bf16.mxu0 0
    %1358 = vmatpush2.bf16.xpose.msra.mxu0 0
    %1359 = vmatprep.subr.bf16.mxu0 0
    %1360 = vmatpush2.bf16.xpose.msra.mxu0 0
    %1361 = vmatprep.subr.bf16.mxu0 0
    %1362 = vmatpush2.bf16.xpose.msra.mxu0 0
    %1363 = vmatprep.subr.bf16.mxu0 0
    %1364 = vmatpush2.bf16.xpose.msra.mxu0 0
    %1365 = vmatprep.subr.bf16.mxu0 0
    %1366 = vmatpush2.bf16.xpose.msra.mxu0 0
    %1367 = vmatprep.subr.bf16.mxu0 0
    %1368 = vmatpush2.bf16.xpose.msra.mxu0 0
    %1369 = vmatprep.mubr.bf16.mxu0 0
    %1370 = vmatmul.mubr.bf16.gmra.mxu0 %v1332
    %v1371 = vpop.f32.mrf.mxu0
    %v1372 = vadd.f32 0.0, %v1371
    %v1373 = vpop.f32.mrf.mxu0
    %v1374 = vpop.f32.mrf.mxu0
    %v1375 = vpop.f32.mrf.mxu0
    %1376 = vdwg.mxu0
    %v1377 = vlaneseq
    %v1378 = vshrl.u32 %v1377, 7
    %v1379 = vlaneseq
    %v1380 = vand.u32 %v1379, 127
    %vm1381 = vcmp.ge.s32.totalorder %v1378, %v1380
    %v1382 = vsel %vm1381, 1, 0
    %vm1383 = vcmp.eq.s32.totalorder %v1382, 1
    %v1384 = vsel %vm1383, %v1050, -1e+30
    %v1385 = vsel %vm1383, %v1096, -1e+30
    %v1386 = vsel %vm1383, %v1142, -1e+30
    %v1387 = vsel %vm1383, %v1188, -1e+30
    %v1388 = vsel %vm1383, %v1234, -1e+30
    %v1389 = vsel %vm1383, %v1280, -1e+30
    %v1390 = vsel %vm1383, %v1326, -1e+30
    %v1391 = vsel %vm1383, %v1372, -1e+30
    %v1392 = vsel %vm1008, %v1384, -inf
    %1393 = vmax.xlane.f32.xlu0 %v1392
    %v1394 = vpop.xlane.xlu0 %1393
    %v1395 = vsel %vm1008, %v1385, -inf
    %1396 = vmax.xlane.f32.xlu0 %v1395
    %v1397 = vpop.xlane.xlu0 %1396
    %v1398 = vsel %vm1008, %v1386, -inf
    %1399 = vmax.xlane.f32.xlu0 %v1398
    %v1400 = vpop.xlane.xlu0 %1399
    %v1401 = vsel %vm1008, %v1387, -inf
    %1402 = vmax.xlane.f32.xlu0 %v1401
    %v1403 = vpop.xlane.xlu0 %1402
    %v1404 = vsel %vm1008, %v1388, -inf
    %1405 = vmax.xlane.f32.xlu0 %v1404
    %v1406 = vpop.xlane.xlu0 %1405
    %v1407 = vsel %vm1008, %v1389, -inf
    %1408 = vmax.xlane.f32.xlu0 %v1407
    %v1409 = vpop.xlane.xlu0 %1408
    %v1410 = vsel %vm1008, %v1390, -inf
    %1411 = vmax.xlane.f32.xlu0 %v1410
    %v1412 = vpop.xlane.xlu0 %1411
    %v1413 = vsel %vm1008, %v1391, -inf
    %1414 = vmax.xlane.f32.xlu0 %v1413
    %v1415 = vpop.xlane.xlu0 %1414
    %v1416 = vsub.f32 %v1384, %v1394
    %v1417 = vsub.f32 %v1385, %v1397
    %v1418 = vsub.f32 %v1386, %v1400
    %v1419 = vsub.f32 %v1387, %v1403
    %v1420 = vsub.f32 %v1388, %v1406
    %v1421 = vsub.f32 %v1389, %v1409
    %v1422 = vsub.f32 %v1390, %v1412
    %v1423 = vsub.f32 %v1391, %v1415
    %v1424 = vmul.f32 %v1416, 1.442695
    %v1425 = vpow.pop %v1424
    %v1426 = vmul.f32 %v1417, 1.442695
    %v1427 = vpow.pop %v1426
    %v1428 = vmul.f32 %v1418, 1.442695
    %v1429 = vpow.pop %v1428
    %v1430 = vmul.f32 %v1419, 1.442695
    %v1431 = vpow.pop %v1430
    %v1432 = vmul.f32 %v1420, 1.442695
    %v1433 = vpow.pop %v1432
    %v1434 = vmul.f32 %v1421, 1.442695
    %v1435 = vpow.pop %v1434
    %v1436 = vmul.f32 %v1422, 1.442695
    %v1437 = vpow.pop %v1436
    %v1438 = vmul.f32 %v1423, 1.442695
    %v1439 = vpow.pop %v1438
    %v1440 = vsel %vm1008, %v1425, 0.0
    %1441 = vadd.xlane.f32.xlu0 %v1440
    %v1442 = vpop.xlane.xlu0 %1441
    %v1443 = vsel %vm1008, %v1427, 0.0
    %1444 = vadd.xlane.f32.xlu0 %v1443
    %v1445 = vpop.xlane.xlu0 %1444
    %v1446 = vsel %vm1008, %v1429, 0.0
    %1447 = vadd.xlane.f32.xlu0 %v1446
    %v1448 = vpop.xlane.xlu0 %1447
    %v1449 = vsel %vm1008, %v1431, 0.0
    %1450 = vadd.xlane.f32.xlu0 %v1449
    %v1451 = vpop.xlane.xlu0 %1450
    %v1452 = vsel %vm1008, %v1433, 0.0
    %1453 = vadd.xlane.f32.xlu0 %v1452
    %v1454 = vpop.xlane.xlu0 %1453
    %v1455 = vsel %vm1008, %v1435, 0.0
    %1456 = vadd.xlane.f32.xlu0 %v1455
    %v1457 = vpop.xlane.xlu0 %1456
    %v1458 = vsel %vm1008, %v1437, 0.0
    %1459 = vadd.xlane.f32.xlu0 %v1458
    %v1460 = vpop.xlane.xlu0 %1459
    %v1461 = vsel %vm1008, %v1439, 0.0
    %1462 = vadd.xlane.f32.xlu0 %v1461
    %v1463 = vpop.xlane.xlu0 %1462
    %v1464 = vrcp.pop %v1442
    %v1465 = vrcp.pop %v1445
    %v1466 = vrcp.pop %v1448
    %v1467 = vrcp.pop %v1451
    %v1468 = vrcp.pop %v1454
    %v1469 = vrcp.pop %v1457
    %v1470 = vrcp.pop %v1460
    %v1471 = vrcp.pop %v1463
    %v1472 = vmul.f32 %v1425, %v1464
    %v1473 = vmul.f32 %v1427, %v1465
    %v1474 = vmul.f32 %v1429, %v1466
    %v1475 = vmul.f32 %v1431, %v1467
    %v1476 = vmul.f32 %v1433, %v1468
    %v1477 = vmul.f32 %v1435, %v1469
    %v1478 = vmul.f32 %v1437, %v1470
    %v1479 = vmul.f32 %v1439, %v1471
    %v1480 = vpack.c.bf16 %v1472, %v1472
    %v1481 = vpack.c.bf16 %v1473, %v1473
    %v1482 = vpack.c.bf16 %v1474, %v1474
    %v1483 = vpack.c.bf16 %v1475, %v1475
    %v1484 = vpack.c.bf16 %v1476, %v1476
    %v1485 = vpack.c.bf16 %v1477, %v1477
    %v1486 = vpack.c.bf16 %v1478, %v1478
    %v1487 = vpack.c.bf16 %v1479, %v1479
    %v1489 = vsel %vm1008, %v1480, 0
    %vm1491 = vcmask 1043456
    %v1493 = vsel %vm1491, %v986, 0
    %1495 = vmatprep.subr.bf16.mxu0 0
    %1496 = vmatpush1.bf16.msra.mxu0 0
    %1497 = vmatprep.subr.bf16.mxu0 0
    %1498 = vmatpush1.bf16.msra.mxu0 0
    %1499 = vmatprep.subr.bf16.mxu0 0
    %1500 = vmatpush1.bf16.msra.mxu0 0
    %1501 = vmatprep.subr.bf16.mxu0 0
    %1502 = vmatpush1.bf16.msra.mxu0 0
    %1503 = vmatprep.subr.bf16.mxu0 0
    %1504 = vmatpush1.bf16.msra.mxu0 0
    %1505 = vmatprep.subr.bf16.mxu0 0
    %1506 = vmatpush1.bf16.msra.mxu0 0
    %1507 = vmatprep.subr.bf16.mxu0 0
    %1508 = vmatpush1.bf16.msra.mxu0 0
    %1509 = vmatprep.subr.bf16.mxu0 0
    %1510 = vmatpush1.bf16.msra.mxu0 %v1493
    %1511 = vmatprep.subr.bf16.mxu0 0
    %1512 = vmatpush2.bf16.msra.mxu0 0
    %1513 = vmatprep.subr.bf16.mxu0 0
    %1514 = vmatpush2.bf16.msra.mxu0 0
    %1515 = vmatprep.subr.bf16.mxu0 0
    %1516 = vmatpush2.bf16.msra.mxu0 0
    %1517 = vmatprep.subr.bf16.mxu0 0
    %1518 = vmatpush2.bf16.msra.mxu0 0
    %1519 = vmatprep.subr.bf16.mxu0 0
    %1520 = vmatpush2.bf16.msra.mxu0 0
    %1521 = vmatprep.subr.bf16.mxu0 0
    %1522 = vmatpush2.bf16.msra.mxu0 0
    %1523 = vmatprep.subr.bf16.mxu0 0
    %1524 = vmatpush2.bf16.msra.mxu0 0
    %1525 = vmatprep.subr.bf16.mxu0 0
    %1526 = vmatpush2.bf16.msra.mxu0 0
    %1527 = vmatprep.mubr.bf16.mxu0 0
    %1528 = vmatmul.mubr.bf16.gmra.mxu0 %v1489
    %v1529 = vpop.f32.mrf.mxu0
    %v1530 = vadd.f32 0.0, %v1529
    %v1531 = vpop.f32.mrf.mxu0
    %v1532 = vpop.f32.mrf.mxu0
    %v1533 = vpop.f32.mrf.mxu0
    %1534 = vdwg.mxu0
    %v1536 = vsel %vm1008, %v1481, 0
    %v1539 = vsel %vm1491, %v989, 0
    %1541 = vmatprep.subr.bf16.mxu0 0
    %1542 = vmatpush1.bf16.msra.mxu0 0
    %1543 = vmatprep.subr.bf16.mxu0 0
    %1544 = vmatpush1.bf16.msra.mxu0 0
    %1545 = vmatprep.subr.bf16.mxu0 0
    %1546 = vmatpush1.bf16.msra.mxu0 0
    %1547 = vmatprep.subr.bf16.mxu0 0
    %1548 = vmatpush1.bf16.msra.mxu0 0
    %1549 = vmatprep.subr.bf16.mxu0 0
    %1550 = vmatpush1.bf16.msra.mxu0 0
    %1551 = vmatprep.subr.bf16.mxu0 0
    %1552 = vmatpush1.bf16.msra.mxu0 0
    %1553 = vmatprep.subr.bf16.mxu0 0
    %1554 = vmatpush1.bf16.msra.mxu0 0
    %1555 = vmatprep.subr.bf16.mxu0 0
    %1556 = vmatpush1.bf16.msra.mxu0 %v1539
    %1557 = vmatprep.subr.bf16.mxu0 0
    %1558 = vmatpush2.bf16.msra.mxu0 0
    %1559 = vmatprep.subr.bf16.mxu0 0
    %1560 = vmatpush2.bf16.msra.mxu0 0
    %1561 = vmatprep.subr.bf16.mxu0 0
    %1562 = vmatpush2.bf16.msra.mxu0 0
    %1563 = vmatprep.subr.bf16.mxu0 0
    %1564 = vmatpush2.bf16.msra.mxu0 0
    %1565 = vmatprep.subr.bf16.mxu0 0
    %1566 = vmatpush2.bf16.msra.mxu0 0
    %1567 = vmatprep.subr.bf16.mxu0 0
    %1568 = vmatpush2.bf16.msra.mxu0 0
    %1569 = vmatprep.subr.bf16.mxu0 0
    %1570 = vmatpush2.bf16.msra.mxu0 0
    %1571 = vmatprep.subr.bf16.mxu0 0
    %1572 = vmatpush2.bf16.msra.mxu0 0
    %1573 = vmatprep.mubr.bf16.mxu0 0
    %1574 = vmatmul.mubr.bf16.gmra.mxu0 %v1536
    %v1575 = vpop.f32.mrf.mxu0
    %v1576 = vadd.f32 0.0, %v1575
    %v1577 = vpop.f32.mrf.mxu0
    %v1578 = vpop.f32.mrf.mxu0
    %v1579 = vpop.f32.mrf.mxu0
    %1580 = vdwg.mxu0
    %v1582 = vsel %vm1008, %v1482, 0
    %v1585 = vsel %vm1491, %v992, 0
    %1587 = vmatprep.subr.bf16.mxu0 0
    %1588 = vmatpush1.bf16.msra.mxu0 0
    %1589 = vmatprep.subr.bf16.mxu0 0
    %1590 = vmatpush1.bf16.msra.mxu0 0
    %1591 = vmatprep.subr.bf16.mxu0 0
    %1592 = vmatpush1.bf16.msra.mxu0 0
    %1593 = vmatprep.subr.bf16.mxu0 0
    %1594 = vmatpush1.bf16.msra.mxu0 0
    %1595 = vmatprep.subr.bf16.mxu0 0
    %1596 = vmatpush1.bf16.msra.mxu0 0
    %1597 = vmatprep.subr.bf16.mxu0 0
    %1598 = vmatpush1.bf16.msra.mxu0 0
    %1599 = vmatprep.subr.bf16.mxu0 0
    %1600 = vmatpush1.bf16.msra.mxu0 0
    %1601 = vmatprep.subr.bf16.mxu0 0
    %1602 = vmatpush1.bf16.msra.mxu0 %v1585
    %1603 = vmatprep.subr.bf16.mxu0 0
    %1604 = vmatpush2.bf16.msra.mxu0 0
    %1605 = vmatprep.subr.bf16.mxu0 0
    %1606 = vmatpush2.bf16.msra.mxu0 0
    %1607 = vmatprep.subr.bf16.mxu0 0
    %1608 = vmatpush2.bf16.msra.mxu0 0
    %1609 = vmatprep.subr.bf16.mxu0 0
    %1610 = vmatpush2.bf16.msra.mxu0 0
    %1611 = vmatprep.subr.bf16.mxu0 0
    %1612 = vmatpush2.bf16.msra.mxu0 0
    %1613 = vmatprep.subr.bf16.mxu0 0
    %1614 = vmatpush2.bf16.msra.mxu0 0
    %1615 = vmatprep.subr.bf16.mxu0 0
    %1616 = vmatpush2.bf16.msra.mxu0 0
    %1617 = vmatprep.subr.bf16.mxu0 0
    %1618 = vmatpush2.bf16.msra.mxu0 0
    %1619 = vmatprep.mubr.bf16.mxu0 0
    %1620 = vmatmul.mubr.bf16.gmra.mxu0 %v1582
    %v1621 = vpop.f32.mrf.mxu0
    %v1622 = vadd.f32 0.0, %v1621
    %v1623 = vpop.f32.mrf.mxu0
    %v1624 = vpop.f32.mrf.mxu0
    %v1625 = vpop.f32.mrf.mxu0
    %1626 = vdwg.mxu0
    %v1628 = vsel %vm1008, %v1483, 0
    %v1631 = vsel %vm1491, %v995, 0
    %1633 = vmatprep.subr.bf16.mxu0 0
    %1634 = vmatpush1.bf16.msra.mxu0 0
    %1635 = vmatprep.subr.bf16.mxu0 0
    %1636 = vmatpush1.bf16.msra.mxu0 0
    %1637 = vmatprep.subr.bf16.mxu0 0
    %1638 = vmatpush1.bf16.msra.mxu0 0
    %1639 = vmatprep.subr.bf16.mxu0 0
    %1640 = vmatpush1.bf16.msra.mxu0 0
    %1641 = vmatprep.subr.bf16.mxu0 0
    %1642 = vmatpush1.bf16.msra.mxu0 0
    %1643 = vmatprep.subr.bf16.mxu0 0
    %1644 = vmatpush1.bf16.msra.mxu0 0
    %1645 = vmatprep.subr.bf16.mxu0 0
    %1646 = vmatpush1.bf16.msra.mxu0 0
    %1647 = vmatprep.subr.bf16.mxu0 0
    %1648 = vmatpush1.bf16.msra.mxu0 %v1631
    %1649 = vmatprep.subr.bf16.mxu0 0
    %1650 = vmatpush2.bf16.msra.mxu0 0
    %1651 = vmatprep.subr.bf16.mxu0 0
    %1652 = vmatpush2.bf16.msra.mxu0 0
    %1653 = vmatprep.subr.bf16.mxu0 0
    %1654 = vmatpush2.bf16.msra.mxu0 0
    %1655 = vmatprep.subr.bf16.mxu0 0
    %1656 = vmatpush2.bf16.msra.mxu0 0
    %1657 = vmatprep.subr.bf16.mxu0 0
    %1658 = vmatpush2.bf16.msra.mxu0 0
    %1659 = vmatprep.subr.bf16.mxu0 0
    %1660 = vmatpush2.bf16.msra.mxu0 0
    %1661 = vmatprep.subr.bf16.mxu0 0
    %1662 = vmatpush2.bf16.msra.mxu0 0
    %1663 = vmatprep.subr.bf16.mxu0 0
    %1664 = vmatpush2.bf16.msra.mxu0 0
    %1665 = vmatprep.mubr.bf16.mxu0 0
    %1666 = vmatmul.mubr.bf16.gmra.mxu0 %v1628
    %v1667 = vpop.f32.mrf.mxu0
    %v1668 = vadd.f32 0.0, %v1667
    %v1669 = vpop.f32.mrf.mxu0
    %v1670 = vpop.f32.mrf.mxu0
    %v1671 = vpop.f32.mrf.mxu0
    %1672 = vdwg.mxu0
    %v1674 = vsel %vm1008, %v1484, 0
    %v1677 = vsel %vm1491, %v998, 0
    %1679 = vmatprep.subr.bf16.mxu0 0
    %1680 = vmatpush1.bf16.msra.mxu0 0
    %1681 = vmatprep.subr.bf16.mxu0 0
    %1682 = vmatpush1.bf16.msra.mxu0 0
    %1683 = vmatprep.subr.bf16.mxu0 0
    %1684 = vmatpush1.bf16.msra.mxu0 0
    %1685 = vmatprep.subr.bf16.mxu0 0
    %1686 = vmatpush1.bf16.msra.mxu0 0
    %1687 = vmatprep.subr.bf16.mxu0 0
    %1688 = vmatpush1.bf16.msra.mxu0 0
    %1689 = vmatprep.subr.bf16.mxu0 0
    %1690 = vmatpush1.bf16.msra.mxu0 0
    %1691 = vmatprep.subr.bf16.mxu0 0
    %1692 = vmatpush1.bf16.msra.mxu0 0
    %1693 = vmatprep.subr.bf16.mxu0 0
    %1694 = vmatpush1.bf16.msra.mxu0 %v1677
    %1695 = vmatprep.subr.bf16.mxu0 0
    %1696 = vmatpush2.bf16.msra.mxu0 0
    %1697 = vmatprep.subr.bf16.mxu0 0
    %1698 = vmatpush2.bf16.msra.mxu0 0
    %1699 = vmatprep.subr.bf16.mxu0 0
    %1700 = vmatpush2.bf16.msra.mxu0 0
    %1701 = vmatprep.subr.bf16.mxu0 0
    %1702 = vmatpush2.bf16.msra.mxu0 0
    %1703 = vmatprep.subr.bf16.mxu0 0
    %1704 = vmatpush2.bf16.msra.mxu0 0
    %1705 = vmatprep.subr.bf16.mxu0 0
    %1706 = vmatpush2.bf16.msra.mxu0 0
    %1707 = vmatprep.subr.bf16.mxu0 0
    %1708 = vmatpush2.bf16.msra.mxu0 0
    %1709 = vmatprep.subr.bf16.mxu0 0
    %1710 = vmatpush2.bf16.msra.mxu0 0
    %1711 = vmatprep.mubr.bf16.mxu0 0
    %1712 = vmatmul.mubr.bf16.gmra.mxu0 %v1674
    %v1713 = vpop.f32.mrf.mxu0
    %v1714 = vadd.f32 0.0, %v1713
    %v1715 = vpop.f32.mrf.mxu0
    %v1716 = vpop.f32.mrf.mxu0
    %v1717 = vpop.f32.mrf.mxu0
    %1718 = vdwg.mxu0
    %v1720 = vsel %vm1008, %v1485, 0
    %v1723 = vsel %vm1491, %v1001, 0
    %1725 = vmatprep.subr.bf16.mxu0 0
    %1726 = vmatpush1.bf16.msra.mxu0 0
    %1727 = vmatprep.subr.bf16.mxu0 0
    %1728 = vmatpush1.bf16.msra.mxu0 0
    %1729 = vmatprep.subr.bf16.mxu0 0
    %1730 = vmatpush1.bf16.msra.mxu0 0
    %1731 = vmatprep.subr.bf16.mxu0 0
    %1732 = vmatpush1.bf16.msra.mxu0 0
    %1733 = vmatprep.subr.bf16.mxu0 0
    %1734 = vmatpush1.bf16.msra.mxu0 0
    %1735 = vmatprep.subr.bf16.mxu0 0
    %1736 = vmatpush1.bf16.msra.mxu0 0
    %1737 = vmatprep.subr.bf16.mxu0 0
    %1738 = vmatpush1.bf16.msra.mxu0 0
    %1739 = vmatprep.subr.bf16.mxu0 0
    %1740 = vmatpush1.bf16.msra.mxu0 %v1723
    %1741 = vmatprep.subr.bf16.mxu0 0
    %1742 = vmatpush2.bf16.msra.mxu0 0
    %1743 = vmatprep.subr.bf16.mxu0 0
    %1744 = vmatpush2.bf16.msra.mxu0 0
    %1745 = vmatprep.subr.bf16.mxu0 0
    %1746 = vmatpush2.bf16.msra.mxu0 0
    %1747 = vmatprep.subr.bf16.mxu0 0
    %1748 = vmatpush2.bf16.msra.mxu0 0
    %1749 = vmatprep.subr.bf16.mxu0 0
    %1750 = vmatpush2.bf16.msra.mxu0 0
    %1751 = vmatprep.subr.bf16.mxu0 0
    %1752 = vmatpush2.bf16.msra.mxu0 0
    %1753 = vmatprep.subr.bf16.mxu0 0
    %1754 = vmatpush2.bf16.msra.mxu0 0
    %1755 = vmatprep.subr.bf16.mxu0 0
    %1756 = vmatpush2.bf16.msra.mxu0 0
    %1757 = vmatprep.mubr.bf16.mxu0 0
    %1758 = vmatmul.mubr.bf16.gmra.mxu0 %v1720
    %v1759 = vpop.f32.mrf.mxu0
    %v1760 = vadd.f32 0.0, %v1759
    %v1761 = vpop.f32.mrf.mxu0
    %v1762 = vpop.f32.mrf.mxu0
    %v1763 = vpop.f32.mrf.mxu0
    %1764 = vdwg.mxu0
    %v1766 = vsel %vm1008, %v1486, 0
    %v1769 = vsel %vm1491, %v1004, 0
    %1771 = vmatprep.subr.bf16.mxu0 0
    %1772 = vmatpush1.bf16.msra.mxu0 0
    %1773 = vmatprep.subr.bf16.mxu0 0
    %1774 = vmatpush1.bf16.msra.mxu0 0
    %1775 = vmatprep.subr.bf16.mxu0 0
    %1776 = vmatpush1.bf16.msra.mxu0 0
    %1777 = vmatprep.subr.bf16.mxu0 0
    %1778 = vmatpush1.bf16.msra.mxu0 0
    %1779 = vmatprep.subr.bf16.mxu0 0
    %1780 = vmatpush1.bf16.msra.mxu0 0
    %1781 = vmatprep.subr.bf16.mxu0 0
    %1782 = vmatpush1.bf16.msra.mxu0 0
    %1783 = vmatprep.subr.bf16.mxu0 0
    %1784 = vmatpush1.bf16.msra.mxu0 0
    %1785 = vmatprep.subr.bf16.mxu0 0
    %1786 = vmatpush1.bf16.msra.mxu0 %v1769
    %1787 = vmatprep.subr.bf16.mxu0 0
    %1788 = vmatpush2.bf16.msra.mxu0 0
    %1789 = vmatprep.subr.bf16.mxu0 0
    %1790 = vmatpush2.bf16.msra.mxu0 0
    %1791 = vmatprep.subr.bf16.mxu0 0
    %1792 = vmatpush2.bf16.msra.mxu0 0
    %1793 = vmatprep.subr.bf16.mxu0 0
    %1794 = vmatpush2.bf16.msra.mxu0 0
    %1795 = vmatprep.subr.bf16.mxu0 0
    %1796 = vmatpush2.bf16.msra.mxu0 0
    %1797 = vmatprep.subr.bf16.mxu0 0
    %1798 = vmatpush2.bf16.msra.mxu0 0
    %1799 = vmatprep.subr.bf16.mxu0 0
    %1800 = vmatpush2.bf16.msra.mxu0 0
    %1801 = vmatprep.subr.bf16.mxu0 0
    %1802 = vmatpush2.bf16.msra.mxu0 0
    %1803 = vmatprep.mubr.bf16.mxu0 0
    %1804 = vmatmul.mubr.bf16.gmra.mxu0 %v1766
    %v1805 = vpop.f32.mrf.mxu0
    %v1806 = vadd.f32 0.0, %v1805
    %v1807 = vpop.f32.mrf.mxu0
    %v1808 = vpop.f32.mrf.mxu0
    %v1809 = vpop.f32.mrf.mxu0
    %1810 = vdwg.mxu0
    %v1812 = vsel %vm1008, %v1487, 0
    %v1815 = vsel %vm1491, %v1007, 0
    %1817 = vmatprep.subr.bf16.mxu0 0
    %1818 = vmatpush1.bf16.msra.mxu0 0
    %1819 = vmatprep.subr.bf16.mxu0 0
    %1820 = vmatpush1.bf16.msra.mxu0 0
    %1821 = vmatprep.subr.bf16.mxu0 0
    %1822 = vmatpush1.bf16.msra.mxu0 0
    %1823 = vmatprep.subr.bf16.mxu0 0
    %1824 = vmatpush1.bf16.msra.mxu0 0
    %1825 = vmatprep.subr.bf16.mxu0 0
    %1826 = vmatpush1.bf16.msra.mxu0 0
    %1827 = vmatprep.subr.bf16.mxu0 0
    %1828 = vmatpush1.bf16.msra.mxu0 0
    %1829 = vmatprep.subr.bf16.mxu0 0
    %1830 = vmatpush1.bf16.msra.mxu0 0
    %1831 = vmatprep.subr.bf16.mxu0 0
    %1832 = vmatpush1.bf16.msra.mxu0 %v1815
    %1833 = vmatprep.subr.bf16.mxu0 0
    %1834 = vmatpush2.bf16.msra.mxu0 0
    %1835 = vmatprep.subr.bf16.mxu0 0
    %1836 = vmatpush2.bf16.msra.mxu0 0
    %1837 = vmatprep.subr.bf16.mxu0 0
    %1838 = vmatpush2.bf16.msra.mxu0 0
    %1839 = vmatprep.subr.bf16.mxu0 0
    %1840 = vmatpush2.bf16.msra.mxu0 0
    %1841 = vmatprep.subr.bf16.mxu0 0
    %1842 = vmatpush2.bf16.msra.mxu0 0
    %1843 = vmatprep.subr.bf16.mxu0 0
    %1844 = vmatpush2.bf16.msra.mxu0 0
    %1845 = vmatprep.subr.bf16.mxu0 0
    %1846 = vmatpush2.bf16.msra.mxu0 0
    %1847 = vmatprep.subr.bf16.mxu0 0
    %1848 = vmatpush2.bf16.msra.mxu0 0
    %1849 = vmatprep.mubr.bf16.mxu0 0
    %1850 = vmatmul.mubr.bf16.gmra.mxu0 %v1812
    %v1851 = vpop.f32.mrf.mxu0
    %v1852 = vadd.f32 0.0, %v1851
    %v1853 = vpop.f32.mrf.mxu0
    %v1854 = vpop.f32.mrf.mxu0
    %v1855 = vpop.f32.mrf.mxu0
    %1856 = vdwg.mxu0
    %v1857 = vcombine.low %v1530, %v1622
    %v1858 = vcombine.high %v1530, %v1622
    %v1860 = vunpack.c.l.s4 1983009808
    %v1861 = vunpack.c.0.s8 %v1860
    %v1862 = vlaneseq
    %v1863 = vshrl.u32 %v1862, 7
    %v1864 = vsub.s32 %v1861, %v1863
    %v1865 = vrot.slane %v1857, %v1864
    %v1867 = vunpack.c.l.s4 1983009808
    %v1868 = vunpack.c.0.s8 %v1867
    %v1869 = vlaneseq
    %v1870 = vshrl.u32 %v1869, 7
    %v1871 = vsub.s32 %v1868, %v1870
    %v1872 = vrot.slane %v1858, %v1871
    %v1873 = vcombine.low %v1576, %v1668
    %v1874 = vcombine.high %v1576, %v1668
    %v1876 = vunpack.c.l.s4 1983009808
    %v1877 = vunpack.c.0.s8 %v1876
    %v1878 = vlaneseq
    %v1879 = vshrl.u32 %v1878, 7
    %v1880 = vsub.s32 %v1877, %v1879
    %v1881 = vrot.slane %v1873, %v1880
    %v1883 = vunpack.c.l.s4 1983009808
    %v1884 = vunpack.c.0.s8 %v1883
    %v1885 = vlaneseq
    %v1886 = vshrl.u32 %v1885, 7
    %v1887 = vsub.s32 %v1884, %v1886
    %v1888 = vrot.slane %v1874, %v1887
    %v1889 = vcombine.low %v1865, %v1881
    %v1890 = vcombine.high %v1865, %v1881
    %v1892 = vunpack.c.l.s4 1934713408
    %v1893 = vunpack.c.0.s8 %v1892
    %v1894 = vlaneseq
    %v1895 = vshrl.u32 %v1894, 7
    %v1896 = vsub.s32 %v1893, %v1895
    %v1897 = vrot.slane %v1889, %v1896
    %v1899 = vunpack.c.l.s4 1934713408
    %v1900 = vunpack.c.0.s8 %v1899
    %v1901 = vlaneseq
    %v1902 = vshrl.u32 %v1901, 7
    %v1903 = vsub.s32 %v1900, %v1902
    %v1904 = vrot.slane %v1890, %v1903
    %v1905 = vcombine.low %v1872, %v1888
    %v1906 = vcombine.high %v1872, %v1888
    %v1908 = vunpack.c.l.s4 1934713408
    %v1909 = vunpack.c.0.s8 %v1908
    %v1910 = vlaneseq
    %v1911 = vshrl.u32 %v1910, 7
    %v1912 = vsub.s32 %v1909, %v1911
    %v1913 = vrot.slane %v1905, %v1912
    %v1915 = vunpack.c.l.s4 1934713408
    %v1916 = vunpack.c.0.s8 %v1915
    %v1917 = vlaneseq
    %v1918 = vshrl.u32 %v1917, 7
    %v1919 = vsub.s32 %v1916, %v1918
    %v1920 = vrot.slane %v1906, %v1919
    %v1921 = vcombine.high %v1897, 0.0
    %v1922 = vcombine.high %v1904, 0.0
    %v1923 = vcombine.high %v1913, 0.0
    %v1924 = vcombine.high %v1920, 0.0
    %v1925 = vcombine.low %v1714, %v1806
    %v1926 = vcombine.high %v1714, %v1806
    %v1928 = vunpack.c.l.s4 1983009808
    %v1929 = vunpack.c.0.s8 %v1928
    %v1930 = vlaneseq
    %v1931 = vshrl.u32 %v1930, 7
    %v1932 = vsub.s32 %v1929, %v1931
    %v1933 = vrot.slane %v1925, %v1932
    %v1935 = vunpack.c.l.s4 1983009808
    %v1936 = vunpack.c.0.s8 %v1935
    %v1937 = vlaneseq
    %v1938 = vshrl.u32 %v1937, 7
    %v1939 = vsub.s32 %v1936, %v1938
    %v1940 = vrot.slane %v1926, %v1939
    %v1941 = vcombine.low %v1760, %v1852
    %v1942 = vcombine.high %v1760, %v1852
    %v1944 = vunpack.c.l.s4 1983009808
    %v1945 = vunpack.c.0.s8 %v1944
    %v1946 = vlaneseq
    %v1947 = vshrl.u32 %v1946, 7
    %v1948 = vsub.s32 %v1945, %v1947
    %v1949 = vrot.slane %v1941, %v1948
    %v1951 = vunpack.c.l.s4 1983009808
    %v1952 = vunpack.c.0.s8 %v1951
    %v1953 = vlaneseq
    %v1954 = vshrl.u32 %v1953, 7
    %v1955 = vsub.s32 %v1952, %v1954
    %v1956 = vrot.slane %v1942, %v1955
    %v1957 = vcombine.low %v1933, %v1949
    %v1958 = vcombine.high %v1933, %v1949
    %v1960 = vunpack.c.l.s4 1934713408
    %v1961 = vunpack.c.0.s8 %v1960
    %v1962 = vlaneseq
    %v1963 = vshrl.u32 %v1962, 7
    %v1964 = vsub.s32 %v1961, %v1963
    %v1965 = vrot.slane %v1957, %v1964
    %v1967 = vunpack.c.l.s4 1934713408
    %v1968 = vunpack.c.0.s8 %v1967
    %v1969 = vlaneseq
    %v1970 = vshrl.u32 %v1969, 7
    %v1971 = vsub.s32 %v1968, %v1970
    %v1972 = vrot.slane %v1958, %v1971
    %v1973 = vcombine.low %v1940, %v1956
    %v1974 = vcombine.high %v1940, %v1956
    %v1976 = vunpack.c.l.s4 1934713408
    %v1977 = vunpack.c.0.s8 %v1976
    %v1978 = vlaneseq
    %v1979 = vshrl.u32 %v1978, 7
    %v1980 = vsub.s32 %v1977, %v1979
    %v1981 = vrot.slane %v1973, %v1980
    %v1983 = vunpack.c.l.s4 1934713408
    %v1984 = vunpack.c.0.s8 %v1983
    %v1985 = vlaneseq
    %v1986 = vshrl.u32 %v1985, 7
    %v1987 = vsub.s32 %v1984, %v1986
    %v1988 = vrot.slane %v1974, %v1987
    %v1989 = vcombine.high %v1965, 0.0
    %v1990 = vcombine.high %v1972, 0.0
    %v1991 = vcombine.high %v1981, 0.0
    %v1992 = vcombine.high %v1988, 0.0
    %v1993 = vcombine.low %v1897, %v1904
    %v1995 = vunpack.c.l.s4 1983009808
    %v1996 = vunpack.c.0.s8 %v1995
    %v1997 = vlaneseq
    %v1998 = vshrl.u32 %v1997, 7
    %v1999 = vsub.s32 %v1996, %v1998
    %v2000 = vrot.slane %v1993, %v1999
    %v2001 = vcombine.low %v1921, %v1922
    %v2003 = vunpack.c.l.s4 1983009808
    %v2004 = vunpack.c.0.s8 %v2003
    %v2005 = vlaneseq
    %v2006 = vshrl.u32 %v2005, 7
    %v2007 = vsub.s32 %v2004, %v2006
    %v2008 = vrot.slane %v2001, %v2007
    %v2009 = vcombine.low %v1913, %v1920
    %v2011 = vunpack.c.l.s4 1983009808
    %v2012 = vunpack.c.0.s8 %v2011
    %v2013 = vlaneseq
    %v2014 = vshrl.u32 %v2013, 7
    %v2015 = vsub.s32 %v2012, %v2014
    %v2016 = vrot.slane %v2009, %v2015
    %v2017 = vcombine.low %v1923, %v1924
    %v2019 = vunpack.c.l.s4 1983009808
    %v2020 = vunpack.c.0.s8 %v2019
    %v2021 = vlaneseq
    %v2022 = vshrl.u32 %v2021, 7
    %v2023 = vsub.s32 %v2020, %v2022
    %v2024 = vrot.slane %v2017, %v2023
    %v2025 = vcombine.low %v2000, %v2008
    %v2026 = vcombine.high %v2000, %v2008
    %v2028 = vunpack.c.l.s4 1934713408
    %v2029 = vunpack.c.0.s8 %v2028
    %v2030 = vlaneseq
    %v2031 = vshrl.u32 %v2030, 7
    %v2032 = vsub.s32 %v2029, %v2031
    %v2033 = vrot.slane %v2025, %v2032
    %v2035 = vunpack.c.l.s4 1934713408
    %v2036 = vunpack.c.0.s8 %v2035
    %v2037 = vlaneseq
    %v2038 = vshrl.u32 %v2037, 7
    %v2039 = vsub.s32 %v2036, %v2038
    %v2040 = vrot.slane %v2026, %v2039
    %v2041 = vcombine.low %v2016, %v2024
    %v2042 = vcombine.high %v2016, %v2024
    %v2044 = vunpack.c.l.s4 1934713408
    %v2045 = vunpack.c.0.s8 %v2044
    %v2046 = vlaneseq
    %v2047 = vshrl.u32 %v2046, 7
    %v2048 = vsub.s32 %v2045, %v2047
    %v2049 = vrot.slane %v2041, %v2048
    %v2051 = vunpack.c.l.s4 1934713408
    %v2052 = vunpack.c.0.s8 %v2051
    %v2053 = vlaneseq
    %v2054 = vshrl.u32 %v2053, 7
    %v2055 = vsub.s32 %v2052, %v2054
    %v2056 = vrot.slane %v2042, %v2055
    %v2057 = vcombine.low %v2033, %v2049
    %v2058 = vcombine.high %v2033, %v2049
    %v2059 = vcombine.low %v2040, %v2056
    %v2060 = vcombine.high %v2040, %v2056
    %v2061 = vcombine.low %v1965, %v1972
    %v2063 = vunpack.c.l.s4 1983009808
    %v2064 = vunpack.c.0.s8 %v2063
    %v2065 = vlaneseq
    %v2066 = vshrl.u32 %v2065, 7
    %v2067 = vsub.s32 %v2064, %v2066
    %v2068 = vrot.slane %v2061, %v2067
    %v2069 = vcombine.low %v1989, %v1990
    %v2071 = vunpack.c.l.s4 1983009808
    %v2072 = vunpack.c.0.s8 %v2071
    %v2073 = vlaneseq
    %v2074 = vshrl.u32 %v2073, 7
    %v2075 = vsub.s32 %v2072, %v2074
    %v2076 = vrot.slane %v2069, %v2075
    %v2077 = vcombine.low %v1981, %v1988
    %v2079 = vunpack.c.l.s4 1983009808
    %v2080 = vunpack.c.0.s8 %v2079
    %v2081 = vlaneseq
    %v2082 = vshrl.u32 %v2081, 7
    %v2083 = vsub.s32 %v2080, %v2082
    %v2084 = vrot.slane %v2077, %v2083
    %v2085 = vcombine.low %v1991, %v1992
    %v2087 = vunpack.c.l.s4 1983009808
    %v2088 = vunpack.c.0.s8 %v2087
    %v2089 = vlaneseq
    %v2090 = vshrl.u32 %v2089, 7
    %v2091 = vsub.s32 %v2088, %v2090
    %v2092 = vrot.slane %v2085, %v2091
    %v2093 = vcombine.low %v2068, %v2076
    %v2094 = vcombine.high %v2068, %v2076
    %v2096 = vunpack.c.l.s4 1934713408
    %v2097 = vunpack.c.0.s8 %v2096
    %v2098 = vlaneseq
    %v2099 = vshrl.u32 %v2098, 7
    %v2100 = vsub.s32 %v2097, %v2099
    %v2101 = vrot.slane %v2093, %v2100
    %v2103 = vunpack.c.l.s4 1934713408
    %v2104 = vunpack.c.0.s8 %v2103
    %v2105 = vlaneseq
    %v2106 = vshrl.u32 %v2105, 7
    %v2107 = vsub.s32 %v2104, %v2106
    %v2108 = vrot.slane %v2094, %v2107
    %v2109 = vcombine.low %v2084, %v2092
    %v2110 = vcombine.high %v2084, %v2092
    %v2112 = vunpack.c.l.s4 1934713408
    %v2113 = vunpack.c.0.s8 %v2112
    %v2114 = vlaneseq
    %v2115 = vshrl.u32 %v2114, 7
    %v2116 = vsub.s32 %v2113, %v2115
    %v2117 = vrot.slane %v2109, %v2116
    %v2119 = vunpack.c.l.s4 1934713408
    %v2120 = vunpack.c.0.s8 %v2119
    %v2121 = vlaneseq
    %v2122 = vshrl.u32 %v2121, 7
    %v2123 = vsub.s32 %v2120, %v2122
    %v2124 = vrot.slane %v2110, %v2123
    %v2125 = vcombine.low %v2101, %v2117
    %v2126 = vcombine.high %v2101, %v2117
    %v2127 = vcombine.low %v2108, %v2124
    %v2128 = vcombine.high %v2108, %v2124
    %2131 = vrot.lane.b32.xlu0 %v2058, 8
    %v2132 = vpop.permute.xlu0 %2131
    %2133 = vrot.lane.b32.xlu0 %v2126, 8
    %v2134 = vpop.permute.xlu0 %2133
    %2139 = vrot.lane.b32.xlu0 %v2059, 16
    %v2140 = vpop.permute.xlu0 %2139
    %2141 = vrot.lane.b32.xlu0 %v2127, 16
    %v2142 = vpop.permute.xlu0 %2141
    %2147 = vrot.lane.b32.xlu0 %v2060, 24
    %v2148 = vpop.permute.xlu0 %2147
    %2149 = vrot.lane.b32.xlu0 %v2128, 24
    %v2150 = vpop.permute.xlu0 %2149
    %v2153 = vsel %vm1008, %v2057, %v2132
    %v2154 = vsel %vm1008, %v2125, %v2134
    %vm2155 = vcmask 130048
    %v2156 = vsel %vm2155, %v2153, %v2140
    %v2157 = vsel %vm2155, %v2154, %v2142
    %vm2158 = vcmask 195584
    %v2159 = vsel %vm2158, %v2156, %v2148
    %v2160 = vsel %vm2158, %v2157, %v2150
    %v2161 = vpack.c.bf16 %v2160, %v2159
    %v2162 = vld [vmem:[%s5] sm:$0xf]
    %v2163 = vld [vmem:[%s5 + $0x4] sm:$0xf]
    %v2164 = vld [vmem:[%s5 + $0x8] sm:$0xf]
    %v2165 = vld [vmem:[%s5 + $0xc] sm:$0xf]
    %v2166 = vld [vmem:[%s6] sm:$0x1]
    %v2168 = vlaneseq
    %v2169 = vshrl.u32 %v2168, 7
    %v2170 = vsub.s32 0, %v2169
    %v2171 = vrot.slane %v2166, %v2170
    %v2177 = vunpack.c.l.b16 %v2162
    %v2178 = vunpack.c.l.b16 %v2163
    %v2179 = vunpack.c.l.b16 %v2164
    %v2180 = vunpack.c.l.b16 %v2165
    %v2181 = vpack.c.b16 %v2178, %v2177
    %v2182 = vpack.c.b16 %v2180, %v2179
    %v2186 = vsel %vm50, %v2161, 0
    %2188 = vmatprep.subr.bf16.mxu0 0
    %2189 = vmatpush1.bf16.msra.mxu0 0
    %2190 = vmatprep.subr.bf16.mxu0 0
    %2191 = vmatpush1.bf16.msra.mxu0 0
    %2192 = vmatprep.subr.bf16.mxu0 0
    %2193 = vmatpush1.bf16.msra.mxu0 0
    %2194 = vmatprep.subr.bf16.mxu0 0
    %2195 = vmatpush1.bf16.msra.mxu0 0
    %2196 = vmatprep.subr.bf16.mxu0 0
    %2197 = vmatpush1.bf16.msra.mxu0 0
    %2198 = vmatprep.subr.bf16.mxu0 0
    %2199 = vmatpush1.bf16.msra.mxu0 0
    %2200 = vmatprep.subr.bf16.mxu0 0
    %2201 = vmatpush1.bf16.msra.mxu0 %v2182
    %2202 = vmatprep.subr.bf16.mxu0 0
    %2203 = vmatpush1.bf16.msra.mxu0 %v2181
    %2204 = vmatprep.subr.bf16.mxu0 0
    %2205 = vmatpush2.bf16.msra.mxu0 0
    %2206 = vmatprep.subr.bf16.mxu0 0
    %2207 = vmatpush2.bf16.msra.mxu0 0
    %2208 = vmatprep.subr.bf16.mxu0 0
    %2209 = vmatpush2.bf16.msra.mxu0 0
    %2210 = vmatprep.subr.bf16.mxu0 0
    %2211 = vmatpush2.bf16.msra.mxu0 0
    %2212 = vmatprep.subr.bf16.mxu0 0
    %2213 = vmatpush2.bf16.msra.mxu0 0
    %2214 = vmatprep.subr.bf16.mxu0 0
    %2215 = vmatpush2.bf16.msra.mxu0 0
    %2216 = vmatprep.subr.bf16.mxu0 0
    %2217 = vmatpush2.bf16.msra.mxu0 0
    %2218 = vmatprep.subr.bf16.mxu0 0
    %2219 = vmatpush2.bf16.msra.mxu0 0
    %2220 = vmatprep.mubr.bf16.mxu0 0
    %2221 = vmatmul.mubr.bf16.gmra.mxu0 %v2186
    %v2222 = vpop.f32.mrf.mxu0
    %v2223 = vadd.f32 %v2171, %v2222
    %v2224 = vpop.f32.mrf.mxu0
    %v2225 = vpop.f32.mrf.mxu0
    %v2226 = vadd.f32 %v2171, %v2225
    %v2227 = vpop.f32.mrf.mxu0
    %2228 = vdwg.mxu0
    %v2229 = vadd.f32 %v46, %v2223
    %v2230 = vadd.f32 %v47, %v2226
    %v2231 = vld [vmem:[%s7] sm:$0x1]
    %v2232 = vld [vmem:[%s8] sm:$0x1]
    %v2233 = vsel %vm50, %v2229, 0.0
    %2234 = vadd.xlane.f32.xlu0 %v2233
    %v2235 = vpop.xlane.xlu0 %2234
    %v2236 = vsel %vm50, %v2230, 0.0
    %2237 = vadd.xlane.f32.xlu0 %v2236
    %v2238 = vpop.xlane.xlu0 %2237
    %v2239 = vmul.f32 %v2235, %v57
    %v2240 = vmul.f32 %v2238, %v57
    %v2241 = vsub.f32 %v2229, %v2239
    %v2242 = vsub.f32 %v2230, %v2240
    %v2243 = vmul.f32 %v2241, %v2241
    %v2244 = vmul.f32 %v2242, %v2242
    %v2245 = vsel %vm50, %v2243, 0.0
    %2246 = vadd.xlane.f32.xlu0 %v2245
    %v2247 = vpop.xlane.xlu0 %2246
    %v2248 = vsel %vm50, %v2244, 0.0
    %2249 = vadd.xlane.f32.xlu0 %v2248
    %v2250 = vpop.xlane.xlu0 %2249
    %v2251 = vmul.f32 %v2247, %v57
    %v2252 = vmul.f32 %v2250, %v57
    %v2253 = vadd.f32 %v2251, 1e-05
    %v2254 = vadd.f32 %v2252, 1e-05
    %v2255 = vrsqrt.pop %v2253
    %v2256 = vrsqrt.pop %v2254
    %v2257 = vmul.f32 %v2241, %v2255
    %v2258 = vmul.f32 %v2242, %v2256
    %v2260 = vlaneseq
    %v2261 = vshrl.u32 %v2260, 7
    %v2262 = vsub.s32 0, %v2261
    %v2263 = vrot.slane %v2231, %v2262
    %v2265 = vmul.f32 %v2257, %v2263
    %v2266 = vmul.f32 %v2258, %v2263
    %v2268 = vlaneseq
    %v2269 = vshrl.u32 %v2268, 7
    %v2270 = vsub.s32 0, %v2269
    %v2271 = vrot.slane %v2232, %v2270
    %v2273 = vadd.f32 %v2265, %v2271
    %v2274 = vadd.f32 %v2266, %v2271
    %v2275 = vpack.c.bf16 %v2274, %v2273
    %v2276 = vld [vmem:[%s9] sm:$0xf]
    %v2277 = vld [vmem:[%s9 + $0x4] sm:$0xf]
    %v2278 = vld [vmem:[%s9 + $0x8] sm:$0xf]
    %v2279 = vld [vmem:[%s9 + $0xc] sm:$0xf]
    %v2280 = vld [vmem:[%s10] sm:$0x1]
    %v2282 = vlaneseq
    %v2283 = vshrl.u32 %v2282, 7
    %v2284 = vsub.s32 0, %v2283
    %v2285 = vrot.slane %v2280, %v2284
    %v2291 = vunpack.c.l.b16 %v2276
    %v2292 = vunpack.c.l.b16 %v2277
    %v2293 = vunpack.c.l.b16 %v2278
    %v2294 = vunpack.c.l.b16 %v2279
    %v2295 = vpack.c.b16 %v2292, %v2291
    %v2296 = vpack.c.b16 %v2294, %v2293
    %v2300 = vsel %vm50, %v2275, 0
    %2302 = vmatprep.subr.bf16.mxu0 0
    %2303 = vmatpush1.bf16.msra.mxu0 0
    %2304 = vmatprep.subr.bf16.mxu0 0
    %2305 = vmatpush1.bf16.msra.mxu0 0
    %2306 = vmatprep.subr.bf16.mxu0 0
    %2307 = vmatpush1.bf16.msra.mxu0 0
    %2308 = vmatprep.subr.bf16.mxu0 0
    %2309 = vmatpush1.bf16.msra.mxu0 0
    %2310 = vmatprep.subr.bf16.mxu0 0
    %2311 = vmatpush1.bf16.msra.mxu0 0
    %2312 = vmatprep.subr.bf16.mxu0 0
    %2313 = vmatpush1.bf16.msra.mxu0 0
    %2314 = vmatprep.subr.bf16.mxu0 0
    %2315 = vmatpush1.bf16.msra.mxu0 %v2296
    %2316 = vmatprep.subr.bf16.mxu0 0
    %2317 = vmatpush1.bf16.msra.mxu0 %v2295
    %2318 = vmatprep.subr.bf16.mxu0 0
    %2319 = vmatpush2.bf16.msra.mxu0 0
    %2320 = vmatprep.subr.bf16.mxu0 0
    %2321 = vmatpush2.bf16.msra.mxu0 0
    %2322 = vmatprep.subr.bf16.mxu0 0
    %2323 = vmatpush2.bf16.msra.mxu0 0
    %2324 = vmatprep.subr.bf16.mxu0 0
    %2325 = vmatpush2.bf16.msra.mxu0 0
    %2326 = vmatprep.subr.bf16.mxu0 0
    %2327 = vmatpush2.bf16.msra.mxu0 0
    %2328 = vmatprep.subr.bf16.mxu0 0
    %2329 = vmatpush2.bf16.msra.mxu0 0
    %2330 = vmatprep.subr.bf16.mxu0 0
    %2331 = vmatpush2.bf16.msra.mxu0 0
    %2332 = vmatprep.subr.bf16.mxu0 0
    %2333 = vmatpush2.bf16.msra.mxu0 0
    %2334 = vmatprep.mubr.bf16.mxu0 0
    %2335 = vmatmul.mubr.bf16.gmra.mxu0 %v2300
    %v2336 = vpop.f32.mrf.mxu0
    %v2337 = vadd.f32 %v2285, %v2336
    %v2338 = vpop.f32.mrf.mxu0
    %v2339 = vpop.f32.mrf.mxu0
    %v2340 = vadd.f32 %v2285, %v2339
    %v2341 = vpop.f32.mrf.mxu0
    %2342 = vdwg.mxu0
    %v2343 = vmul.f32 %v2337, 0.5
    %v2344 = vmul.f32 %v2340, 0.5
    %v2345 = vmul.f32 %v2337, 0.70710677
    %v2346 = vmul.f32 %v2340, 0.70710677
    %vm2347 = vcmp.ge.f32.partialorder %v2345, 0.0
    %vm2348 = vcmp.ge.f32.partialorder %v2346, 0.0
    %v2349 = vsel %vm2347, 1.0, -1.0
    %v2350 = vsel %vm2348, 1.0, -1.0
    %v2351 = vand.u32 2147483647, %v2345
    %v2352 = vand.u32 2147483647, %v2346
    %v2353 = vmul.f32 %v2351, 0.3275911
    %v2354 = vmul.f32 %v2352, 0.3275911
    %v2355 = vadd.f32 %v2353, 1.0
    %v2356 = vadd.f32 %v2354, 1.0
    %v2357 = vrcp.pop %v2355
    %v2358 = vmul.f32 1.0, %v2357
    %v2359 = vrcp.pop %v2356
    %v2360 = vmul.f32 1.0, %v2359
    %v2361 = vmul.f32 %v2358, 1.0614054
    %v2362 = vmul.f32 %v2360, 1.0614054
    %v2363 = vadd.f32 %v2361, -1.4531521
    %v2364 = vadd.f32 %v2362, -1.4531521
    %v2365 = vmul.f32 %v2363, %v2358
    %v2366 = vmul.f32 %v2364, %v2360
    %v2367 = vadd.f32 %v2365, 1.4214138
    %v2368 = vadd.f32 %v2366, 1.4214138
    %v2369 = vmul.f32 %v2367, %v2358
    %v2370 = vmul.f32 %v2368, %v2360
    %v2371 = vadd.f32 %v2369, -0.28449672
    %v2372 = vadd.f32 %v2370, -0.28449672
    %v2373 = vmul.f32 %v2371, %v2358
    %v2374 = vmul.f32 %v2372, %v2360
    %v2375 = vadd.f32 %v2373, 0.2548296
    %v2376 = vadd.f32 %v2374, 0.2548296
    %v2377 = vmul.f32 %v2375, %v2358
    %v2378 = vmul.f32 %v2376, %v2360
    %v2379 = vsub.f32 0.0, %v2351
    %v2380 = vsub.f32 0.0, %v2352
    %v2381 = vmul.f32 %v2379, %v2351
    %v2382 = vmul.f32 %v2380, %v2352
    %v2383 = vmul.f32 %v2381, 1.442695
    %v2384 = vpow.pop %v2383
    %v2385 = vmul.f32 %v2382, 1.442695
    %v2386 = vpow.pop %v2385
    %v2387 = vmul.f32 %v2377, %v2384
    %v2388 = vmul.f32 %v2378, %v2386
    %v2389 = vsub.f32 1.0, %v2387
    %v2390 = vsub.f32 1.0, %v2388
    %v2391 = vmul.f32 %v2349, %v2389
    %v2392 = vmul.f32 %v2350, %v2390
    %v2393 = vadd.f32 %v2391, 1.0
    %v2394 = vadd.f32 %v2392, 1.0
    %v2395 = vmul.f32 %v2343, %v2393
    %v2396 = vmul.f32 %v2344, %v2394
    %v2397 = vpack.c.bf16 %v2396, %v2395
    %v2398 = vld [vmem:[%s11] sm:$0xf]
    %v2399 = vld [vmem:[%s11 + $0x4] sm:$0xf]
    %v2400 = vld [vmem:[%s11 + $0x8] sm:$0xf]
    %v2401 = vld [vmem:[%s11 + $0xc] sm:$0xf]
    %v2402 = vld [vmem:[%s11 + $0x10] sm:$0xf]
    %v2403 = vld [vmem:[%s11 + $0x14] sm:$0xf]
    %v2404 = vld [vmem:[%s11 + $0x18] sm:$0xf]
    %v2405 = vld [vmem:[%s11 + $0x1c] sm:$0xf]
    %v2406 = vld [vmem:[%s11 + $0x20] sm:$0xf]
    %v2407 = vld [vmem:[%s11 + $0x24] sm:$0xf]
    %v2408 = vld [vmem:[%s11 + $0x28] sm:$0xf]
    %v2409 = vld [vmem:[%s11 + $0x2c] sm:$0xf]
    %v2410 = vld [vmem:[%s11 + $0x30] sm:$0xf]
    %v2411 = vld [vmem:[%s11 + $0x34] sm:$0xf]
    %v2412 = vld [vmem:[%s11 + $0x38] sm:$0xf]
    %v2413 = vld [vmem:[%s11 + $0x3c] sm:$0xf]
    %v2414 = vld [vmem:[%s12] sm:$0x1]
    %v2416 = vlaneseq
    %v2417 = vshrl.u32 %v2416, 7
    %v2418 = vsub.s32 0, %v2417
    %v2419 = vrot.slane %v2414, %v2418
    %v2437 = vunpack.c.l.b16 %v2398
    %v2438 = vunpack.c.l.b16 %v2399
    %v2439 = vunpack.c.l.b16 %v2400
    %v2440 = vunpack.c.l.b16 %v2401
    %v2441 = vunpack.c.l.b16 %v2402
    %v2442 = vunpack.c.l.b16 %v2403
    %v2443 = vunpack.c.l.b16 %v2404
    %v2444 = vunpack.c.l.b16 %v2405
    %v2445 = vunpack.c.l.b16 %v2406
    %v2446 = vunpack.c.l.b16 %v2407
    %v2447 = vunpack.c.l.b16 %v2408
    %v2448 = vunpack.c.l.b16 %v2409
    %v2449 = vunpack.c.l.b16 %v2410
    %v2450 = vunpack.c.l.b16 %v2411
    %v2451 = vunpack.c.l.b16 %v2412
    %v2452 = vunpack.c.l.b16 %v2413
    %v2453 = vpack.c.b16 %v2438, %v2437
    %v2454 = vpack.c.b16 %v2440, %v2439
    %v2455 = vpack.c.b16 %v2442, %v2441
    %v2456 = vpack.c.b16 %v2444, %v2443
    %v2457 = vpack.c.b16 %v2446, %v2445
    %v2458 = vpack.c.b16 %v2448, %v2447
    %v2459 = vpack.c.b16 %v2450, %v2449
    %v2460 = vpack.c.b16 %v2452, %v2451
    %2469 = vmatprep.subr.bf16.mxu0 0
    %2470 = vmatpush1.bf16.msra.mxu0 %v2460
    %2471 = vmatprep.subr.bf16.mxu0 0
    %2472 = vmatpush1.bf16.msra.mxu0 %v2459
    %2473 = vmatprep.subr.bf16.mxu0 0
    %2474 = vmatpush1.bf16.msra.mxu0 %v2458
    %2475 = vmatprep.subr.bf16.mxu0 0
    %2476 = vmatpush1.bf16.msra.mxu0 %v2457
    %2477 = vmatprep.subr.bf16.mxu0 0
    %2478 = vmatpush1.bf16.msra.mxu0 %v2456
    %2479 = vmatprep.subr.bf16.mxu0 0
    %2480 = vmatpush1.bf16.msra.mxu0 %v2455
    %2481 = vmatprep.subr.bf16.mxu0 0
    %2482 = vmatpush1.bf16.msra.mxu0 %v2454
    %2483 = vmatprep.subr.bf16.mxu0 0
    %2484 = vmatpush1.bf16.msra.mxu0 %v2453
    %2485 = vmatprep.subr.bf16.mxu0 0
    %2486 = vmatpush2.bf16.msra.mxu0 0
    %2487 = vmatprep.subr.bf16.mxu0 0
    %2488 = vmatpush2.bf16.msra.mxu0 0
    %2489 = vmatprep.subr.bf16.mxu0 0
    %2490 = vmatpush2.bf16.msra.mxu0 0
    %2491 = vmatprep.subr.bf16.mxu0 0
    %2492 = vmatpush2.bf16.msra.mxu0 0
    %2493 = vmatprep.subr.bf16.mxu0 0
    %2494 = vmatpush2.bf16.msra.mxu0 0
    %2495 = vmatprep.subr.bf16.mxu0 0
    %2496 = vmatpush2.bf16.msra.mxu0 0
    %2497 = vmatprep.subr.bf16.mxu0 0
    %2498 = vmatpush2.bf16.msra.mxu0 0
    %2499 = vmatprep.subr.bf16.mxu0 0
    %2500 = vmatpush2.bf16.msra.mxu0 0
    %2501 = vmatprep.mubr.bf16.mxu0 0
    %2502 = vmatmul.mubr.bf16.gmra.mxu0 %v2397
    %v2503 = vpop.f32.mrf.mxu0
    %v2504 = vadd.f32 %v2419, %v2503
    %v2505 = vpop.f32.mrf.mxu0
    %v2506 = vpop.f32.mrf.mxu0
    %v2507 = vadd.f32 %v2419, %v2506
    %v2508 = vpop.f32.mrf.mxu0
    %2509 = vdwg.mxu0
    %v2510 = vadd.f32 %v2229, %v2504
    %v2511 = vadd.f32 %v2230, %v2507
    %2512 = vst.msk [vmem:[#allocation2] sm:$0xff] %vm50, %v2510
    %2513 = vst.msk [vmem:[#allocation2 + $0x8] sm:$0xff] %vm50, %v2511
    // Predicated region
    $region54: #{tpu_custom_call.1} parent=1 // pred_check
      _
    $region55: #{tpu_custom_call.1} parent=1 // pred_check_branch
      %2515 = sbr.rel (0) target = $region57
    $region56: #{tpu_custom_call.1} parent=1 // pred_region
      %s2517 = ssub.s32 256, 256
      %2518 = vsyncadd [#allocation3], %s2517
      %s2519 = sshll.u32 [#allocation2], 4
      %s2520 = int_to_ptr.vmem [resolvable:$true] %s2519
      %2525 = dma.vmem_to_hbm [thread:$0]  %s2520, 256, %s13, [#allocation3], 128, 128, 8
    $region57: #{tpu_custom_call.1} parent=1 // pred_fallthru
      _
    // Predicated region
    $region58: #{tpu_custom_call.1} parent=1 // pred_check
      _
    $region59: #{tpu_custom_call.1} parent=1 // pred_check_branch
      %2527 = sbr.rel (0) target = $region61
    $region60: #{tpu_custom_call.1} parent=1 // pred_region
      %2528 = dma.done [#allocation3], 256
    $region61: #{tpu_custom_call.1} parent=1 // pred_fallthru
      _
    %2529 = vsyncpa [#allocation3], 1

// kernel: tpu_custom_call.1
$region0: #{tpu_custom_call.1}
  #allocation0 [shape = 'u32[]', space=smem, size = 0x4, offset = 0x4, fixed_abs, tag = 'smem constant byte address 0x4 - core index']
  #allocation1 [shape = 'u32[144,128]{1,0:T(1,128)}', space=vmem, size = 0x12000, scoped, tag = 'internal scratch']
  %s0 = inlined_call_operand.vmem [shape: f32[2,8,32], index: 0, kind: input, shape index: {}]
  %s1 = inlined_call_operand.vmem [shape: f32[1,32], index: 1, kind: input, shape index: {}]
  %s2 = inlined_call_operand.vmem [shape: f32[1,32], index: 2, kind: input, shape index: {}]
  %s3 = inlined_call_operand.vmem [shape: bf16[32,96], index: 3, kind: input, shape index: {}]
  %s4 = inlined_call_operand.vmem [shape: f32[1,96], index: 4, kind: input, shape index: {}]
  %s5 = inlined_call_operand.vmem [shape: bf16[32,32], index: 5, kind: input, shape index: {}]
  %s6 = inlined_call_operand.vmem [shape: f32[1,32], index: 6, kind: input, shape index: {}]
  %s7 = inlined_call_operand.vmem [shape: f32[1,32], index: 7, kind: input, shape index: {}]
  %s8 = inlined_call_operand.vmem [shape: f32[1,32], index: 8, kind: input, shape index: {}]
  %s9 = inlined_call_operand.vmem [shape: bf16[32,128], index: 9, kind: input, shape index: {}]
  %s10 = inlined_call_operand.vmem [shape: f32[1,128], index: 10, kind: input, shape index: {}]
  %s11 = inlined_call_operand.vmem [shape: bf16[128,32], index: 11, kind: input, shape index: {}]
  %s12 = inlined_call_operand.vmem [shape: f32[1,32], index: 12, kind: input, shape index: {}]
  %s13 = inlined_call_operand.hbm [shape: f32[2,8,32], index: 13, kind: output, shape index: {}]
  %s14 = sld [smem:[#allocation0]]
  $region62: #{tpu_custom_call.1} parent=0
    _
  %s16 = ssub.s32 1, %s14
  %s17 = scalar_select 0, %s16, %s14
  $region1: #{tpu_custom_call.1} parent=0
    #allocation2 [shape = 'u8[8192]{0}', space=vmem, size = 0x2000, scoped, tag = 'output window, operand 0, single buffered']
    #allocation3 [shape = 's32[1]{0}', space=sflag, size = 0x4, scoped, tag = 'scoped memory for tpu_custom_call.1']
    %18 = vsyncpa [#allocation3], 0
    // Predicated region
    $region2: #{tpu_custom_call.1} parent=1 // pred_check
      _
    $region3: #{tpu_custom_call.1} parent=1 // pred_check_branch
      %20 = sbr.rel (0) target = $region5
    $region4: #{tpu_custom_call.1} parent=1 // pred_region
      _
    $region5: #{tpu_custom_call.1} parent=1 // pred_fallthru
      _
    // Predicated region
    $region6: #{tpu_custom_call.1} parent=1 // pred_check
      _
    $region7: #{tpu_custom_call.1} parent=1 // pred_check_branch
      %22 = sbr.rel (0) target = $region9
    $region8: #{tpu_custom_call.1} parent=1 // pred_region
      _
    $region9: #{tpu_custom_call.1} parent=1 // pred_fallthru
      _
    // Predicated region
    $region10: #{tpu_custom_call.1} parent=1 // pred_check
      _
    $region11: #{tpu_custom_call.1} parent=1 // pred_check_branch
      %24 = sbr.rel (0) target = $region13
    $region12: #{tpu_custom_call.1} parent=1 // pred_region
      _
    $region13: #{tpu_custom_call.1} parent=1 // pred_fallthru
      _
    // Predicated region
    $region14: #{tpu_custom_call.1} parent=1 // pred_check
      _
    $region15: #{tpu_custom_call.1} parent=1 // pred_check_branch
      %26 = sbr.rel (0) target = $region17
    $region16: #{tpu_custom_call.1} parent=1 // pred_region
      _
    $region17: #{tpu_custom_call.1} parent=1 // pred_fallthru
      _
    // Predicated region
    $region18: #{tpu_custom_call.1} parent=1 // pred_check
      _
    $region19: #{tpu_custom_call.1} parent=1 // pred_check_branch
      %28 = sbr.rel (0) target = $region21
    $region20: #{tpu_custom_call.1} parent=1 // pred_region
      _
    $region21: #{tpu_custom_call.1} parent=1 // pred_fallthru
      _
    // Predicated region
    $region22: #{tpu_custom_call.1} parent=1 // pred_check
      _
    $region23: #{tpu_custom_call.1} parent=1 // pred_check_branch
      %30 = sbr.rel (0) target = $region25
    $region24: #{tpu_custom_call.1} parent=1 // pred_region
      _
    $region25: #{tpu_custom_call.1} parent=1 // pred_fallthru
      _
    // Predicated region
    $region26: #{tpu_custom_call.1} parent=1 // pred_check
      _
    $region27: #{tpu_custom_call.1} parent=1 // pred_check_branch
      %32 = sbr.rel (0) target = $region29
    $region28: #{tpu_custom_call.1} parent=1 // pred_region
      _
    $region29: #{tpu_custom_call.1} parent=1 // pred_fallthru
      _
    // Predicated region
    $region30: #{tpu_custom_call.1} parent=1 // pred_check
      _
    $region31: #{tpu_custom_call.1} parent=1 // pred_check_branch
      %34 = sbr.rel (0) target = $region33
    $region32: #{tpu_custom_call.1} parent=1 // pred_region
      _
    $region33: #{tpu_custom_call.1} parent=1 // pred_fallthru
      _
    // Predicated region
    $region34: #{tpu_custom_call.1} parent=1 // pred_check
      _
    $region35: #{tpu_custom_call.1} parent=1 // pred_check_branch
      %36 = sbr.rel (0) target = $region37
    $region36: #{tpu_custom_call.1} parent=1 // pred_region
      _
    $region37: #{tpu_custom_call.1} parent=1 // pred_fallthru
      _
    // Predicated region
    $region38: #{tpu_custom_call.1} parent=1 // pred_check
      _
    $region39: #{tpu_custom_call.1} parent=1 // pred_check_branch
      %38 = sbr.rel (0) target = $region41
    $region40: #{tpu_custom_call.1} parent=1 // pred_region
      _
    $region41: #{tpu_custom_call.1} parent=1 // pred_fallthru
      _
    // Predicated region
    $region42: #{tpu_custom_call.1} parent=1 // pred_check
      _
    $region43: #{tpu_custom_call.1} parent=1 // pred_check_branch
      %40 = sbr.rel (0) target = $region45
    $region44: #{tpu_custom_call.1} parent=1 // pred_region
      _
    $region45: #{tpu_custom_call.1} parent=1 // pred_fallthru
      _
    // Predicated region
    $region46: #{tpu_custom_call.1} parent=1 // pred_check
      _
    $region47: #{tpu_custom_call.1} parent=1 // pred_check_branch
      %42 = sbr.rel (0) target = $region49
    $region48: #{tpu_custom_call.1} parent=1 // pred_region
      _
    $region49: #{tpu_custom_call.1} parent=1 // pred_fallthru
      _
    // Predicated region
    $region50: #{tpu_custom_call.1} parent=1 // pred_check
      _
    $region51: #{tpu_custom_call.1} parent=1 // pred_check_branch
      %44 = sbr.rel (0) target = $region53
    $region52: #{tpu_custom_call.1} parent=1 // pred_region
      _
    $region53: #{tpu_custom_call.1} parent=1 // pred_fallthru
      _
    %v46 = vld [vmem:[%s0] sm:$0xff]
    %v47 = vld [vmem:[%s0 + $0x8] sm:$0xff]
    %v48 = vld [vmem:[%s1] sm:$0x1]
    %v49 = vld [vmem:[%s2] sm:$0x1]
    %vm50 = vcmask 261120
    %v51 = vsel %vm50, %v46, 0.0
    %52 = vadd.xlane.f32.xlu0 %v51
    %v53 = vpop.xlane.xlu0 %52
    %v54 = vsel %vm50, %v47, 0.0
    %55 = vadd.xlane.f32.xlu0 %v54
    %v56 = vpop.xlane.xlu0 %55
    %v57 = vrcp.pop 32.0
    %v58 = vmul.f32 %v53, %v57
    %v59 = vmul.f32 %v56, %v57
    %v60 = vsub.f32 %v46, %v58
    %v61 = vsub.f32 %v47, %v59
    %v62 = vmul.f32 %v60, %v60
    %v63 = vmul.f32 %v61, %v61
    %v64 = vsel %vm50, %v62, 0.0
    %65 = vadd.xlane.f32.xlu0 %v64
    %v66 = vpop.xlane.xlu0 %65
    %v67 = vsel %vm50, %v63, 0.0
    %68 = vadd.xlane.f32.xlu0 %v67
    %v69 = vpop.xlane.xlu0 %68
    %v70 = vmul.f32 %v66, %v57
    %v71 = vmul.f32 %v69, %v57
    %v72 = vadd.f32 %v70, 1e-05
    %v73 = vadd.f32 %v71, 1e-05
    %v74 = vrsqrt.pop %v72
    %v75 = vrsqrt.pop %v73
    %v76 = vmul.f32 %v60, %v74
    %v77 = vmul.f32 %v61, %v75
    %v79 = vlaneseq
    %v80 = vshrl.u32 %v79, 7
    %v81 = vsub.s32 0, %v80
    %v82 = vrot.slane %v48, %v81
    %v84 = vmul.f32 %v76, %v82
    %v85 = vmul.f32 %v77, %v82
    %v87 = vlaneseq
    %v88 = vshrl.u32 %v87, 7
    %v89 = vsub.s32 0, %v88
    %v90 = vrot.slane %v49, %v89
    %v92 = vadd.f32 %v84, %v90
    %v93 = vadd.f32 %v85, %v90
    %v94 = vpack.c.bf16 %v93, %v92
    %v95 = vld [vmem:[%s3] sm:$0xf]
    %v96 = vld [vmem:[%s3 + $0x4] sm:$0xf]
    %v97 = vld [vmem:[%s3 + $0x8] sm:$0xf]
    %v98 = vld [vmem:[%s3 + $0xc] sm:$0xf]
    %v99 = vld [vmem:[%s4] sm:$0x1]
    %v101 = vlaneseq
    %v102 = vshrl.u32 %v101, 7
    %v103 = vsub.s32 0, %v102
    %v104 = vrot.slane %v99, %v103
    %v110 = vunpack.c.l.b16 %v95
    %v111 = vunpack.c.l.b16 %v96
    %v112 = vunpack.c.l.b16 %v97
    %v113 = vunpack.c.l.b16 %v98
    %v114 = vpack.c.b16 %v111, %v110
    %v115 = vpack.c.b16 %v113, %v112
    %v119 = vsel %vm50, %v94, 0
    %121 = vmatprep.subr.bf16.mxu0 0
    %122 = vmatpush1.bf16.msra.mxu0 0
    %123 = vmatprep.subr.bf16.mxu0 0
    %124 = vmatpush1.bf16.msra.mxu0 0
    %125 = vmatprep.subr.bf16.mxu0 0
    %126 = vmatpush1.bf16.msra.mxu0 0
    %127 = vmatprep.subr.bf16.mxu0 0
    %128 = vmatpush1.bf16.msra.mxu0 0
    %129 = vmatprep.subr.bf16.mxu0 0
    %130 = vmatpush1.bf16.msra.mxu0 0
    %131 = vmatprep.subr.bf16.mxu0 0
    %132 = vmatpush1.bf16.msra.mxu0 0
    %133 = vmatprep.subr.bf16.mxu0 0
    %134 = vmatpush1.bf16.msra.mxu0 %v115
    %135 = vmatprep.subr.bf16.mxu0 0
    %136 = vmatpush1.bf16.msra.mxu0 %v114
    %137 = vmatprep.subr.bf16.mxu0 0
    %138 = vmatpush2.bf16.msra.mxu0 0
    %139 = vmatprep.subr.bf16.mxu0 0
    %140 = vmatpush2.bf16.msra.mxu0 0
    %141 = vmatprep.subr.bf16.mxu0 0
    %142 = vmatpush2.bf16.msra.mxu0 0
    %143 = vmatprep.subr.bf16.mxu0 0
    %144 = vmatpush2.bf16.msra.mxu0 0
    %145 = vmatprep.subr.bf16.mxu0 0
    %146 = vmatpush2.bf16.msra.mxu0 0
    %147 = vmatprep.subr.bf16.mxu0 0
    %148 = vmatpush2.bf16.msra.mxu0 0
    %149 = vmatprep.subr.bf16.mxu0 0
    %150 = vmatpush2.bf16.msra.mxu0 0
    %151 = vmatprep.subr.bf16.mxu0 0
    %152 = vmatpush2.bf16.msra.mxu0 0
    %153 = vmatprep.mubr.bf16.mxu0 0
    %154 = vmatmul.mubr.bf16.gmra.mxu0 %v119
    %v155 = vpop.f32.mrf.mxu0
    %v156 = vadd.f32 %v104, %v155
    %v157 = vpop.f32.mrf.mxu0
    %v158 = vpop.f32.mrf.mxu0
    %v159 = vadd.f32 %v104, %v158
    %v160 = vpop.f32.mrf.mxu0
    %161 = vdwg.mxu0
    %v162 = vpack.c.bf16 %v159, %v156
    %164 = vrot.lane.b32.xlu0 %v162, 120
    %v165 = vpop.permute.xlu0 %164
    %166 = vrot.lane.b32.xlu0 %v162, 112
    %v167 = vpop.permute.xlu0 %166
    %168 = vrot.lane.b32.xlu0 %v162, 104
    %v169 = vpop.permute.xlu0 %168
    %v172 = vpack.i.b16 %v165, %v162
    %v174 = vshrl.u32 %v162, 16
    %v175 = vshrl.u32 %v165, 16
    %v176 = vpack.i.b16 %v175, %v174
    %v180 = vpack.i.b16 %v169, %v167
    %v182 = vshrl.u32 %v167, 16
    %v183 = vshrl.u32 %v169, 16
    %v184 = vpack.i.b16 %v183, %v182
    %v187 = vpack.i.b16 0, 0
    %v189 = vshrl.u32 0, 16
    %v190 = vpack.i.b16 %v189, %v189
    %v192 = vcombine.high %v172, %v187
    %v194 = vunpack.c.l.s4 1983009808
    %v195 = vunpack.c.0.s8 %v194
    %v196 = vlaneseq
    %v197 = vshrl.u32 %v196, 7
    %v198 = vsub.s32 %v195, %v197
    %v199 = vrot.slane %v172, %v198
    %v201 = vunpack.c.l.s4 1983009808
    %v202 = vunpack.c.0.s8 %v201
    %v203 = vlaneseq
    %v204 = vshrl.u32 %v203, 7
    %v205 = vsub.s32 %v202, %v204
    %v206 = vrot.slane %v192, %v205
    %v207 = vcombine.high %v180, %v187
    %v209 = vunpack.c.l.s4 1983009808
    %v210 = vunpack.c.0.s8 %v209
    %v211 = vlaneseq
    %v212 = vshrl.u32 %v211, 7
    %v213 = vsub.s32 %v210, %v212
    %v214 = vrot.slane %v180, %v213
    %v216 = vunpack.c.l.s4 1983009808
    %v217 = vunpack.c.0.s8 %v216
    %v218 = vlaneseq
    %v219 = vshrl.u32 %v218, 7
    %v220 = vsub.s32 %v217, %v219
    %v221 = vrot.slane %v207, %v220
    %v222 = vcombine.low %v199, %v214
    %v223 = vcombine.high %v199, %v214
    %v225 = vunpack.c.l.s4 1934713408
    %v226 = vunpack.c.0.s8 %v225
    %v227 = vlaneseq
    %v228 = vshrl.u32 %v227, 7
    %v229 = vsub.s32 %v226, %v228
    %v230 = vrot.slane %v222, %v229
    %v232 = vunpack.c.l.s4 1934713408
    %v233 = vunpack.c.0.s8 %v232
    %v234 = vlaneseq
    %v235 = vshrl.u32 %v234, 7
    %v236 = vsub.s32 %v233, %v235
    %v237 = vrot.slane %v223, %v236
    %v238 = vcombine.low %v206, %v221
    %v239 = vcombine.high %v206, %v221
    %v241 = vunpack.c.l.s4 1934713408
    %v242 = vunpack.c.0.s8 %v241
    %v243 = vlaneseq
    %v244 = vshrl.u32 %v243, 7
    %v245 = vsub.s32 %v242, %v244
    %v246 = vrot.slane %v238, %v245
    %v248 = vunpack.c.l.s4 1934713408
    %v249 = vunpack.c.0.s8 %v248
    %v250 = vlaneseq
    %v251 = vshrl.u32 %v250, 7
    %v252 = vsub.s32 %v249, %v251
    %v253 = vrot.slane %v239, %v252
    %v254 = vcombine.high %v230, 0
    %v255 = vcombine.high %v237, 0
    %v256 = vcombine.high %v246, 0
    %v257 = vcombine.high %v253, 0
    %v258 = vcombine.high %v176, %v190
    %v260 = vunpack.c.l.s4 1983009808
    %v261 = vunpack.c.0.s8 %v260
    %v262 = vlaneseq
    %v263 = vshrl.u32 %v262, 7
    %v264 = vsub.s32 %v261, %v263
    %v265 = vrot.slane %v176, %v264
    %v267 = vunpack.c.l.s4 1983009808
    %v268 = vunpack.c.0.s8 %v267
    %v269 = vlaneseq
    %v270 = vshrl.u32 %v269, 7
    %v271 = vsub.s32 %v268, %v270
    %v272 = vrot.slane %v258, %v271
    %v273 = vcombine.high %v184, %v190
    %v275 = vunpack.c.l.s4 1983009808
    %v276 = vunpack.c.0.s8 %v275
    %v277 = vlaneseq
    %v278 = vshrl.u32 %v277, 7
    %v279 = vsub.s32 %v276, %v278
    %v280 = vrot.slane %v184, %v279
    %v282 = vunpack.c.l.s4 1983009808
    %v283 = vunpack.c.0.s8 %v282
    %v284 = vlaneseq
    %v285 = vshrl.u32 %v284, 7
    %v286 = vsub.s32 %v283, %v285
    %v287 = vrot.slane %v273, %v286
    %v288 = vcombine.low %v265, %v280
    %v289 = vcombine.high %v265, %v280
    %v291 = vunpack.c.l.s4 1934713408
    %v292 = vunpack.c.0.s8 %v291
    %v293 = vlaneseq
    %v294 = vshrl.u32 %v293, 7
    %v295 = vsub.s32 %v292, %v294
    %v296 = vrot.slane %v288, %v295
    %v298 = vunpack.c.l.s4 1934713408
    %v299 = vunpack.c.0.s8 %v298
    %v300 = vlaneseq
    %v301 = vshrl.u32 %v300, 7
    %v302 = vsub.s32 %v299, %v301
    %v303 = vrot.slane %v289, %v302
    %v304 = vcombine.low %v272, %v287
    %v305 = vcombine.high %v272, %v287
    %v307 = vunpack.c.l.s4 1934713408
    %v308 = vunpack.c.0.s8 %v307
    %v309 = vlaneseq
    %v310 = vshrl.u32 %v309, 7
    %v311 = vsub.s32 %v308, %v310
    %v312 = vrot.slane %v304, %v311
    %v314 = vunpack.c.l.s4 1934713408
    %v315 = vunpack.c.0.s8 %v314
    %v316 = vlaneseq
    %v317 = vshrl.u32 %v316, 7
    %v318 = vsub.s32 %v315, %v317
    %v319 = vrot.slane %v305, %v318
    %v320 = vcombine.high %v296, 0
    %v321 = vcombine.high %v303, 0
    %v322 = vcombine.high %v312, 0
    %v323 = vcombine.high %v319, 0
    %v324 = vcombine.low %v230, %v237
    %v326 = vunpack.c.l.s4 1983009808
    %v327 = vunpack.c.0.s8 %v326
    %v328 = vlaneseq
    %v329 = vshrl.u32 %v328, 7
    %v330 = vsub.s32 %v327, %v329
    %v331 = vrot.slane %v324, %v330
    %v332 = vcombine.low %v254, %v255
    %v334 = vunpack.c.l.s4 1983009808
    %v335 = vunpack.c.0.s8 %v334
    %v336 = vlaneseq
    %v337 = vshrl.u32 %v336, 7
    %v338 = vsub.s32 %v335, %v337
    %v339 = vrot.slane %v332, %v338
    %v340 = vcombine.low %v331, %v339
    %v342 = vunpack.c.l.s4 1934713408
    %v343 = vunpack.c.0.s8 %v342
    %v344 = vlaneseq
    %v345 = vshrl.u32 %v344, 7
    %v346 = vsub.s32 %v343, %v345
    %v347 = vrot.slane %v340, %v346
    %v348 = vcombine.high %v347, 0
    %v349 = vcombine.low %v296, %v303
    %v351 = vunpack.c.l.s4 1983009808
    %v352 = vunpack.c.0.s8 %v351
    %v353 = vlaneseq
    %v354 = vshrl.u32 %v353, 7
    %v355 = vsub.s32 %v352, %v354
    %v356 = vrot.slane %v349, %v355
    %v357 = vcombine.low %v320, %v321
    %v359 = vunpack.c.l.s4 1983009808
    %v360 = vunpack.c.0.s8 %v359
    %v361 = vlaneseq
    %v362 = vshrl.u32 %v361, 7
    %v363 = vsub.s32 %v360, %v362
    %v364 = vrot.slane %v357, %v363
    %v365 = vcombine.low %v356, %v364
    %v367 = vunpack.c.l.s4 1934713408
    %v368 = vunpack.c.0.s8 %v367
    %v369 = vlaneseq
    %v370 = vshrl.u32 %v369, 7
    %v371 = vsub.s32 %v368, %v370
    %v372 = vrot.slane %v365, %v371
    %v373 = vcombine.high %v372, 0
    %v374 = vcombine.low %v246, %v253
    %v376 = vunpack.c.l.s4 1983009808
    %v377 = vunpack.c.0.s8 %v376
    %v378 = vlaneseq
    %v379 = vshrl.u32 %v378, 7
    %v380 = vsub.s32 %v377, %v379
    %v381 = vrot.slane %v374, %v380
    %v382 = vcombine.low %v256, %v257
    %v384 = vunpack.c.l.s4 1983009808
    %v385 = vunpack.c.0.s8 %v384
    %v386 = vlaneseq
    %v387 = vshrl.u32 %v386, 7
    %v388 = vsub.s32 %v385, %v387
    %v389 = vrot.slane %v382, %v388
    %v390 = vcombine.low %v381, %v389
    %v392 = vunpack.c.l.s4 1934713408
    %v393 = vunpack.c.0.s8 %v392
    %v394 = vlaneseq
    %v395 = vshrl.u32 %v394, 7
    %v396 = vsub.s32 %v393, %v395
    %v397 = vrot.slane %v390, %v396
    %v398 = vcombine.high %v397, 0
    %v399 = vcombine.low %v312, %v319
    %v401 = vunpack.c.l.s4 1983009808
    %v402 = vunpack.c.0.s8 %v401
    %v403 = vlaneseq
    %v404 = vshrl.u32 %v403, 7
    %v405 = vsub.s32 %v402, %v404
    %v406 = vrot.slane %v399, %v405
    %v407 = vcombine.low %v322, %v323
    %v409 = vunpack.c.l.s4 1983009808
    %v410 = vunpack.c.0.s8 %v409
    %v411 = vlaneseq
    %v412 = vshrl.u32 %v411, 7
    %v413 = vsub.s32 %v410, %v412
    %v414 = vrot.slane %v407, %v413
    %v415 = vcombine.low %v406, %v414
    %v417 = vunpack.c.l.s4 1934713408
    %v418 = vunpack.c.0.s8 %v417
    %v419 = vlaneseq
    %v420 = vshrl.u32 %v419, 7
    %v421 = vsub.s32 %v418, %v420
    %v422 = vrot.slane %v415, %v421
    %v423 = vcombine.high %v422, 0
    %v426 = vpack.i.b16 %v372, %v347
    %v427 = vshrl.u32 %v347, 16
    %v428 = vshrl.u32 %v372, 16
    %v429 = vpack.i.b16 %v428, %v427
    %v432 = vpack.i.b16 %v373, %v348
    %v433 = vshrl.u32 %v348, 16
    %v434 = vshrl.u32 %v373, 16
    %v435 = vpack.i.b16 %v434, %v433
    %v438 = vpack.i.b16 %v422, %v397
    %v439 = vshrl.u32 %v397, 16
    %v440 = vshrl.u32 %v422, 16
    %v441 = vpack.i.b16 %v440, %v439
    %v444 = vpack.i.b16 %v423, %v398
    %v445 = vshrl.u32 %v398, 16
    %v446 = vshrl.u32 %v423, 16
    %v447 = vpack.i.b16 %v446, %v445
    %448 = vrot.lane.b32.xlu0 %v162, 96
    %v449 = vpop.permute.xlu0 %448
    %450 = vrot.lane.b32.xlu0 %v165, 96
    %v451 = vpop.permute.xlu0 %450
    %452 = vrot.lane.b32.xlu0 %v167, 96
    %v453 = vpop.permute.xlu0 %452
    %454 = vrot.lane.b32.xlu0 %v169, 96
    %v455 = vpop.permute.xlu0 %454
    %v458 = vpack.i.b16 %v451, %v449
    %v460 = vshrl.u32 %v449, 16
    %v461 = vshrl.u32 %v451, 16
    %v462 = vpack.i.b16 %v461, %v460
    %v466 = vpack.i.b16 %v455, %v453
    %v468 = vshrl.u32 %v453, 16
    %v469 = vshrl.u32 %v455, 16
    %v470 = vpack.i.b16 %v469, %v468
    %v472 = vcombine.high %v458, %v187
    %v474 = vunpack.c.l.s4 1983009808
    %v475 = vunpack.c.0.s8 %v474
    %v476 = vlaneseq
    %v477 = vshrl.u32 %v476, 7
    %v478 = vsub.s32 %v475, %v477
    %v479 = vrot.slane %v458, %v478
    %v481 = vunpack.c.l.s4 1983009808
    %v482 = vunpack.c.0.s8 %v481
    %v483 = vlaneseq
    %v484 = vshrl.u32 %v483, 7
    %v485 = vsub.s32 %v482, %v484
    %v486 = vrot.slane %v472, %v485
    %v487 = vcombine.high %v466, %v187
    %v489 = vunpack.c.l.s4 1983009808
    %v490 = vunpack.c.0.s8 %v489
    %v491 = vlaneseq
    %v492 = vshrl.u32 %v491, 7
    %v493 = vsub.s32 %v490, %v492
    %v494 = vrot.slane %v466, %v493
    %v496 = vunpack.c.l.s4 1983009808
    %v497 = vunpack.c.0.s8 %v496
    %v498 = vlaneseq
    %v499 = vshrl.u32 %v498, 7
    %v500 = vsub.s32 %v497, %v499
    %v501 = vrot.slane %v487, %v500
    %v502 = vcombine.low %v479, %v494
    %v503 = vcombine.high %v479, %v494
    %v505 = vunpack.c.l.s4 1934713408
    %v506 = vunpack.c.0.s8 %v505
    %v507 = vlaneseq
    %v508 = vshrl.u32 %v507, 7
    %v509 = vsub.s32 %v506, %v508
    %v510 = vrot.slane %v502, %v509
    %v512 = vunpack.c.l.s4 1934713408
    %v513 = vunpack.c.0.s8 %v512
    %v514 = vlaneseq
    %v515 = vshrl.u32 %v514, 7
    %v516 = vsub.s32 %v513, %v515
    %v517 = vrot.slane %v503, %v516
    %v518 = vcombine.low %v486, %v501
    %v519 = vcombine.high %v486, %v501
    %v521 = vunpack.c.l.s4 1934713408
    %v522 = vunpack.c.0.s8 %v521
    %v523 = vlaneseq
    %v524 = vshrl.u32 %v523, 7
    %v525 = vsub.s32 %v522, %v524
    %v526 = vrot.slane %v518, %v525
    %v528 = vunpack.c.l.s4 1934713408
    %v529 = vunpack.c.0.s8 %v528
    %v530 = vlaneseq
    %v531 = vshrl.u32 %v530, 7
    %v532 = vsub.s32 %v529, %v531
    %v533 = vrot.slane %v519, %v532
    %v534 = vcombine.high %v510, 0
    %v535 = vcombine.high %v517, 0
    %v536 = vcombine.high %v526, 0
    %v537 = vcombine.high %v533, 0
    %v538 = vcombine.high %v462, %v190
    %v540 = vunpack.c.l.s4 1983009808
    %v541 = vunpack.c.0.s8 %v540
    %v542 = vlaneseq
    %v543 = vshrl.u32 %v542, 7
    %v544 = vsub.s32 %v541, %v543
    %v545 = vrot.slane %v462, %v544
    %v547 = vunpack.c.l.s4 1983009808
    %v548 = vunpack.c.0.s8 %v547
    %v549 = vlaneseq
    %v550 = vshrl.u32 %v549, 7
    %v551 = vsub.s32 %v548, %v550
    %v552 = vrot.slane %v538, %v551
    %v553 = vcombine.high %v470, %v190
    %v555 = vunpack.c.l.s4 1983009808
    %v556 = vunpack.c.0.s8 %v555
    %v557 = vlaneseq
    %v558 = vshrl.u32 %v557, 7
    %v559 = vsub.s32 %v556, %v558
    %v560 = vrot.slane %v470, %v559
    %v562 = vunpack.c.l.s4 1983009808
    %v563 = vunpack.c.0.s8 %v562
    %v564 = vlaneseq
    %v565 = vshrl.u32 %v564, 7
    %v566 = vsub.s32 %v563, %v565
    %v567 = vrot.slane %v553, %v566
    %v568 = vcombine.low %v545, %v560
    %v569 = vcombine.high %v545, %v560
    %v571 = vunpack.c.l.s4 1934713408
    %v572 = vunpack.c.0.s8 %v571
    %v573 = vlaneseq
    %v574 = vshrl.u32 %v573, 7
    %v575 = vsub.s32 %v572, %v574
    %v576 = vrot.slane %v568, %v575
    %v578 = vunpack.c.l.s4 1934713408
    %v579 = vunpack.c.0.s8 %v578
    %v580 = vlaneseq
    %v581 = vshrl.u32 %v580, 7
    %v582 = vsub.s32 %v579, %v581
    %v583 = vrot.slane %v569, %v582
    %v584 = vcombine.low %v552, %v567
    %v585 = vcombine.high %v552, %v567
    %v587 = vunpack.c.l.s4 1934713408
    %v588 = vunpack.c.0.s8 %v587
    %v589 = vlaneseq
    %v590 = vshrl.u32 %v589, 7
    %v591 = vsub.s32 %v588, %v590
    %v592 = vrot.slane %v584, %v591
    %v594 = vunpack.c.l.s4 1934713408
    %v595 = vunpack.c.0.s8 %v594
    %v596 = vlaneseq
    %v597 = vshrl.u32 %v596, 7
    %v598 = vsub.s32 %v595, %v597
    %v599 = vrot.slane %v585, %v598
    %v600 = vcombine.high %v576, 0
    %v601 = vcombine.high %v583, 0
    %v602 = vcombine.high %v592, 0
    %v603 = vcombine.high %v599, 0
    %v604 = vcombine.low %v510, %v517
    %v606 = vunpack.c.l.s4 1983009808
    %v607 = vunpack.c.0.s8 %v606
    %v608 = vlaneseq
    %v609 = vshrl.u32 %v608, 7
    %v610 = vsub.s32 %v607, %v609
    %v611 = vrot.slane %v604, %v610
    %v612 = vcombine.low %v534, %v535
    %v614 = vunpack.c.l.s4 1983009808
    %v615 = vunpack.c.0.s8 %v614
    %v616 = vlaneseq
    %v617 = vshrl.u32 %v616, 7
    %v618 = vsub.s32 %v615, %v617
    %v619 = vrot.slane %v612, %v618
    %v620 = vcombine.low %v611, %v619
    %v622 = vunpack.c.l.s4 1934713408
    %v623 = vunpack.c.0.s8 %v622
    %v624 = vlaneseq
    %v625 = vshrl.u32 %v624, 7
    %v626 = vsub.s32 %v623, %v625
    %v627 = vrot.slane %v620, %v626
    %v628 = vcombine.high %v627, 0
    %v629 = vcombine.low %v576, %v583
    %v631 = vunpack.c.l.s4 1983009808
    %v632 = vunpack.c.0.s8 %v631
    %v633 = vlaneseq
    %v634 = vshrl.u32 %v633, 7
    %v635 = vsub.s32 %v632, %v634
    %v636 = vrot.slane %v629, %v635
    %v637 = vcombine.low %v600, %v601
    %v639 = vunpack.c.l.s4 1983009808
    %v640 = vunpack.c.0.s8 %v639
    %v641 = vlaneseq
    %v642 = vshrl.u32 %v641, 7
    %v643 = vsub.s32 %v640, %v642
    %v644 = vrot.slane %v637, %v643
    %v645 = vcombine.low %v636, %v644
    %v647 = vunpack.c.l.s4 1934713408
    %v648 = vunpack.c.0.s8 %v647
    %v649 = vlaneseq
    %v650 = vshrl.u32 %v649, 7
    %v651 = vsub.s32 %v648, %v650
    %v652 = vrot.slane %v645, %v651
    %v653 = vcombine.high %v652, 0
    %v654 = vcombine.low %v526, %v533
    %v656 = vunpack.c.l.s4 1983009808
    %v657 = vunpack.c.0.s8 %v656
    %v658 = vlaneseq
    %v659 = vshrl.u32 %v658, 7
    %v660 = vsub.s32 %v657, %v659
    %v661 = vrot.slane %v654, %v660
    %v662 = vcombine.low %v536, %v537
    %v664 = vunpack.c.l.s4 1983009808
    %v665 = vunpack.c.0.s8 %v664
    %v666 = vlaneseq
    %v667 = vshrl.u32 %v666, 7
    %v668 = vsub.s32 %v665, %v667
    %v669 = vrot.slane %v662, %v668
    %v670 = vcombine.low %v661, %v669
    %v672 = vunpack.c.l.s4 1934713408
    %v673 = vunpack.c.0.s8 %v672
    %v674 = vlaneseq
    %v675 = vshrl.u32 %v674, 7
    %v676 = vsub.s32 %v673, %v675
    %v677 = vrot.slane %v670, %v676
    %v678 = vcombine.high %v677, 0
    %v679 = vcombine.low %v592, %v599
    %v681 = vunpack.c.l.s4 1983009808
    %v682 = vunpack.c.0.s8 %v681
    %v683 = vlaneseq
    %v684 = vshrl.u32 %v683, 7
    %v685 = vsub.s32 %v682, %v684
    %v686 = vrot.slane %v679, %v685
    %v687 = vcombine.low %v602, %v603
    %v689 = vunpack.c.l.s4 1983009808
    %v690 = vunpack.c.0.s8 %v689
    %v691 = vlaneseq
    %v692 = vshrl.u32 %v691, 7
    %v693 = vsub.s32 %v690, %v692
    %v694 = vrot.slane %v687, %v693
    %v695 = vcombine.low %v686, %v694
    %v697 = vunpack.c.l.s4 1934713408
    %v698 = vunpack.c.0.s8 %v697
    %v699 = vlaneseq
    %v700 = vshrl.u32 %v699, 7
    %v701 = vsub.s32 %v698, %v700
    %v702 = vrot.slane %v695, %v701
    %v703 = vcombine.high %v702, 0
    %v706 = vpack.i.b16 %v652, %v627
    %v707 = vshrl.u32 %v627, 16
    %v708 = vshrl.u32 %v652, 16
    %v709 = vpack.i.b16 %v708, %v707
    %v712 = vpack.i.b16 %v653, %v628
    %v713 = vshrl.u32 %v628, 16
    %v714 = vshrl.u32 %v653, 16
    %v715 = vpack.i.b16 %v714, %v713
    %v718 = vpack.i.b16 %v702, %v677
    %v719 = vshrl.u32 %v677, 16
    %v720 = vshrl.u32 %v702, 16
    %v721 = vpack.i.b16 %v720, %v719
    %v724 = vpack.i.b16 %v703, %v678
    %v725 = vshrl.u32 %v678, 16
    %v726 = vshrl.u32 %v703, 16
    %v727 = vpack.i.b16 %v726, %v725
    %728 = vrot.lane.b32.xlu0 %v162, 64
    %v729 = vpop.permute.xlu0 %728
    %730 = vrot.lane.b32.xlu0 %v165, 64
    %v731 = vpop.permute.xlu0 %730
    %732 = vrot.lane.b32.xlu0 %v167, 64
    %v733 = vpop.permute.xlu0 %732
    %734 = vrot.lane.b32.xlu0 %v169, 64
    %v735 = vpop.permute.xlu0 %734
    %v738 = vpack.i.b16 %v731, %v729
    %v740 = vshrl.u32 %v729, 16
    %v741 = vshrl.u32 %v731, 16
    %v742 = vpack.i.b16 %v741, %v740
    %v746 = vpack.i.b16 %v735, %v733
    %v748 = vshrl.u32 %v733, 16
    %v749 = vshrl.u32 %v735, 16
    %v750 = vpack.i.b16 %v749, %v748
    %v752 = vcombine.high %v738, %v187
    %v754 = vunpack.c.l.s4 1983009808
    %v755 = vunpack.c.0.s8 %v754
    %v756 = vlaneseq
    %v757 = vshrl.u32 %v756, 7
    %v758 = vsub.s32 %v755, %v757
    %v759 = vrot.slane %v738, %v758
    %v761 = vunpack.c.l.s4 1983009808
    %v762 = vunpack.c.0.s8 %v761
    %v763 = vlaneseq
    %v764 = vshrl.u32 %v763, 7
    %v765 = vsub.s32 %v762, %v764
    %v766 = vrot.slane %v752, %v765
    %v767 = vcombine.high %v746, %v187
    %v769 = vunpack.c.l.s4 1983009808
    %v770 = vunpack.c.0.s8 %v769
    %v771 = vlaneseq
    %v772 = vshrl.u32 %v771, 7
    %v773 = vsub.s32 %v770, %v772
    %v774 = vrot.slane %v746, %v773
    %v776 = vunpack.c.l.s4 1983009808
    %v777 = vunpack.c.0.s8 %v776
    %v778 = vlaneseq
    %v779 = vshrl.u32 %v778, 7
    %v780 = vsub.s32 %v777, %v779
    %v781 = vrot.slane %v767, %v780
    %v782 = vcombine.low %v759, %v774
    %v783 = vcombine.high %v759, %v774
    %v785 = vunpack.c.l.s4 1934713408
    %v786 = vunpack.c.0.s8 %v785
    %v787 = vlaneseq
    %v788 = vshrl.u32 %v787, 7
    %v789 = vsub.s32 %v786, %v788
    %v790 = vrot.slane %v782, %v789
    %v792 = vunpack.c.l.s4 1934713408
    %v793 = vunpack.c.0.s8 %v792
    %v794 = vlaneseq
    %v795 = vshrl.u32 %v794, 7
    %v796 = vsub.s32 %v793, %v795
    %v797 = vrot.slane %v783, %v796
    %v798 = vcombine.low %v766, %v781
    %v799 = vcombine.high %v766, %v781
    %v801 = vunpack.c.l.s4 1934713408
    %v802 = vunpack.c.0.s8 %v801
    %v803 = vlaneseq
    %v804 = vshrl.u32 %v803, 7
    %v805 = vsub.s32 %v802, %v804
    %v806 = vrot.slane %v798, %v805
    %v808 = vunpack.c.l.s4 1934713408
    %v809 = vunpack.c.0.s8 %v808
    %v810 = vlaneseq
    %v811 = vshrl.u32 %v810, 7
    %v812 = vsub.s32 %v809, %v811
    %v813 = vrot.slane %v799, %v812
    %v814 = vcombine.high %v790, 0
    %v815 = vcombine.high %v797, 0
    %v816 = vcombine.high %v806, 0
    %v817 = vcombine.high %v813, 0
    %v818 = vcombine.high %v742, %v190
    %v820 = vunpack.c.l.s4 1983009808
    %v821 = vunpack.c.0.s8 %v820
    %v822 = vlaneseq
    %v823 = vshrl.u32 %v822, 7
    %v824 = vsub.s32 %v821, %v823
    %v825 = vrot.slane %v742, %v824
    %v827 = vunpack.c.l.s4 1983009808
    %v828 = vunpack.c.0.s8 %v827
    %v829 = vlaneseq
    %v830 = vshrl.u32 %v829, 7
    %v831 = vsub.s32 %v828, %v830
    %v832 = vrot.slane %v818, %v831
    %v833 = vcombine.high %v750, %v190
    %v835 = vunpack.c.l.s4 1983009808
    %v836 = vunpack.c.0.s8 %v835
    %v837 = vlaneseq
    %v838 = vshrl.u32 %v837, 7
    %v839 = vsub.s32 %v836, %v838
    %v840 = vrot.slane %v750, %v839
    %v842 = vunpack.c.l.s4 1983009808
    %v843 = vunpack.c.0.s8 %v842
    %v844 = vlaneseq
    %v845 = vshrl.u32 %v844, 7
    %v846 = vsub.s32 %v843, %v845
    %v847 = vrot.slane %v833, %v846
    %v848 = vcombine.low %v825, %v840
    %v849 = vcombine.high %v825, %v840
    %v851 = vunpack.c.l.s4 1934713408
    %v852 = vunpack.c.0.s8 %v851
    %v853 = vlaneseq
    %v854 = vshrl.u32 %v853, 7
    %v855 = vsub.s32 %v852, %v854
    %v856 = vrot.slane %v848, %v855
    %v858 = vunpack.c.l.s4 1934713408
    %v859 = vunpack.c.0.s8 %v858
    %v860 = vlaneseq
    %v861 = vshrl.u32 %v860, 7
    %v862 = vsub.s32 %v859, %v861
    %v863 = vrot.slane %v849, %v862
    %v864 = vcombine.low %v832, %v847
    %v865 = vcombine.high %v832, %v847
    %v867 = vunpack.c.l.s4 1934713408
    %v868 = vunpack.c.0.s8 %v867
    %v869 = vlaneseq
    %v870 = vshrl.u32 %v869, 7
    %v871 = vsub.s32 %v868, %v870
    %v872 = vrot.slane %v864, %v871
    %v874 = vunpack.c.l.s4 1934713408
    %v875 = vunpack.c.0.s8 %v874
    %v876 = vlaneseq
    %v877 = vshrl.u32 %v876, 7
    %v878 = vsub.s32 %v875, %v877
    %v879 = vrot.slane %v865, %v878
    %v880 = vcombine.high %v856, 0
    %v881 = vcombine.high %v863, 0
    %v882 = vcombine.high %v872, 0
    %v883 = vcombine.high %v879, 0
    %v884 = vcombine.low %v790, %v797
    %v886 = vunpack.c.l.s4 1983009808
    %v887 = vunpack.c.0.s8 %v886
    %v888 = vlaneseq
    %v889 = vshrl.u32 %v888, 7
    %v890 = vsub.s32 %v887, %v889
    %v891 = vrot.slane %v884, %v890
    %v892 = vcombine.low %v814, %v815
    %v894 = vunpack.c.l.s4 1983009808
    %v895 = vunpack.c.0.s8 %v894
    %v896 = vlaneseq
    %v897 = vshrl.u32 %v896, 7
    %v898 = vsub.s32 %v895, %v897
    %v899 = vrot.slane %v892, %v898
    %v900 = vcombine.low %v891, %v899
    %v902 = vunpack.c.l.s4 1934713408
    %v903 = vunpack.c.0.s8 %v902
    %v904 = vlaneseq
    %v905 = vshrl.u32 %v904, 7
    %v906 = vsub.s32 %v903, %v905
    %v907 = vrot.slane %v900, %v906
    %v908 = vcombine.high %v907, 0
    %v909 = vcombine.low %v856, %v863
    %v911 = vunpack.c.l.s4 1983009808
    %v912 = vunpack.c.0.s8 %v911
    %v913 = vlaneseq
    %v914 = vshrl.u32 %v913, 7
    %v915 = vsub.s32 %v912, %v914
    %v916 = vrot.slane %v909, %v915
    %v917 = vcombine.low %v880, %v881
    %v919 = vunpack.c.l.s4 1983009808
    %v920 = vunpack.c.0.s8 %v919
    %v921 = vlaneseq
    %v922 = vshrl.u32 %v921, 7
    %v923 = vsub.s32 %v920, %v922
    %v924 = vrot.slane %v917, %v923
    %v925 = vcombine.low %v916, %v924
    %v927 = vunpack.c.l.s4 1934713408
    %v928 = vunpack.c.0.s8 %v927
    %v929 = vlaneseq
    %v930 = vshrl.u32 %v929, 7
    %v931 = vsub.s32 %v928, %v930
    %v932 = vrot.slane %v925, %v931
    %v933 = vcombine.high %v932, 0
    %v934 = vcombine.low %v806, %v813
    %v936 = vunpack.c.l.s4 1983009808
    %v937 = vunpack.c.0.s8 %v936
    %v938 = vlaneseq
    %v939 = vshrl.u32 %v938, 7
    %v940 = vsub.s32 %v937, %v939
    %v941 = vrot.slane %v934, %v940
    %v942 = vcombine.low %v816, %v817
    %v944 = vunpack.c.l.s4 1983009808
    %v945 = vunpack.c.0.s8 %v944
    %v946 = vlaneseq
    %v947 = vshrl.u32 %v946, 7
    %v948 = vsub.s32 %v945, %v947
    %v949 = vrot.slane %v942, %v948
    %v950 = vcombine.low %v941, %v949
    %v952 = vunpack.c.l.s4 1934713408
    %v953 = vunpack.c.0.s8 %v952
    %v954 = vlaneseq
    %v955 = vshrl.u32 %v954, 7
    %v956 = vsub.s32 %v953, %v955
    %v957 = vrot.slane %v950, %v956
    %v958 = vcombine.high %v957, 0
    %v959 = vcombine.low %v872, %v879
    %v961 = vunpack.c.l.s4 1983009808
    %v962 = vunpack.c.0.s8 %v961
    %v963 = vlaneseq
    %v964 = vshrl.u32 %v963, 7
    %v965 = vsub.s32 %v962, %v964
    %v966 = vrot.slane %v959, %v965
    %v967 = vcombine.low %v882, %v883
    %v969 = vunpack.c.l.s4 1983009808
    %v970 = vunpack.c.0.s8 %v969
    %v971 = vlaneseq
    %v972 = vshrl.u32 %v971, 7
    %v973 = vsub.s32 %v970, %v972
    %v974 = vrot.slane %v967, %v973
    %v975 = vcombine.low %v966, %v974
    %v977 = vunpack.c.l.s4 1934713408
    %v978 = vunpack.c.0.s8 %v977
    %v979 = vlaneseq
    %v980 = vshrl.u32 %v979, 7
    %v981 = vsub.s32 %v978, %v980
    %v982 = vrot.slane %v975, %v981
    %v983 = vcombine.high %v982, 0
    %v986 = vpack.i.b16 %v932, %v907
    %v987 = vshrl.u32 %v907, 16
    %v988 = vshrl.u32 %v932, 16
    %v989 = vpack.i.b16 %v988, %v987
    %v992 = vpack.i.b16 %v933, %v908
    %v993 = vshrl.u32 %v908, 16
    %v994 = vshrl.u32 %v933, 16
    %v995 = vpack.i.b16 %v994, %v993
    %v998 = vpack.i.b16 %v982, %v957
    %v999 = vshrl.u32 %v957, 16
    %v1000 = vshrl.u32 %v982, 16
    %v1001 = vpack.i.b16 %v1000, %v999
    %v1004 = vpack.i.b16 %v983, %v958
    %v1005 = vshrl.u32 %v958, 16
    %v1006 = vshrl.u32 %v983, 16
    %v1007 = vpack.i.b16 %v1006, %v1005
    %vm1008 = vcmask 64512
    %v1010 = vsel %vm1008, %v426, 0
    %v1013 = vsel %vm1008, %v706, 0
    %1015 = vmatprep.subr.bf16.mxu0 0
    %1016 = vmatpush1.bf16.xpose.msra.mxu0 0
    %1017 = vmatprep.subr.bf16.mxu0 0
    %1018 = vmatpush1.bf16.xpose.msra.mxu0 0
    %1019 = vmatprep.subr.bf16.mxu0 0
    %1020 = vmatpush1.bf16.xpose.msra.mxu0 0
    %1021 = vmatprep.subr.bf16.mxu0 0
    %1022 = vmatpush1.bf16.xpose.msra.mxu0 0
    %1023 = vmatprep.subr.bf16.mxu0 0
    %1024 = vmatpush1.bf16.xpose.msra.mxu0 0
    %1025 = vmatprep.subr.bf16.mxu0 0
    %1026 = vmatpush1.bf16.xpose.msra.mxu0 0
    %1027 = vmatprep.subr.bf16.mxu0 0
    %1028 = vmatpush1.bf16.xpose.msra.mxu0 0
    %1029 = vmatprep.subr.bf16.mxu0 0
    %1030 = vmatpush1.bf16.xpose.msra.mxu0 %v1013
    %1031 = vmatprep.subr.bf16.mxu0 0
    %1032 = vmatpush2.bf16.xpose.msra.mxu0 0
    %1033 = vmatprep.subr.bf16.mxu0 0
    %1034 = vmatpush2.bf16.xpose.msra.mxu0 0
    %1035 = vmatprep.subr.bf16.mxu0 0
    %1036 = vmatpush2.bf16.xpose.msra.mxu0 0
    %1037 = vmatprep.subr.bf16.mxu0 0
    %1038 = vmatpush2.bf16.xpose.msra.mxu0 0
    %1039 = vmatprep.subr.bf16.mxu0 0
    %1040 = vmatpush2.bf16.xpose.msra.mxu0 0
    %1041 = vmatprep.subr.bf16.mxu0 0
    %1042 = vmatpush2.bf16.xpose.msra.mxu0 0
    %1043 = vmatprep.subr.bf16.mxu0 0
    %1044 = vmatpush2.bf16.xpose.msra.mxu0 0
    %1045 = vmatprep.subr.bf16.mxu0 0
    %1046 = vmatpush2.bf16.xpose.msra.mxu0 0
    %1047 = vmatprep.mubr.bf16.mxu0 0
    %1048 = vmatmul.mubr.bf16.gmra.mxu0 %v1010
    %v1049 = vpop.f32.mrf.mxu0
    %v1050 = vadd.f32 0.0, %v1049
    %v1051 = vpop.f32.mrf.mxu0
    %v1052 = vpop.f32.mrf.mxu0
    %v1053 = vpop.f32.mrf.mxu0
    %1054 = vdwg.mxu0
    %v1056 = vsel %vm1008, %v429, 0
    %v1059 = vsel %vm1008, %v709, 0
    %1061 = vmatprep.subr.bf16.mxu0 0
    %1062 = vmatpush1.bf16.xpose.msra.mxu0 0
    %1063 = vmatprep.subr.bf16.mxu0 0
    %1064 = vmatpush1.bf16.xpose.msra.mxu0 0
    %1065 = vmatprep.subr.bf16.mxu0 0
    %1066 = vmatpush1.bf16.xpose.msra.mxu0 0
    %1067 = vmatprep.subr.bf16.mxu0 0
    %1068 = vmatpush1.bf16.xpose.msra.mxu0 0
    %1069 = vmatprep.subr.bf16.mxu0 0
    %1070 = vmatpush1.bf16.xpose.msra.mxu0 0
    %1071 = vmatprep.subr.bf16.mxu0 0
    %1072 = vmatpush1.bf16.xpose.msra.mxu0 0
    %1073 = vmatprep.subr.bf16.mxu0 0
    %1074 = vmatpush1.bf16.xpose.msra.mxu0 0
    %1075 = vmatprep.subr.bf16.mxu0 0
    %1076 = vmatpush1.bf16.xpose.msra.mxu0 %v1059
    %1077 = vmatprep.subr.bf16.mxu0 0
    %1078 = vmatpush2.bf16.xpose.msra.mxu0 0
    %1079 = vmatprep.subr.bf16.mxu0 0
    %1080 = vmatpush2.bf16.xpose.msra.mxu0 0
    %1081 = vmatprep.subr.bf16.mxu0 0
    %1082 = vmatpush2.bf16.xpose.msra.mxu0 0
    %1083 = vmatprep.subr.bf16.mxu0 0
    %1084 = vmatpush2.bf16.xpose.msra.mxu0 0
    %1085 = vmatprep.subr.bf16.mxu0 0
    %1086 = vmatpush2.bf16.xpose.msra.mxu0 0
    %1087 = vmatprep.subr.bf16.mxu0 0
    %1088 = vmatpush2.bf16.xpose.msra.mxu0 0
    %1089 = vmatprep.subr.bf16.mxu0 0
    %1090 = vmatpush2.bf16.xpose.msra.mxu0 0
    %1091 = vmatprep.subr.bf16.mxu0 0
    %1092 = vmatpush2.bf16.xpose.msra.mxu0 0
    %1093 = vmatprep.mubr.bf16.mxu0 0
    %1094 = vmatmul.mubr.bf16.gmra.mxu0 %v1056
    %v1095 = vpop.f32.mrf.mxu0
    %v1096 = vadd.f32 0.0, %v1095
    %v1097 = vpop.f32.mrf.mxu0
    %v1098 = vpop.f32.mrf.mxu0
    %v1099 = vpop.f32.mrf.mxu0
    %1100 = vdwg.mxu0
    %v1102 = vsel %vm1008, %v432, 0
    %v1105 = vsel %vm1008, %v712, 0
    %1107 = vmatprep.subr.bf16.mxu0 0
    %1108 = vmatpush1.bf16.xpose.msra.mxu0 0
    %1109 = vmatprep.subr.bf16.mxu0 0
    %1110 = vmatpush1.bf16.xpose.msra.mxu0 0
    %1111 = vmatprep.subr.bf16.mxu0 0
    %1112 = vmatpush1.bf16.xpose.msra.mxu0 0
    %1113 = vmatprep.subr.bf16.mxu0 0
    %1114 = vmatpush1.bf16.xpose.msra.mxu0 0
    %1115 = vmatprep.subr.bf16.mxu0 0
    %1116 = vmatpush1.bf16.xpose.msra.mxu0 0
    %1117 = vmatprep.subr.bf16.mxu0 0
    %1118 = vmatpush1.bf16.xpose.msra.mxu0 0
    %1119 = vmatprep.subr.bf16.mxu0 0
    %1120 = vmatpush1.bf16.xpose.msra.mxu0 0
    %1121 = vmatprep.subr.bf16.mxu0 0
    %1122 = vmatpush1.bf16.xpose.msra.mxu0 %v1105
    %1123 = vmatprep.subr.bf16.mxu0 0
    %1124 = vmatpush2.bf16.xpose.msra.mxu0 0
    %1125 = vmatprep.subr.bf16.mxu0 0
    %1126 = vmatpush2.bf16.xpose.msra.mxu0 0
    %1127 = vmatprep.subr.bf16.mxu0 0
    %1128 = vmatpush2.bf16.xpose.msra.mxu0 0
    %1129 = vmatprep.subr.bf16.mxu0 0
    %1130 = vmatpush2.bf16.xpose.msra.mxu0 0
    %1131 = vmatprep.subr.bf16.mxu0 0
    %1132 = vmatpush2.bf16.xpose.msra.mxu0 0
    %1133 = vmatprep.subr.bf16.mxu0 0
    %1134 = vmatpush2.bf16.xpose.msra.mxu0 0
    %1135 = vmatprep.subr.bf16.mxu0 0
    %1136 = vmatpush2.bf16.xpose.msra.mxu0 0
    %1137 = vmatprep.subr.bf16.mxu0 0
    %1138 = vmatpush2.bf16.xpose.msra.mxu0 0
    %1139 = vmatprep.mubr.bf16.mxu0 0
    %1140 = vmatmul.mubr.bf16.gmra.mxu0 %v1102
    %v1141 = vpop.f32.mrf.mxu0
    %v1142 = vadd.f32 0.0, %v1141
    %v1143 = vpop.f32.mrf.mxu0
    %v1144 = vpop.f32.mrf.mxu0
    %v1145 = vpop.f32.mrf.mxu0
    %1146 = vdwg.mxu0
    %v1148 = vsel %vm1008, %v435, 0
    %v1151 = vsel %vm1008, %v715, 0
    %1153 = vmatprep.subr.bf16.mxu0 0
    %1154 = vmatpush1.bf16.xpose.msra.mxu0 0
    %1155 = vmatprep.subr.bf16.mxu0 0
    %1156 = vmatpush1.bf16.xpose.msra.mxu0 0
    %1157 = vmatprep.subr.bf16.mxu0 0
    %1158 = vmatpush1.bf16.xpose.msra.mxu0 0
    %1159 = vmatprep.subr.bf16.mxu0 0
    %1160 = vmatpush1.bf16.xpose.msra.mxu0 0
    %1161 = vmatprep.subr.bf16.mxu0 0
    %1162 = vmatpush1.bf16.xpose.msra.mxu0 0
    %1163 = vmatprep.subr.bf16.mxu0 0
    %1164 = vmatpush1.bf16.xpose.msra.mxu0 0
    %1165 = vmatprep.subr.bf16.mxu0 0
    %1166 = vmatpush1.bf16.xpose.msra.mxu0 0
    %1167 = vmatprep.subr.bf16.mxu0 0
    %1168 = vmatpush1.bf16.xpose.msra.mxu0 %v1151
    %1169 = vmatprep.subr.bf16.mxu0 0
    %1170 = vmatpush2.bf16.xpose.msra.mxu0 0
    %1171 = vmatprep.subr.bf16.mxu0 0
    %1172 = vmatpush2.bf16.xpose.msra.mxu0 0
    %1173 = vmatprep.subr.bf16.mxu0 0
    %1174 = vmatpush2.bf16.xpose.msra.mxu0 0
    %1175 = vmatprep.subr.bf16.mxu0 0
    %1176 = vmatpush2.bf16.xpose.msra.mxu0 0
    %1177 = vmatprep.subr.bf16.mxu0 0
    %1178 = vmatpush2.bf16.xpose.msra.mxu0 0
    %1179 = vmatprep.subr.bf16.mxu0 0
    %1180 = vmatpush2.bf16.xpose.msra.mxu0 0
    %1181 = vmatprep.subr.bf16.mxu0 0
    %1182 = vmatpush2.bf16.xpose.msra.mxu0 0
    %1183 = vmatprep.subr.bf16.mxu0 0
    %1184 = vmatpush2.bf16.xpose.msra.mxu0 0
    %1185 = vmatprep.mubr.bf16.mxu0 0
    %1186 = vmatmul.mubr.bf16.gmra.mxu0 %v1148
    %v1187 = vpop.f32.mrf.mxu0
    %v1188 = vadd.f32 0.0, %v1187
    %v1189 = vpop.f32.mrf.mxu0
    %v1190 = vpop.f32.mrf.mxu0
    %v1191 = vpop.f32.mrf.mxu0
    %1192 = vdwg.mxu0
    %v1194 = vsel %vm1008, %v438, 0
    %v1197 = vsel %vm1008, %v718, 0
    %1199 = vmatprep.subr.bf16.mxu0 0
    %1200 = vmatpush1.bf16.xpose.msra.mxu0 0
    %1201 = vmatprep.subr.bf16.mxu0 0
    %1202 = vmatpush1.bf16.xpose.msra.mxu0 0
    %1203 = vmatprep.subr.bf16.mxu0 0
    %1204 = vmatpush1.bf16.xpose.msra.mxu0 0
    %1205 = vmatprep.subr.bf16.mxu0 0
    %1206 = vmatpush1.bf16.xpose.msra.mxu0 0
    %1207 = vmatprep.subr.bf16.mxu0 0
    %1208 = vmatpush1.bf16.xpose.msra.mxu0 0
    %1209 = vmatprep.subr.bf16.mxu0 0
    %1210 = vmatpush1.bf16.xpose.msra.mxu0 0
    %1211 = vmatprep.subr.bf16.mxu0 0
    %1212 = vmatpush1.bf16.xpose.msra.mxu0 0
    %1213 = vmatprep.subr.bf16.mxu0 0
    %1214 = vmatpush1.bf16.xpose.msra.mxu0 %v1197
    %1215 = vmatprep.subr.bf16.mxu0 0
    %1216 = vmatpush2.bf16.xpose.msra.mxu0 0
    %1217 = vmatprep.subr.bf16.mxu0 0
    %1218 = vmatpush2.bf16.xpose.msra.mxu0 0
    %1219 = vmatprep.subr.bf16.mxu0 0
    %1220 = vmatpush2.bf16.xpose.msra.mxu0 0
    %1221 = vmatprep.subr.bf16.mxu0 0
    %1222 = vmatpush2.bf16.xpose.msra.mxu0 0
    %1223 = vmatprep.subr.bf16.mxu0 0
    %1224 = vmatpush2.bf16.xpose.msra.mxu0 0
    %1225 = vmatprep.subr.bf16.mxu0 0
    %1226 = vmatpush2.bf16.xpose.msra.mxu0 0
    %1227 = vmatprep.subr.bf16.mxu0 0
    %1228 = vmatpush2.bf16.xpose.msra.mxu0 0
    %1229 = vmatprep.subr.bf16.mxu0 0
    %1230 = vmatpush2.bf16.xpose.msra.mxu0 0
    %1231 = vmatprep.mubr.bf16.mxu0 0
    %1232 = vmatmul.mubr.bf16.gmra.mxu0 %v1194
    %v1233 = vpop.f32.mrf.mxu0
    %v1234 = vadd.f32 0.0, %v1233
    %v1235 = vpop.f32.mrf.mxu0
    %v1236 = vpop.f32.mrf.mxu0
    %v1237 = vpop.f32.mrf.mxu0
    %1238 = vdwg.mxu0
    %v1240 = vsel %vm1008, %v441, 0
    %v1243 = vsel %vm1008, %v721, 0
    %1245 = vmatprep.subr.bf16.mxu0 0
    %1246 = vmatpush1.bf16.xpose.msra.mxu0 0
    %1247 = vmatprep.subr.bf16.mxu0 0
    %1248 = vmatpush1.bf16.xpose.msra.mxu0 0
    %1249 = vmatprep.subr.bf16.mxu0 0
    %1250 = vmatpush1.bf16.xpose.msra.mxu0 0
    %1251 = vmatprep.subr.bf16.mxu0 0
    %1252 = vmatpush1.bf16.xpose.msra.mxu0 0
    %1253 = vmatprep.subr.bf16.mxu0 0
    %1254 = vmatpush1.bf16.xpose.msra.mxu0 0
    %1255 = vmatprep.subr.bf16.mxu0 0
    %1256 = vmatpush1.bf16.xpose.msra.mxu0 0
    %1257 = vmatprep.subr.bf16.mxu0 0
    %1258 = vmatpush1.bf16.xpose.msra.mxu0 0
    %1259 = vmatprep.subr.bf16.mxu0 0
    %1260 = vmatpush1.bf16.xpose.msra.mxu0 %v1243
    %1261 = vmatprep.subr.bf16.mxu0 0
    %1262 = vmatpush2.bf16.xpose.msra.mxu0 0
    %1263 = vmatprep.subr.bf16.mxu0 0
    %1264 = vmatpush2.bf16.xpose.msra.mxu0 0
    %1265 = vmatprep.subr.bf16.mxu0 0
    %1266 = vmatpush2.bf16.xpose.msra.mxu0 0
    %1267 = vmatprep.subr.bf16.mxu0 0
    %1268 = vmatpush2.bf16.xpose.msra.mxu0 0
    %1269 = vmatprep.subr.bf16.mxu0 0
    %1270 = vmatpush2.bf16.xpose.msra.mxu0 0
    %1271 = vmatprep.subr.bf16.mxu0 0
    %1272 = vmatpush2.bf16.xpose.msra.mxu0 0
    %1273 = vmatprep.subr.bf16.mxu0 0
    %1274 = vmatpush2.bf16.xpose.msra.mxu0 0
    %1275 = vmatprep.subr.bf16.mxu0 0
    %1276 = vmatpush2.bf16.xpose.msra.mxu0 0
    %1277 = vmatprep.mubr.bf16.mxu0 0
    %1278 = vmatmul.mubr.bf16.gmra.mxu0 %v1240
    %v1279 = vpop.f32.mrf.mxu0
    %v1280 = vadd.f32 0.0, %v1279
    %v1281 = vpop.f32.mrf.mxu0
    %v1282 = vpop.f32.mrf.mxu0
    %v1283 = vpop.f32.mrf.mxu0
    %1284 = vdwg.mxu0
    %v1286 = vsel %vm1008, %v444, 0
    %v1289 = vsel %vm1008, %v724, 0
    %1291 = vmatprep.subr.bf16.mxu0 0
    %1292 = vmatpush1.bf16.xpose.msra.mxu0 0
    %1293 = vmatprep.subr.bf16.mxu0 0
    %1294 = vmatpush1.bf16.xpose.msra.mxu0 0
    %1295 = vmatprep.subr.bf16.mxu0 0
    %1296 = vmatpush1.bf16.xpose.msra.mxu0 0
    %1297 = vmatprep.subr.bf16.mxu0 0
    %1298 = vmatpush1.bf16.xpose.msra.mxu0 0
    %1299 = vmatprep.subr.bf16.mxu0 0
    %1300 = vmatpush1.bf16.xpose.msra.mxu0 0
    %1301 = vmatprep.subr.bf16.mxu0 0
    %1302 = vmatpush1.bf16.xpose.msra.mxu0 0
    %1303 = vmatprep.subr.bf16.mxu0 0
    %1304 = vmatpush1.bf16.xpose.msra.mxu0 0
    %1305 = vmatprep.subr.bf16.mxu0 0
    %1306 = vmatpush1.bf16.xpose.msra.mxu0 %v1289
    %1307 = vmatprep.subr.bf16.mxu0 0
    %1308 = vmatpush2.bf16.xpose.msra.mxu0 0
    %1309 = vmatprep.subr.bf16.mxu0 0
    %1310 = vmatpush2.bf16.xpose.msra.mxu0 0
    %1311 = vmatprep.subr.bf16.mxu0 0
    %1312 = vmatpush2.bf16.xpose.msra.mxu0 0
    %1313 = vmatprep.subr.bf16.mxu0 0
    %1314 = vmatpush2.bf16.xpose.msra.mxu0 0
    %1315 = vmatprep.subr.bf16.mxu0 0
    %1316 = vmatpush2.bf16.xpose.msra.mxu0 0
    %1317 = vmatprep.subr.bf16.mxu0 0
    %1318 = vmatpush2.bf16.xpose.msra.mxu0 0
    %1319 = vmatprep.subr.bf16.mxu0 0
    %1320 = vmatpush2.bf16.xpose.msra.mxu0 0
    %1321 = vmatprep.subr.bf16.mxu0 0
    %1322 = vmatpush2.bf16.xpose.msra.mxu0 0
    %1323 = vmatprep.mubr.bf16.mxu0 0
    %1324 = vmatmul.mubr.bf16.gmra.mxu0 %v1286
    %v1325 = vpop.f32.mrf.mxu0
    %v1326 = vadd.f32 0.0, %v1325
    %v1327 = vpop.f32.mrf.mxu0
    %v1328 = vpop.f32.mrf.mxu0
    %v1329 = vpop.f32.mrf.mxu0
    %1330 = vdwg.mxu0
    %v1332 = vsel %vm1008, %v447, 0
    %v1335 = vsel %vm1008, %v727, 0
    %1337 = vmatprep.subr.bf16.mxu0 0
    %1338 = vmatpush1.bf16.xpose.msra.mxu0 0
    %1339 = vmatprep.subr.bf16.mxu0 0
    %1340 = vmatpush1.bf16.xpose.msra.mxu0 0
    %1341 = vmatprep.subr.bf16.mxu0 0
    %1342 = vmatpush1.bf16.xpose.msra.mxu0 0
    %1343 = vmatprep.subr.bf16.mxu0 0
    %1344 = vmatpush1.bf16.xpose.msra.mxu0 0
    %1345 = vmatprep.subr.bf16.mxu0 0
    %1346 = vmatpush1.bf16.xpose.msra.mxu0 0
    %1347 = vmatprep.subr.bf16.mxu0 0
    %1348 = vmatpush1.bf16.xpose.msra.mxu0 0
    %1349 = vmatprep.subr.bf16.mxu0 0
    %1350 = vmatpush1.bf16.xpose.msra.mxu0 0
    %1351 = vmatprep.subr.bf16.mxu0 0
    %1352 = vmatpush1.bf16.xpose.msra.mxu0 %v1335
    %1353 = vmatprep.subr.bf16.mxu0 0
    %1354 = vmatpush2.bf16.xpose.msra.mxu0 0
    %1355 = vmatprep.subr.bf16.mxu0 0
    %1356 = vmatpush2.bf16.xpose.msra.mxu0 0
    %1357 = vmatprep.subr.bf16.mxu0 0
    %1358 = vmatpush2.bf16.xpose.msra.mxu0 0
    %1359 = vmatprep.subr.bf16.mxu0 0
    %1360 = vmatpush2.bf16.xpose.msra.mxu0 0
    %1361 = vmatprep.subr.bf16.mxu0 0
    %1362 = vmatpush2.bf16.xpose.msra.mxu0 0
    %1363 = vmatprep.subr.bf16.mxu0 0
    %1364 = vmatpush2.bf16.xpose.msra.mxu0 0
    %1365 = vmatprep.subr.bf16.mxu0 0
    %1366 = vmatpush2.bf16.xpose.msra.mxu0 0
    %1367 = vmatprep.subr.bf16.mxu0 0
    %1368 = vmatpush2.bf16.xpose.msra.mxu0 0
    %1369 = vmatprep.mubr.bf16.mxu0 0
    %1370 = vmatmul.mubr.bf16.gmra.mxu0 %v1332
    %v1371 = vpop.f32.mrf.mxu0
    %v1372 = vadd.f32 0.0, %v1371
    %v1373 = vpop.f32.mrf.mxu0
    %v1374 = vpop.f32.mrf.mxu0
    %v1375 = vpop.f32.mrf.mxu0
    %1376 = vdwg.mxu0
    %v1377 = vlaneseq
    %v1378 = vshrl.u32 %v1377, 7
    %v1379 = vlaneseq
    %v1380 = vand.u32 %v1379, 127
    %vm1381 = vcmp.ge.s32.totalorder %v1378, %v1380
    %v1382 = vsel %vm1381, 1, 0
    %vm1383 = vcmp.eq.s32.totalorder %v1382, 1
    %v1384 = vsel %vm1383, %v1050, -1e+30
    %v1385 = vsel %vm1383, %v1096, -1e+30
    %v1386 = vsel %vm1383, %v1142, -1e+30
    %v1387 = vsel %vm1383, %v1188, -1e+30
    %v1388 = vsel %vm1383, %v1234, -1e+30
    %v1389 = vsel %vm1383, %v1280, -1e+30
    %v1390 = vsel %vm1383, %v1326, -1e+30
    %v1391 = vsel %vm1383, %v1372, -1e+30
    %v1392 = vsel %vm1008, %v1384, -inf
    %1393 = vmax.xlane.f32.xlu0 %v1392
    %v1394 = vpop.xlane.xlu0 %1393
    %v1395 = vsel %vm1008, %v1385, -inf
    %1396 = vmax.xlane.f32.xlu0 %v1395
    %v1397 = vpop.xlane.xlu0 %1396
    %v1398 = vsel %vm1008, %v1386, -inf
    %1399 = vmax.xlane.f32.xlu0 %v1398
    %v1400 = vpop.xlane.xlu0 %1399
    %v1401 = vsel %vm1008, %v1387, -inf
    %1402 = vmax.xlane.f32.xlu0 %v1401
    %v1403 = vpop.xlane.xlu0 %1402
    %v1404 = vsel %vm1008, %v1388, -inf
    %1405 = vmax.xlane.f32.xlu0 %v1404
    %v1406 = vpop.xlane.xlu0 %1405
    %v1407 = vsel %vm1008, %v1389, -inf
    %1408 = vmax.xlane.f32.xlu0 %v1407
    %v1409 = vpop.xlane.xlu0 %1408
    %v1410 = vsel %vm1008, %v1390, -inf
    %1411 = vmax.xlane.f32.xlu0 %v1410
    %v1412 = vpop.xlane.xlu0 %1411
    %v1413 = vsel %vm1008, %v1391, -inf
    %1414 = vmax.xlane.f32.xlu0 %v1413
    %v1415 = vpop.xlane.xlu0 %1414
    %v1416 = vsub.f32 %v1384, %v1394
    %v1417 = vsub.f32 %v1385, %v1397
    %v1418 = vsub.f32 %v1386, %v1400
    %v1419 = vsub.f32 %v1387, %v1403
    %v1420 = vsub.f32 %v1388, %v1406
    %v1421 = vsub.f32 %v1389, %v1409
    %v1422 = vsub.f32 %v1390, %v1412
    %v1423 = vsub.f32 %v1391, %v1415
    %v1424 = vmul.f32 %v1416, 1.442695
    %v1425 = vpow.pop %v1424
    %v1426 = vmul.f32 %v1417, 1.442695
    %v1427 = vpow.pop %v1426
    %v1428 = vmul.f32 %v1418, 1.442695
    %v1429 = vpow.pop %v1428
    %v1430 = vmul.f32 %v1419, 1.442695
    %v1431 = vpow.pop %v1430
    %v1432 = vmul.f32 %v1420, 1.442695
    %v1433 = vpow.pop %v1432
    %v1434 = vmul.f32 %v1421, 1.442695
    %v1435 = vpow.pop %v1434
    %v1436 = vmul.f32 %v1422, 1.442695
    %v1437 = vpow.pop %v1436
    %v1438 = vmul.f32 %v1423, 1.442695
    %v1439 = vpow.pop %v1438
    %v1440 = vsel %vm1008, %v1425, 0.0
    %1441 = vadd.xlane.f32.xlu0 %v1440
    %v1442 = vpop.xlane.xlu0 %1441
    %v1443 = vsel %vm1008, %v1427, 0.0
    %1444 = vadd.xlane.f32.xlu0 %v1443
    %v1445 = vpop.xlane.xlu0 %1444
    %v1446 = vsel %vm1008, %v1429, 0.0
    %1447 = vadd.xlane.f32.xlu0 %v1446
    %v1448 = vpop.xlane.xlu0 %1447
    %v1449 = vsel %vm1008, %v1431, 0.0
    %1450 = vadd.xlane.f32.xlu0 %v1449
    %v1451 = vpop.xlane.xlu0 %1450
    %v1452 = vsel %vm1008, %v1433, 0.0
    %1453 = vadd.xlane.f32.xlu0 %v1452
    %v1454 = vpop.xlane.xlu0 %1453
    %v1455 = vsel %vm1008, %v1435, 0.0
    %1456 = vadd.xlane.f32.xlu0 %v1455
    %v1457 = vpop.xlane.xlu0 %1456
    %v1458 = vsel %vm1008, %v1437, 0.0
    %1459 = vadd.xlane.f32.xlu0 %v1458
    %v1460 = vpop.xlane.xlu0 %1459
    %v1461 = vsel %vm1008, %v1439, 0.0
    %1462 = vadd.xlane.f32.xlu0 %v1461
    %v1463 = vpop.xlane.xlu0 %1462
    %v1464 = vrcp.pop %v1442
    %v1465 = vrcp.pop %v1445
    %v1466 = vrcp.pop %v1448
    %v1467 = vrcp.pop %v1451
    %v1468 = vrcp.pop %v1454
    %v1469 = vrcp.pop %v1457
    %v1470 = vrcp.pop %v1460
    %v1471 = vrcp.pop %v1463
    %v1472 = vmul.f32 %v1425, %v1464
    %v1473 = vmul.f32 %v1427, %v1465
    %v1474 = vmul.f32 %v1429, %v1466
    %v1475 = vmul.f32 %v1431, %v1467
    %v1476 = vmul.f32 %v1433, %v1468
    %v1477 = vmul.f32 %v1435, %v1469
    %v1478 = vmul.f32 %v1437, %v1470
    %v1479 = vmul.f32 %v1439, %v1471
    %v1480 = vpack.c.bf16 %v1472, %v1472
    %v1481 = vpack.c.bf16 %v1473, %v1473
    %v1482 = vpack.c.bf16 %v1474, %v1474
    %v1483 = vpack.c.bf16 %v1475, %v1475
    %v1484 = vpack.c.bf16 %v1476, %v1476
    %v1485 = vpack.c.bf16 %v1477, %v1477
    %v1486 = vpack.c.bf16 %v1478, %v1478
    %v1487 = vpack.c.bf16 %v1479, %v1479
    %v1489 = vsel %vm1008, %v1480, 0
    %vm1491 = vcmask 1043456
    %v1493 = vsel %vm1491, %v986, 0
    %1495 = vmatprep.subr.bf16.mxu0 0
    %1496 = vmatpush1.bf16.msra.mxu0 0
    %1497 = vmatprep.subr.bf16.mxu0 0
    %1498 = vmatpush1.bf16.msra.mxu0 0
    %1499 = vmatprep.subr.bf16.mxu0 0
    %1500 = vmatpush1.bf16.msra.mxu0 0
    %1501 = vmatprep.subr.bf16.mxu0 0
    %1502 = vmatpush1.bf16.msra.mxu0 0
    %1503 = vmatprep.subr.bf16.mxu0 0
    %1504 = vmatpush1.bf16.msra.mxu0 0
    %1505 = vmatprep.subr.bf16.mxu0 0
    %1506 = vmatpush1.bf16.msra.mxu0 0
    %1507 = vmatprep.subr.bf16.mxu0 0
    %1508 = vmatpush1.bf16.msra.mxu0 0
    %1509 = vmatprep.subr.bf16.mxu0 0
    %1510 = vmatpush1.bf16.msra.mxu0 %v1493
    %1511 = vmatprep.subr.bf16.mxu0 0
    %1512 = vmatpush2.bf16.msra.mxu0 0
    %1513 = vmatprep.subr.bf16.mxu0 0
    %1514 = vmatpush2.bf16.msra.mxu0 0
    %1515 = vmatprep.subr.bf16.mxu0 0
    %1516 = vmatpush2.bf16.msra.mxu0 0
    %1517 = vmatprep.subr.bf16.mxu0 0
    %1518 = vmatpush2.bf16.msra.mxu0 0
    %1519 = vmatprep.subr.bf16.mxu0 0
    %1520 = vmatpush2.bf16.msra.mxu0 0
    %1521 = vmatprep.subr.bf16.mxu0 0
    %1522 = vmatpush2.bf16.msra.mxu0 0
    %1523 = vmatprep.subr.bf16.mxu0 0
    %1524 = vmatpush2.bf16.msra.mxu0 0
    %1525 = vmatprep.subr.bf16.mxu0 0
    %1526 = vmatpush2.bf16.msra.mxu0 0
    %1527 = vmatprep.mubr.bf16.mxu0 0
    %1528 = vmatmul.mubr.bf16.gmra.mxu0 %v1489
    %v1529 = vpop.f32.mrf.mxu0
    %v1530 = vadd.f32 0.0, %v1529
    %v1531 = vpop.f32.mrf.mxu0
    %v1532 = vpop.f32.mrf.mxu0
    %v1533 = vpop.f32.mrf.mxu0
    %1534 = vdwg.mxu0
    %v1536 = vsel %vm1008, %v1481, 0
    %v1539 = vsel %vm1491, %v989, 0
    %1541 = vmatprep.subr.bf16.mxu0 0
    %1542 = vmatpush1.bf16.msra.mxu0 0
    %1543 = vmatprep.subr.bf16.mxu0 0
    %1544 = vmatpush1.bf16.msra.mxu0 0
    %1545 = vmatprep.subr.bf16.mxu0 0
    %1546 = vmatpush1.bf16.msra.mxu0 0
    %1547 = vmatprep.subr.bf16.mxu0 0
    %1548 = vmatpush1.bf16.msra.mxu0 0
    %1549 = vmatprep.subr.bf16.mxu0 0
    %1550 = vmatpush1.bf16.msra.mxu0 0
    %1551 = vmatprep.subr.bf16.mxu0 0
    %1552 = vmatpush1.bf16.msra.mxu0 0
    %1553 = vmatprep.subr.bf16.mxu0 0
    %1554 = vmatpush1.bf16.msra.mxu0 0
    %1555 = vmatprep.subr.bf16.mxu0 0
    %1556 = vmatpush1.bf16.msra.mxu0 %v1539
    %1557 = vmatprep.subr.bf16.mxu0 0
    %1558 = vmatpush2.bf16.msra.mxu0 0
    %1559 = vmatprep.subr.bf16.mxu0 0
    %1560 = vmatpush2.bf16.msra.mxu0 0
    %1561 = vmatprep.subr.bf16.mxu0 0
    %1562 = vmatpush2.bf16.msra.mxu0 0
    %1563 = vmatprep.subr.bf16.mxu0 0
    %1564 = vmatpush2.bf16.msra.mxu0 0
    %1565 = vmatprep.subr.bf16.mxu0 0
    %1566 = vmatpush2.bf16.msra.mxu0 0
    %1567 = vmatprep.subr.bf16.mxu0 0
    %1568 = vmatpush2.bf16.msra.mxu0 0
    %1569 = vmatprep.subr.bf16.mxu0 0
    %1570 = vmatpush2.bf16.msra.mxu0 0
    %1571 = vmatprep.subr.bf16.mxu0 0
    %1572 = vmatpush2.bf16.msra.mxu0 0
    %1573 = vmatprep.mubr.bf16.mxu0 0
    %1574 = vmatmul.mubr.bf16.gmra.mxu0 %v1536
    %v1575 = vpop.f32.mrf.mxu0
    %v1576 = vadd.f32 0.0, %v1575
    %v1577 = vpop.f32.mrf.mxu0
    %v1578 = vpop.f32.mrf.mxu0
    %v1579 = vpop.f32.mrf.mxu0
    %1580 = vdwg.mxu0
    %v1582 = vsel %vm1008, %v1482, 0
    %v1585 = vsel %vm1491, %v992, 0
    %1587 = vmatprep.subr.bf16.mxu0 0
    %1588 = vmatpush1.bf16.msra.mxu0 0
    %1589 = vmatprep.subr.bf16.mxu0 0
    %1590 = vmatpush1.bf16.msra.mxu0 0
    %1591 = vmatprep.subr.bf16.mxu0 0
    %1592 = vmatpush1.bf16.msra.mxu0 0
    %1593 = vmatprep.subr.bf16.mxu0 0
    %1594 = vmatpush1.bf16.msra.mxu0 0
    %1595 = vmatprep.subr.bf16.mxu0 0
    %1596 = vmatpush1.bf16.msra.mxu0 0
    %1597 = vmatprep.subr.bf16.mxu0 0
    %1598 = vmatpush1.bf16.msra.mxu0 0
    %1599 = vmatprep.subr.bf16.mxu0 0
    %1600 = vmatpush1.bf16.msra.mxu0 0
    %1601 = vmatprep.subr.bf16.mxu0 0
    %1602 = vmatpush1.bf16.msra.mxu0 %v1585
    %1603 = vmatprep.subr.bf16.mxu0 0
    %1604 = vmatpush2.bf16.msra.mxu0 0
    %1605 = vmatprep.subr.bf16.mxu0 0
    %1606 = vmatpush2.bf16.msra.mxu0 0
    %1607 = vmatprep.subr.bf16.mxu0 0
    %1608 = vmatpush2.bf16.msra.mxu0 0
    %1609 = vmatprep.subr.bf16.mxu0 0
    %1610 = vmatpush2.bf16.msra.mxu0 0
    %1611 = vmatprep.subr.bf16.mxu0 0
    %1612 = vmatpush2.bf16.msra.mxu0 0
    %1613 = vmatprep.subr.bf16.mxu0 0
    %1614 = vmatpush2.bf16.msra.mxu0 0
    %1615 = vmatprep.subr.bf16.mxu0 0
    %1616 = vmatpush2.bf16.msra.mxu0 0
    %1617 = vmatprep.subr.bf16.mxu0 0
    %1618 = vmatpush2.bf16.msra.mxu0 0
    %1619 = vmatprep.mubr.bf16.mxu0 0
    %1620 = vmatmul.mubr.bf16.gmra.mxu0 %v1582
    %v1621 = vpop.f32.mrf.mxu0
    %v1622 = vadd.f32 0.0, %v1621
    %v1623 = vpop.f32.mrf.mxu0
    %v1624 = vpop.f32.mrf.mxu0
    %v1625 = vpop.f32.mrf.mxu0
    %1626 = vdwg.mxu0
    %v1628 = vsel %vm1008, %v1483, 0
    %v1631 = vsel %vm1491, %v995, 0
    %1633 = vmatprep.subr.bf16.mxu0 0
    %1634 = vmatpush1.bf16.msra.mxu0 0
    %1635 = vmatprep.subr.bf16.mxu0 0
    %1636 = vmatpush1.bf16.msra.mxu0 0
    %1637 = vmatprep.subr.bf16.mxu0 0
    %1638 = vmatpush1.bf16.msra.mxu0 0
    %1639 = vmatprep.subr.bf16.mxu0 0
    %1640 = vmatpush1.bf16.msra.mxu0 0
    %1641 = vmatprep.subr.bf16.mxu0 0
    %1642 = vmatpush1.bf16.msra.mxu0 0
    %1643 = vmatprep.subr.bf16.mxu0 0
    %1644 = vmatpush1.bf16.msra.mxu0 0
    %1645 = vmatprep.subr.bf16.mxu0 0
    %1646 = vmatpush1.bf16.msra.mxu0 0
    %1647 = vmatprep.subr.bf16.mxu0 0
    %1648 = vmatpush1.bf16.msra.mxu0 %v1631
    %1649 = vmatprep.subr.bf16.mxu0 0
    %1650 = vmatpush2.bf16.msra.mxu0 0
    %1651 = vmatprep.subr.bf16.mxu0 0
    %1652 = vmatpush2.bf16.msra.mxu0 0
    %1653 = vmatprep.subr.bf16.mxu0 0
    %1654 = vmatpush2.bf16.msra.mxu0 0
    %1655 = vmatprep.subr.bf16.mxu0 0
    %1656 = vmatpush2.bf16.msra.mxu0 0
    %1657 = vmatprep.subr.bf16.mxu0 0
    %1658 = vmatpush2.bf16.msra.mxu0 0
    %1659 = vmatprep.subr.bf16.mxu0 0
    %1660 = vmatpush2.bf16.msra.mxu0 0
    %1661 = vmatprep.subr.bf16.mxu0 0
    %1662 = vmatpush2.bf16.msra.mxu0 0
    %1663 = vmatprep.subr.bf16.mxu0 0
    %1664 = vmatpush2.bf16.msra.mxu0 0
    %1665 = vmatprep.mubr.bf16.mxu0 0
    %1666 = vmatmul.mubr.bf16.gmra.mxu0 %v1628
    %v1667 = vpop.f32.mrf.mxu0
    %v1668 = vadd.f32 0.0, %v1667
    %v1669 = vpop.f32.mrf.mxu0
    %v1670 = vpop.f32.mrf.mxu0
    %v1671 = vpop.f32.mrf.mxu0
    %1672 = vdwg.mxu0
    %v1674 = vsel %vm1008, %v1484, 0
    %v1677 = vsel %vm1491, %v998, 0
    %1679 = vmatprep.subr.bf16.mxu0 0
    %1680 = vmatpush1.bf16.msra.mxu0 0
    %1681 = vmatprep.subr.bf16.mxu0 0
    %1682 = vmatpush1.bf16.msra.mxu0 0
    %1683 = vmatprep.subr.bf16.mxu0 0
    %1684 = vmatpush1.bf16.msra.mxu0 0
    %1685 = vmatprep.subr.bf16.mxu0 0
    %1686 = vmatpush1.bf16.msra.mxu0 0
    %1687 = vmatprep.subr.bf16.mxu0 0
    %1688 = vmatpush1.bf16.msra.mxu0 0
    %1689 = vmatprep.subr.bf16.mxu0 0
    %1690 = vmatpush1.bf16.msra.mxu0 0
    %1691 = vmatprep.subr.bf16.mxu0 0
    %1692 = vmatpush1.bf16.msra.mxu0 0
    %1693 = vmatprep.subr.bf16.mxu0 0
    %1694 = vmatpush1.bf16.msra.mxu0 %v1677
    %1695 = vmatprep.subr.bf16.mxu0 0
    %1696 = vmatpush2.bf16.msra.mxu0 0
    %1697 = vmatprep.subr.bf16.mxu0 0
    %1698 = vmatpush2.bf16.msra.mxu0 0
    %1699 = vmatprep.subr.bf16.mxu0 0
    %1700 = vmatpush2.bf16.msra.mxu0 0
    %1701 = vmatprep.subr.bf16.mxu0 0
    %1702 = vmatpush2.bf16.msra.mxu0 0
    %1703 = vmatprep.subr.bf16.mxu0 0
    %1704 = vmatpush2.bf16.msra.mxu0 0
    %1705 = vmatprep.subr.bf16.mxu0 0
    %1706 = vmatpush2.bf16.msra.mxu0 0
    %1707 = vmatprep.subr.bf16.mxu0 0
    %1708 = vmatpush2.bf16.msra.mxu0 0
    %1709 = vmatprep.subr.bf16.mxu0 0
    %1710 = vmatpush2.bf16.msra.mxu0 0
    %1711 = vmatprep.mubr.bf16.mxu0 0
    %1712 = vmatmul.mubr.bf16.gmra.mxu0 %v1674
    %v1713 = vpop.f32.mrf.mxu0
    %v1714 = vadd.f32 0.0, %v1713
    %v1715 = vpop.f32.mrf.mxu0
    %v1716 = vpop.f32.mrf.mxu0
    %v1717 = vpop.f32.mrf.mxu0
    %1718 = vdwg.mxu0
    %v1720 = vsel %vm1008, %v1485, 0
    %v1723 = vsel %vm1491, %v1001, 0
    %1725 = vmatprep.subr.bf16.mxu0 0
    %1726 = vmatpush1.bf16.msra.mxu0 0
    %1727 = vmatprep.subr.bf16.mxu0 0
    %1728 = vmatpush1.bf16.msra.mxu0 0
    %1729 = vmatprep.subr.bf16.mxu0 0
    %1730 = vmatpush1.bf16.msra.mxu0 0
    %1731 = vmatprep.subr.bf16.mxu0 0
    %1732 = vmatpush1.bf16.msra.mxu0 0
    %1733 = vmatprep.subr.bf16.mxu0 0
    %1734 = vmatpush1.bf16.msra.mxu0 0
    %1735 = vmatprep.subr.bf16.mxu0 0
    %1736 = vmatpush1.bf16.msra.mxu0 0
    %1737 = vmatprep.subr.bf16.mxu0 0
    %1738 = vmatpush1.bf16.msra.mxu0 0
    %1739 = vmatprep.subr.bf16.mxu0 0
    %1740 = vmatpush1.bf16.msra.mxu0 %v1723
    %1741 = vmatprep.subr.bf16.mxu0 0
    %1742 = vmatpush2.bf16.msra.mxu0 0
    %1743 = vmatprep.subr.bf16.mxu0 0
    %1744 = vmatpush2.bf16.msra.mxu0 0
    %1745 = vmatprep.subr.bf16.mxu0 0
    %1746 = vmatpush2.bf16.msra.mxu0 0
    %1747 = vmatprep.subr.bf16.mxu0 0
    %1748 = vmatpush2.bf16.msra.mxu0 0
    %1749 = vmatprep.subr.bf16.mxu0 0
    %1750 = vmatpush2.bf16.msra.mxu0 0
    %1751 = vmatprep.subr.bf16.mxu0 0
    %1752 = vmatpush2.bf16.msra.mxu0 0
    %1753 = vmatprep.subr.bf16.mxu0 0
    %1754 = vmatpush2.bf16.msra.mxu0 0
    %1755 = vmatprep.subr.bf16.mxu0 0
    %1756 = vmatpush2.bf16.msra.mxu0 0
    %1757 = vmatprep.mubr.bf16.mxu0 0
    %1758 = vmatmul.mubr.bf16.gmra.mxu0 %v1720
    %v1759 = vpop.f32.mrf.mxu0
    %v1760 = vadd.f32 0.0, %v1759
    %v1761 = vpop.f32.mrf.mxu0
    %v1762 = vpop.f32.mrf.mxu0
    %v1763 = vpop.f32.mrf.mxu0
    %1764 = vdwg.mxu0
    %v1766 = vsel %vm1008, %v1486, 0
    %v1769 = vsel %vm1491, %v1004, 0
    %1771 = vmatprep.subr.bf16.mxu0 0
    %1772 = vmatpush1.bf16.msra.mxu0 0
    %1773 = vmatprep.subr.bf16.mxu0 0
    %1774 = vmatpush1.bf16.msra.mxu0 0
    %1775 = vmatprep.subr.bf16.mxu0 0
    %1776 = vmatpush1.bf16.msra.mxu0 0
    %1777 = vmatprep.subr.bf16.mxu0 0
    %1778 = vmatpush1.bf16.msra.mxu0 0
    %1779 = vmatprep.subr.bf16.mxu0 0
    %1780 = vmatpush1.bf16.msra.mxu0 0
    %1781 = vmatprep.subr.bf16.mxu0 0
    %1782 = vmatpush1.bf16.msra.mxu0 0
    %1783 = vmatprep.subr.bf16.mxu0 0
    %1784 = vmatpush1.bf16.msra.mxu0 0
    %1785 = vmatprep.subr.bf16.mxu0 0
    %1786 = vmatpush1.bf16.msra.mxu0 %v1769
    %1787 = vmatprep.subr.bf16.mxu0 0
    %1788 = vmatpush2.bf16.msra.mxu0 0
    %1789 = vmatprep.subr.bf16.mxu0 0
    %1790 = vmatpush2.bf16.msra.mxu0 0
    %1791 = vmatprep.subr.bf16.mxu0 0
    %1792 = vmatpush2.bf16.msra.mxu0 0
    %1793 = vmatprep.subr.bf16.mxu0 0
    %1794 = vmatpush2.bf16.msra.mxu0 0
    %1795 = vmatprep.subr.bf16.mxu0 0
    %1796 = vmatpush2.bf16.msra.mxu0 0
    %1797 = vmatprep.subr.bf16.mxu0 0
    %1798 = vmatpush2.bf16.msra.mxu0 0
    %1799 = vmatprep.subr.bf16.mxu0 0
    %1800 = vmatpush2.bf16.msra.mxu0 0
    %1801 = vmatprep.subr.bf16.mxu0 0
    %1802 = vmatpush2.bf16.msra.mxu0 0
    %1803 = vmatprep.mubr.bf16.mxu0 0
    %1804 = vmatmul.mubr.bf16.gmra.mxu0 %v1766
    %v1805 = vpop.f32.mrf.mxu0
    %v1806 = vadd.f32 0.0, %v1805
    %v1807 = vpop.f32.mrf.mxu0
    %v1808 = vpop.f32.mrf.mxu0
    %v1809 = vpop.f32.mrf.mxu0
    %1810 = vdwg.mxu0
    %v1812 = vsel %vm1008, %v1487, 0
    %v1815 = vsel %vm1491, %v1007, 0
    %1817 = vmatprep.subr.bf16.mxu0 0
    %1818 = vmatpush1.bf16.msra.mxu0 0
    %1819 = vmatprep.subr.bf16.mxu0 0
    %1820 = vmatpush1.bf16.msra.mxu0 0
    %1821 = vmatprep.subr.bf16.mxu0 0
    %1822 = vmatpush1.bf16.msra.mxu0 0
    %1823 = vmatprep.subr.bf16.mxu0 0
    %1824 = vmatpush1.bf16.msra.mxu0 0
    %1825 = vmatprep.subr.bf16.mxu0 0
    %1826 = vmatpush1.bf16.msra.mxu0 0
    %1827 = vmatprep.subr.bf16.mxu0 0
    %1828 = vmatpush1.bf16.msra.mxu0 0
    %1829 = vmatprep.subr.bf16.mxu0 0
    %1830 = vmatpush1.bf16.msra.mxu0 0
    %1831 = vmatprep.subr.bf16.mxu0 0
    %1832 = vmatpush1.bf16.msra.mxu0 %v1815
    %1833 = vmatprep.subr.bf16.mxu0 0
    %1834 = vmatpush2.bf16.msra.mxu0 0
    %1835 = vmatprep.subr.bf16.mxu0 0
    %1836 = vmatpush2.bf16.msra.mxu0 0
    %1837 = vmatprep.subr.bf16.mxu0 0
    %1838 = vmatpush2.bf16.msra.mxu0 0
    %1839 = vmatprep.subr.bf16.mxu0 0
    %1840 = vmatpush2.bf16.msra.mxu0 0
    %1841 = vmatprep.subr.bf16.mxu0 0
    %1842 = vmatpush2.bf16.msra.mxu0 0
    %1843 = vmatprep.subr.bf16.mxu0 0
    %1844 = vmatpush2.bf16.msra.mxu0 0
    %1845 = vmatprep.subr.bf16.mxu0 0
    %1846 = vmatpush2.bf16.msra.mxu0 0
    %1847 = vmatprep.subr.bf16.mxu0 0
    %1848 = vmatpush2.bf16.msra.mxu0 0
    %1849 = vmatprep.mubr.bf16.mxu0 0
    %1850 = vmatmul.mubr.bf16.gmra.mxu0 %v1812
    %v1851 = vpop.f32.mrf.mxu0
    %v1852 = vadd.f32 0.0, %v1851
    %v1853 = vpop.f32.mrf.mxu0
    %v1854 = vpop.f32.mrf.mxu0
    %v1855 = vpop.f32.mrf.mxu0
    %1856 = vdwg.mxu0
    %v1857 = vcombine.low %v1530, %v1622
    %v1858 = vcombine.high %v1530, %v1622
    %v1860 = vunpack.c.l.s4 1983009808
    %v1861 = vunpack.c.0.s8 %v1860
    %v1862 = vlaneseq
    %v1863 = vshrl.u32 %v1862, 7
    %v1864 = vsub.s32 %v1861, %v1863
    %v1865 = vrot.slane %v1857, %v1864
    %v1867 = vunpack.c.l.s4 1983009808
    %v1868 = vunpack.c.0.s8 %v1867
    %v1869 = vlaneseq
    %v1870 = vshrl.u32 %v1869, 7
    %v1871 = vsub.s32 %v1868, %v1870
    %v1872 = vrot.slane %v1858, %v1871
    %v1873 = vcombine.low %v1576, %v1668
    %v1874 = vcombine.high %v1576, %v1668
    %v1876 = vunpack.c.l.s4 1983009808
    %v1877 = vunpack.c.0.s8 %v1876
    %v1878 = vlaneseq
    %v1879 = vshrl.u32 %v1878, 7
    %v1880 = vsub.s32 %v1877, %v1879
    %v1881 = vrot.slane %v1873, %v1880
    %v1883 = vunpack.c.l.s4 1983009808
    %v1884 = vunpack.c.0.s8 %v1883
    %v1885 = vlaneseq
    %v1886 = vshrl.u32 %v1885, 7
    %v1887 = vsub.s32 %v1884, %v1886
    %v1888 = vrot.slane %v1874, %v1887
    %v1889 = vcombine.low %v1865, %v1881
    %v1890 = vcombine.high %v1865, %v1881
    %v1892 = vunpack.c.l.s4 1934713408
    %v1893 = vunpack.c.0.s8 %v1892
    %v1894 = vlaneseq
    %v1895 = vshrl.u32 %v1894, 7
    %v1896 = vsub.s32 %v1893, %v1895
    %v1897 = vrot.slane %v1889, %v1896
    %v1899 = vunpack.c.l.s4 1934713408
    %v1900 = vunpack.c.0.s8 %v1899
    %v1901 = vlaneseq
    %v1902 = vshrl.u32 %v1901, 7
    %v1903 = vsub.s32 %v1900, %v1902
    %v1904 = vrot.slane %v1890, %v1903
    %v1905 = vcombine.low %v1872, %v1888
    %v1906 = vcombine.high %v1872, %v1888
    %v1908 = vunpack.c.l.s4 1934713408
    %v1909 = vunpack.c.0.s8 %v1908
    %v1910 = vlaneseq
    %v1911 = vshrl.u32 %v1910, 7
    %v1912 = vsub.s32 %v1909, %v1911
    %v1913 = vrot.slane %v1905, %v1912
    %v1915 = vunpack.c.l.s4 1934713408
    %v1916 = vunpack.c.0.s8 %v1915
    %v1917 = vlaneseq
    %v1918 = vshrl.u32 %v1917, 7
    %v1919 = vsub.s32 %v1916, %v1918
    %v1920 = vrot.slane %v1906, %v1919
    %v1921 = vcombine.high %v1897, 0.0
    %v1922 = vcombine.high %v1904, 0.0
    %v1923 = vcombine.high %v1913, 0.0
    %v1924 = vcombine.high %v1920, 0.0
    %v1925 = vcombine.low %v1714, %v1806
    %v1926 = vcombine.high %v1714, %v1806
    %v1928 = vunpack.c.l.s4 1983009808
    %v1929 = vunpack.c.0.s8 %v1928
    %v1930 = vlaneseq
    %v1931 = vshrl.u32 %v1930, 7
    %v1932 = vsub.s32 %v1929, %v1931
    %v1933 = vrot.slane %v1925, %v1932
    %v1935 = vunpack.c.l.s4 1983009808
    %v1936 = vunpack.c.0.s8 %v1935
    %v1937 = vlaneseq
    %v1938 = vshrl.u32 %v1937, 7
    %v1939 = vsub.s32 %v1936, %v1938
    %v1940 = vrot.slane %v1926, %v1939
    %v1941 = vcombine.low %v1760, %v1852
    %v1942 = vcombine.high %v1760, %v1852
    %v1944 = vunpack.c.l.s4 1983009808
    %v1945 = vunpack.c.0.s8 %v1944
    %v1946 = vlaneseq
    %v1947 = vshrl.u32 %v1946, 7
    %v1948 = vsub.s32 %v1945, %v1947
    %v1949 = vrot.slane %v1941, %v1948
    %v1951 = vunpack.c.l.s4 1983009808
    %v1952 = vunpack.c.0.s8 %v1951
    %v1953 = vlaneseq
    %v1954 = vshrl.u32 %v1953, 7
    %v1955 = vsub.s32 %v1952, %v1954
    %v1956 = vrot.slane %v1942, %v1955
    %v1957 = vcombine.low %v1933, %v1949
    %v1958 = vcombine.high %v1933, %v1949
    %v1960 = vunpack.c.l.s4 1934713408
    %v1961 = vunpack.c.0.s8 %v1960
    %v1962 = vlaneseq
    %v1963 = vshrl.u32 %v1962, 7
    %v1964 = vsub.s32 %v1961, %v1963
    %v1965 = vrot.slane %v1957, %v1964
    %v1967 = vunpack.c.l.s4 1934713408
    %v1968 = vunpack.c.0.s8 %v1967
    %v1969 = vlaneseq
    %v1970 = vshrl.u32 %v1969, 7
    %v1971 = vsub.s32 %v1968, %v1970
    %v1972 = vrot.slane %v1958, %v1971
    %v1973 = vcombine.low %v1940, %v1956
    %v1974 = vcombine.high %v1940, %v1956
    %v1976 = vunpack.c.l.s4 1934713408
    %v1977 = vunpack.c.0.s8 %v1976
    %v1978 = vlaneseq
    %v1979 = vshrl.u32 %v1978, 7
    %v1980 = vsub.s32 %v1977, %v1979
    %v1981 = vrot.slane %v1973, %v1980
    %v1983 = vunpack.c.l.s4 1934713408
    %v1984 = vunpack.c.0.s8 %v1983
    %v1985 = vlaneseq
    %v1986 = vshrl.u32 %v1985, 7
    %v1987 = vsub.s32 %v1984, %v1986
    %v1988 = vrot.slane %v1974, %v1987
    %v1989 = vcombine.high %v1965, 0.0
    %v1990 = vcombine.high %v1972, 0.0
    %v1991 = vcombine.high %v1981, 0.0
    %v1992 = vcombine.high %v1988, 0.0
    %v1993 = vcombine.low %v1897, %v1904
    %v1995 = vunpack.c.l.s4 1983009808
    %v1996 = vunpack.c.0.s8 %v1995
    %v1997 = vlaneseq
    %v1998 = vshrl.u32 %v1997, 7
    %v1999 = vsub.s32 %v1996, %v1998
    %v2000 = vrot.slane %v1993, %v1999
    %v2001 = vcombine.low %v1921, %v1922
    %v2003 = vunpack.c.l.s4 1983009808
    %v2004 = vunpack.c.0.s8 %v2003
    %v2005 = vlaneseq
    %v2006 = vshrl.u32 %v2005, 7
    %v2007 = vsub.s32 %v2004, %v2006
    %v2008 = vrot.slane %v2001, %v2007
    %v2009 = vcombine.low %v1913, %v1920
    %v2011 = vunpack.c.l.s4 1983009808
    %v2012 = vunpack.c.0.s8 %v2011
    %v2013 = vlaneseq
    %v2014 = vshrl.u32 %v2013, 7
    %v2015 = vsub.s32 %v2012, %v2014
    %v2016 = vrot.slane %v2009, %v2015
    %v2017 = vcombine.low %v1923, %v1924
    %v2019 = vunpack.c.l.s4 1983009808
    %v2020 = vunpack.c.0.s8 %v2019
    %v2021 = vlaneseq
    %v2022 = vshrl.u32 %v2021, 7
    %v2023 = vsub.s32 %v2020, %v2022
    %v2024 = vrot.slane %v2017, %v2023
    %v2025 = vcombine.low %v2000, %v2008
    %v2026 = vcombine.high %v2000, %v2008
    %v2028 = vunpack.c.l.s4 1934713408
    %v2029 = vunpack.c.0.s8 %v2028
    %v2030 = vlaneseq
    %v2031 = vshrl.u32 %v2030, 7
    %v2032 = vsub.s32 %v2029, %v2031
    %v2033 = vrot.slane %v2025, %v2032
    %v2035 = vunpack.c.l.s4 1934713408
    %v2036 = vunpack.c.0.s8 %v2035
    %v2037 = vlaneseq
    %v2038 = vshrl.u32 %v2037, 7
    %v2039 = vsub.s32 %v2036, %v2038
    %v2040 = vrot.slane %v2026, %v2039
    %v2041 = vcombine.low %v2016, %v2024
    %v2042 = vcombine.high %v2016, %v2024
    %v2044 = vunpack.c.l.s4 1934713408
    %v2045 = vunpack.c.0.s8 %v2044
    %v2046 = vlaneseq
    %v2047 = vshrl.u32 %v2046, 7
    %v2048 = vsub.s32 %v2045, %v2047
    %v2049 = vrot.slane %v2041, %v2048
    %v2051 = vunpack.c.l.s4 1934713408
    %v2052 = vunpack.c.0.s8 %v2051
    %v2053 = vlaneseq
    %v2054 = vshrl.u32 %v2053, 7
    %v2055 = vsub.s32 %v2052, %v2054
    %v2056 = vrot.slane %v2042, %v2055
    %v2057 = vcombine.low %v2033, %v2049
    %v2058 = vcombine.high %v2033, %v2049
    %v2059 = vcombine.low %v2040, %v2056
    %v2060 = vcombine.high %v2040, %v2056
    %v2061 = vcombine.low %v1965, %v1972
    %v2063 = vunpack.c.l.s4 1983009808
    %v2064 = vunpack.c.0.s8 %v2063
    %v2065 = vlaneseq
    %v2066 = vshrl.u32 %v2065, 7
    %v2067 = vsub.s32 %v2064, %v2066
    %v2068 = vrot.slane %v2061, %v2067
    %v2069 = vcombine.low %v1989, %v1990
    %v2071 = vunpack.c.l.s4 1983009808
    %v2072 = vunpack.c.0.s8 %v2071
    %v2073 = vlaneseq
    %v2074 = vshrl.u32 %v2073, 7
    %v2075 = vsub.s32 %v2072, %v2074
    %v2076 = vrot.slane %v2069, %v2075
    %v2077 = vcombine.low %v1981, %v1988
    %v2079 = vunpack.c.l.s4 1983009808
    %v2080 = vunpack.c.0.s8 %v2079
    %v2081 = vlaneseq
    %v2082 = vshrl.u32 %v2081, 7
    %v2083 = vsub.s32 %v2080, %v2082
    %v2084 = vrot.slane %v2077, %v2083
    %v2085 = vcombine.low %v1991, %v1992
    %v2087 = vunpack.c.l.s4 1983009808
    %v2088 = vunpack.c.0.s8 %v2087
    %v2089 = vlaneseq
    %v2090 = vshrl.u32 %v2089, 7
    %v2091 = vsub.s32 %v2088, %v2090
    %v2092 = vrot.slane %v2085, %v2091
    %v2093 = vcombine.low %v2068, %v2076
    %v2094 = vcombine.high %v2068, %v2076
    %v2096 = vunpack.c.l.s4 1934713408
    %v2097 = vunpack.c.0.s8 %v2096
    %v2098 = vlaneseq
    %v2099 = vshrl.u32 %v2098, 7
    %v2100 = vsub.s32 %v2097, %v2099
    %v2101 = vrot.slane %v2093, %v2100
    %v2103 = vunpack.c.l.s4 1934713408
    %v2104 = vunpack.c.0.s8 %v2103
    %v2105 = vlaneseq
    %v2106 = vshrl.u32 %v2105, 7
    %v2107 = vsub.s32 %v2104, %v2106
    %v2108 = vrot.slane %v2094, %v2107
    %v2109 = vcombine.low %v2084, %v2092
    %v2110 = vcombine.high %v2084, %v2092
    %v2112 = vunpack.c.l.s4 1934713408
    %v2113 = vunpack.c.0.s8 %v2112
    %v2114 = vlaneseq
    %v2115 = vshrl.u32 %v2114, 7
    %v2116 = vsub.s32 %v2113, %v2115
    %v2117 = vrot.slane %v2109, %v2116
    %v2119 = vunpack.c.l.s4 1934713408
    %v2120 = vunpack.c.0.s8 %v2119
    %v2121 = vlaneseq
    %v2122 = vshrl.u32 %v2121, 7
    %v2123 = vsub.s32 %v2120, %v2122
    %v2124 = vrot.slane %v2110, %v2123
    %v2125 = vcombine.low %v2101, %v2117
    %v2126 = vcombine.high %v2101, %v2117
    %v2127 = vcombine.low %v2108, %v2124
    %v2128 = vcombine.high %v2108, %v2124
    %2131 = vrot.lane.b32.xlu0 %v2058, 8
    %v2132 = vpop.permute.xlu0 %2131
    %2133 = vrot.lane.b32.xlu0 %v2126, 8
    %v2134 = vpop.permute.xlu0 %2133
    %2139 = vrot.lane.b32.xlu0 %v2059, 16
    %v2140 = vpop.permute.xlu0 %2139
    %2141 = vrot.lane.b32.xlu0 %v2127, 16
    %v2142 = vpop.permute.xlu0 %2141
    %2147 = vrot.lane.b32.xlu0 %v2060, 24
    %v2148 = vpop.permute.xlu0 %2147
    %2149 = vrot.lane.b32.xlu0 %v2128, 24
    %v2150 = vpop.permute.xlu0 %2149
    %v2153 = vsel %vm1008, %v2057, %v2132
    %v2154 = vsel %vm1008, %v2125, %v2134
    %vm2155 = vcmask 130048
    %v2156 = vsel %vm2155, %v2153, %v2140
    %v2157 = vsel %vm2155, %v2154, %v2142
    %vm2158 = vcmask 195584
    %v2159 = vsel %vm2158, %v2156, %v2148
    %v2160 = vsel %vm2158, %v2157, %v2150
    %v2161 = vpack.c.bf16 %v2160, %v2159
    %v2162 = vld [vmem:[%s5] sm:$0xf]
    %v2163 = vld [vmem:[%s5 + $0x4] sm:$0xf]
    %v2164 = vld [vmem:[%s5 + $0x8] sm:$0xf]
    %v2165 = vld [vmem:[%s5 + $0xc] sm:$0xf]
    %v2166 = vld [vmem:[%s6] sm:$0x1]
    %v2168 = vlaneseq
    %v2169 = vshrl.u32 %v2168, 7
    %v2170 = vsub.s32 0, %v2169
    %v2171 = vrot.slane %v2166, %v2170
    %v2177 = vunpack.c.l.b16 %v2162
    %v2178 = vunpack.c.l.b16 %v2163
    %v2179 = vunpack.c.l.b16 %v2164
    %v2180 = vunpack.c.l.b16 %v2165
    %v2181 = vpack.c.b16 %v2178, %v2177
    %v2182 = vpack.c.b16 %v2180, %v2179
    %v2186 = vsel %vm50, %v2161, 0
    %2188 = vmatprep.subr.bf16.mxu0 0
    %2189 = vmatpush1.bf16.msra.mxu0 0
    %2190 = vmatprep.subr.bf16.mxu0 0
    %2191 = vmatpush1.bf16.msra.mxu0 0
    %2192 = vmatprep.subr.bf16.mxu0 0
    %2193 = vmatpush1.bf16.msra.mxu0 0
    %2194 = vmatprep.subr.bf16.mxu0 0
    %2195 = vmatpush1.bf16.msra.mxu0 0
    %2196 = vmatprep.subr.bf16.mxu0 0
    %2197 = vmatpush1.bf16.msra.mxu0 0
    %2198 = vmatprep.subr.bf16.mxu0 0
    %2199 = vmatpush1.bf16.msra.mxu0 0
    %2200 = vmatprep.subr.bf16.mxu0 0
    %2201 = vmatpush1.bf16.msra.mxu0 %v2182
    %2202 = vmatprep.subr.bf16.mxu0 0
    %2203 = vmatpush1.bf16.msra.mxu0 %v2181
    %2204 = vmatprep.subr.bf16.mxu0 0
    %2205 = vmatpush2.bf16.msra.mxu0 0
    %2206 = vmatprep.subr.bf16.mxu0 0
    %2207 = vmatpush2.bf16.msra.mxu0 0
    %2208 = vmatprep.subr.bf16.mxu0 0
    %2209 = vmatpush2.bf16.msra.mxu0 0
    %2210 = vmatprep.subr.bf16.mxu0 0
    %2211 = vmatpush2.bf16.msra.mxu0 0
    %2212 = vmatprep.subr.bf16.mxu0 0
    %2213 = vmatpush2.bf16.msra.mxu0 0
    %2214 = vmatprep.subr.bf16.mxu0 0
    %2215 = vmatpush2.bf16.msra.mxu0 0
    %2216 = vmatprep.subr.bf16.mxu0 0
    %2217 = vmatpush2.bf16.msra.mxu0 0
    %2218 = vmatprep.subr.bf16.mxu0 0
    %2219 = vmatpush2.bf16.msra.mxu0 0
    %2220 = vmatprep.mubr.bf16.mxu0 0
    %2221 = vmatmul.mubr.bf16.gmra.mxu0 %v2186
    %v2222 = vpop.f32.mrf.mxu0
    %v2223 = vadd.f32 %v2171, %v2222
    %v2224 = vpop.f32.mrf.mxu0
    %v2225 = vpop.f32.mrf.mxu0
    %v2226 = vadd.f32 %v2171, %v2225
    %v2227 = vpop.f32.mrf.mxu0
    %2228 = vdwg.mxu0
    %v2229 = vadd.f32 %v46, %v2223
    %v2230 = vadd.f32 %v47, %v2226
    %v2231 = vld [vmem:[%s7] sm:$0x1]
    %v2232 = vld [vmem:[%s8] sm:$0x1]
    %v2233 = vsel %vm50, %v2229, 0.0
    %2234 = vadd.xlane.f32.xlu0 %v2233
    %v2235 = vpop.xlane.xlu0 %2234
    %v2236 = vsel %vm50, %v2230, 0.0
    %2237 = vadd.xlane.f32.xlu0 %v2236
    %v2238 = vpop.xlane.xlu0 %2237
    %v2239 = vmul.f32 %v2235, %v57
    %v2240 = vmul.f32 %v2238, %v57
    %v2241 = vsub.f32 %v2229, %v2239
    %v2242 = vsub.f32 %v2230, %v2240
    %v2243 = vmul.f32 %v2241, %v2241
    %v2244 = vmul.f32 %v2242, %v2242
    %v2245 = vsel %vm50, %v2243, 0.0
    %2246 = vadd.xlane.f32.xlu0 %v2245
    %v2247 = vpop.xlane.xlu0 %2246
    %v2248 = vsel %vm50, %v2244, 0.0
    %2249 = vadd.xlane.f32.xlu0 %v2248
    %v2250 = vpop.xlane.xlu0 %2249
    %v2251 = vmul.f32 %v2247, %v57
    %v2252 = vmul.f32 %v2250, %v57
    %v2253 = vadd.f32 %v2251, 1e-05
    %v2254 = vadd.f32 %v2252, 1e-05
    %v2255 = vrsqrt.pop %v2253
    %v2256 = vrsqrt.pop %v2254
    %v2257 = vmul.f32 %v2241, %v2255
    %v2258 = vmul.f32 %v2242, %v2256
    %v2260 = vlaneseq
    %v2261 = vshrl.u32 %v2260, 7
    %v2262 = vsub.s32 0, %v2261
    %v2263 = vrot.slane %v2231, %v2262
    %v2265 = vmul.f32 %v2257, %v2263
    %v2266 = vmul.f32 %v2258, %v2263
    %v2268 = vlaneseq
    %v2269 = vshrl.u32 %v2268, 7
    %v2270 = vsub.s32 0, %v2269
    %v2271 = vrot.slane %v2232, %v2270
    %v2273 = vadd.f32 %v2265, %v2271
    %v2274 = vadd.f32 %v2266, %v2271
    %v2275 = vpack.c.bf16 %v2274, %v2273
    %v2276 = vld [vmem:[%s9] sm:$0xf]
    %v2277 = vld [vmem:[%s9 + $0x4] sm:$0xf]
    %v2278 = vld [vmem:[%s9 + $0x8] sm:$0xf]
    %v2279 = vld [vmem:[%s9 + $0xc] sm:$0xf]
    %v2280 = vld [vmem:[%s10] sm:$0x1]
    %v2282 = vlaneseq
    %v2283 = vshrl.u32 %v2282, 7
    %v2284 = vsub.s32 0, %v2283
    %v2285 = vrot.slane %v2280, %v2284
    %v2291 = vunpack.c.l.b16 %v2276
    %v2292 = vunpack.c.l.b16 %v2277
    %v2293 = vunpack.c.l.b16 %v2278
    %v2294 = vunpack.c.l.b16 %v2279
    %v2295 = vpack.c.b16 %v2292, %v2291
    %v2296 = vpack.c.b16 %v2294, %v2293
    %v2300 = vsel %vm50, %v2275, 0
    %2302 = vmatprep.subr.bf16.mxu0 0
    %2303 = vmatpush1.bf16.msra.mxu0 0
    %2304 = vmatprep.subr.bf16.mxu0 0
    %2305 = vmatpush1.bf16.msra.mxu0 0
    %2306 = vmatprep.subr.bf16.mxu0 0
    %2307 = vmatpush1.bf16.msra.mxu0 0
    %2308 = vmatprep.subr.bf16.mxu0 0
    %2309 = vmatpush1.bf16.msra.mxu0 0
    %2310 = vmatprep.subr.bf16.mxu0 0
    %2311 = vmatpush1.bf16.msra.mxu0 0
    %2312 = vmatprep.subr.bf16.mxu0 0
    %2313 = vmatpush1.bf16.msra.mxu0 0
    %2314 = vmatprep.subr.bf16.mxu0 0
    %2315 = vmatpush1.bf16.msra.mxu0 %v2296
    %2316 = vmatprep.subr.bf16.mxu0 0
    %2317 = vmatpush1.bf16.msra.mxu0 %v2295
    %2318 = vmatprep.subr.bf16.mxu0 0
    %2319 = vmatpush2.bf16.msra.mxu0 0
    %2320 = vmatprep.subr.bf16.mxu0 0
    %2321 = vmatpush2.bf16.msra.mxu0 0
    %2322 = vmatprep.subr.bf16.mxu0 0
    %2323 = vmatpush2.bf16.msra.mxu0 0
    %2324 = vmatprep.subr.bf16.mxu0 0
    %2325 = vmatpush2.bf16.msra.mxu0 0
    %2326 = vmatprep.subr.bf16.mxu0 0
    %2327 = vmatpush2.bf16.msra.mxu0 0
    %2328 = vmatprep.subr.bf16.mxu0 0
    %2329 = vmatpush2.bf16.msra.mxu0 0
    %2330 = vmatprep.subr.bf16.mxu0 0
    %2331 = vmatpush2.bf16.msra.mxu0 0
    %2332 = vmatprep.subr.bf16.mxu0 0
    %2333 = vmatpush2.bf16.msra.mxu0 0
    %2334 = vmatprep.mubr.bf16.mxu0 0
    %2335 = vmatmul.mubr.bf16.gmra.mxu0 %v2300
    %v2336 = vpop.f32.mrf.mxu0
    %v2337 = vadd.f32 %v2285, %v2336
    %v2338 = vpop.f32.mrf.mxu0
    %v2339 = vpop.f32.mrf.mxu0
    %v2340 = vadd.f32 %v2285, %v2339
    %v2341 = vpop.f32.mrf.mxu0
    %2342 = vdwg.mxu0
    %v2343 = vmul.f32 %v2337, 0.5
    %v2344 = vmul.f32 %v2340, 0.5
    %v2345 = vmul.f32 %v2337, 0.70710677
    %v2346 = vmul.f32 %v2340, 0.70710677
    %vm2347 = vcmp.ge.f32.partialorder %v2345, 0.0
    %vm2348 = vcmp.ge.f32.partialorder %v2346, 0.0
    %v2349 = vsel %vm2347, 1.0, -1.0
    %v2350 = vsel %vm2348, 1.0, -1.0
    %v2351 = vand.u32 2147483647, %v2345
    %v2352 = vand.u32 2147483647, %v2346
    %v2353 = vmul.f32 %v2351, 0.3275911
    %v2354 = vmul.f32 %v2352, 0.3275911
    %v2355 = vadd.f32 %v2353, 1.0
    %v2356 = vadd.f32 %v2354, 1.0
    %v2357 = vrcp.pop %v2355
    %v2358 = vmul.f32 1.0, %v2357
    %v2359 = vrcp.pop %v2356
    %v2360 = vmul.f32 1.0, %v2359
    %v2361 = vmul.f32 %v2358, 1.0614054
    %v2362 = vmul.f32 %v2360, 1.0614054
    %v2363 = vadd.f32 %v2361, -1.4531521
    %v2364 = vadd.f32 %v2362, -1.4531521
    %v2365 = vmul.f32 %v2363, %v2358
    %v2366 = vmul.f32 %v2364, %v2360
    %v2367 = vadd.f32 %v2365, 1.4214138
    %v2368 = vadd.f32 %v2366, 1.4214138
    %v2369 = vmul.f32 %v2367, %v2358
    %v2370 = vmul.f32 %v2368, %v2360
    %v2371 = vadd.f32 %v2369, -0.28449672
    %v2372 = vadd.f32 %v2370, -0.28449672
    %v2373 = vmul.f32 %v2371, %v2358
    %v2374 = vmul.f32 %v2372, %v2360
    %v2375 = vadd.f32 %v2373, 0.2548296
    %v2376 = vadd.f32 %v2374, 0.2548296
    %v2377 = vmul.f32 %v2375, %v2358
    %v2378 = vmul.f32 %v2376, %v2360
    %v2379 = vsub.f32 0.0, %v2351
    %v2380 = vsub.f32 0.0, %v2352
    %v2381 = vmul.f32 %v2379, %v2351
    %v2382 = vmul.f32 %v2380, %v2352
    %v2383 = vmul.f32 %v2381, 1.442695
    %v2384 = vpow.pop %v2383
    %v2385 = vmul.f32 %v2382, 1.442695
    %v2386 = vpow.pop %v2385
    %v2387 = vmul.f32 %v2377, %v2384
    %v2388 = vmul.f32 %v2378, %v2386
    %v2389 = vsub.f32 1.0, %v2387
    %v2390 = vsub.f32 1.0, %v2388
    %v2391 = vmul.f32 %v2349, %v2389
    %v2392 = vmul.f32 %v2350, %v2390
    %v2393 = vadd.f32 %v2391, 1.0
    %v2394 = vadd.f32 %v2392, 1.0
    %v2395 = vmul.f32 %v2343, %v2393
    %v2396 = vmul.f32 %v2344, %v2394
    %v2397 = vpack.c.bf16 %v2396, %v2395
    %v2398 = vld [vmem:[%s11] sm:$0xf]
    %v2399 = vld [vmem:[%s11 + $0x4] sm:$0xf]
    %v2400 = vld [vmem:[%s11 + $0x8] sm:$0xf]
    %v2401 = vld [vmem:[%s11 + $0xc] sm:$0xf]
    %v2402 = vld [vmem:[%s11 + $0x10] sm:$0xf]
    %v2403 = vld [vmem:[%s11 + $0x14] sm:$0xf]
    %v2404 = vld [vmem:[%s11 + $0x18] sm:$0xf]
    %v2405 = vld [vmem:[%s11 + $0x1c] sm:$0xf]
    %v2406 = vld [vmem:[%s11 + $0x20] sm:$0xf]
    %v2407 = vld [vmem:[%s11 + $0x24] sm:$0xf]
    %v2408 = vld [vmem:[%s11 + $0x28] sm:$0xf]
    %v2409 = vld [vmem:[%s11 + $0x2c] sm:$0xf]
    %v2410 = vld [vmem:[%s11 + $0x30] sm:$0xf]
    %v2411 = vld [vmem:[%s11 + $0x34] sm:$0xf]
    %v2412 = vld [vmem:[%s11 + $0x38] sm:$0xf]
    %v2413 = vld [vmem:[%s11 + $0x3c] sm:$0xf]
    %v2414 = vld [vmem:[%s12] sm:$0x1]
    %v2416 = vlaneseq
    %v2417 = vshrl.u32 %v2416, 7
    %v2418 = vsub.s32 0, %v2417
    %v2419 = vrot.slane %v2414, %v2418
    %v2437 = vunpack.c.l.b16 %v2398
    %v2438 = vunpack.c.l.b16 %v2399
    %v2439 = vunpack.c.l.b16 %v2400
    %v2440 = vunpack.c.l.b16 %v2401
    %v2441 = vunpack.c.l.b16 %v2402
    %v2442 = vunpack.c.l.b16 %v2403
    %v2443 = vunpack.c.l.b16 %v2404
    %v2444 = vunpack.c.l.b16 %v2405
    %v2445 = vunpack.c.l.b16 %v2406
    %v2446 = vunpack.c.l.b16 %v2407
    %v2447 = vunpack.c.l.b16 %v2408
    %v2448 = vunpack.c.l.b16 %v2409
    %v2449 = vunpack.c.l.b16 %v2410
    %v2450 = vunpack.c.l.b16 %v2411
    %v2451 = vunpack.c.l.b16 %v2412
    %v2452 = vunpack.c.l.b16 %v2413
    %v2453 = vpack.c.b16 %v2438, %v2437
    %v2454 = vpack.c.b16 %v2440, %v2439
    %v2455 = vpack.c.b16 %v2442, %v2441
    %v2456 = vpack.c.b16 %v2444, %v2443
    %v2457 = vpack.c.b16 %v2446, %v2445
    %v2458 = vpack.c.b16 %v2448, %v2447
    %v2459 = vpack.c.b16 %v2450, %v2449
    %v2460 = vpack.c.b16 %v2452, %v2451
    %2469 = vmatprep.subr.bf16.mxu0 0
    %2470 = vmatpush1.bf16.msra.mxu0 %v2460
    %2471 = vmatprep.subr.bf16.mxu0 0
    %2472 = vmatpush1.bf16.msra.mxu0 %v2459
    %2473 = vmatprep.subr.bf16.mxu0 0
    %2474 = vmatpush1.bf16.msra.mxu0 %v2458
    %2475 = vmatprep.subr.bf16.mxu0 0
    %2476 = vmatpush1.bf16.msra.mxu0 %v2457
    %2477 = vmatprep.subr.bf16.mxu0 0
    %2478 = vmatpush1.bf16.msra.mxu0 %v2456
    %2479 = vmatprep.subr.bf16.mxu0 0
    %2480 = vmatpush1.bf16.msra.mxu0 %v2455
    %2481 = vmatprep.subr.bf16.mxu0 0
    %2482 = vmatpush1.bf16.msra.mxu0 %v2454
    %2483 = vmatprep.subr.bf16.mxu0 0
    %2484 = vmatpush1.bf16.msra.mxu0 %v2453
    %2485 = vmatprep.subr.bf16.mxu0 0
    %2486 = vmatpush2.bf16.msra.mxu0 0
    %2487 = vmatprep.subr.bf16.mxu0 0
    %2488 = vmatpush2.bf16.msra.mxu0 0
    %2489 = vmatprep.subr.bf16.mxu0 0
    %2490 = vmatpush2.bf16.msra.mxu0 0
    %2491 = vmatprep.subr.bf16.mxu0 0
    %2492 = vmatpush2.bf16.msra.mxu0 0
    %2493 = vmatprep.subr.bf16.mxu0 0
    %2494 = vmatpush2.bf16.msra.mxu0 0
    %2495 = vmatprep.subr.bf16.mxu0 0
    %2496 = vmatpush2.bf16.msra.mxu0 0
    %2497 = vmatprep.subr.bf16.mxu0 0
    %2498 = vmatpush2.bf16.msra.mxu0 0
    %2499 = vmatprep.subr.bf16.mxu0 0
    %2500 = vmatpush2.bf16.msra.mxu0 0
    %2501 = vmatprep.mubr.bf16.mxu0 0
    %2502 = vmatmul.mubr.bf16.gmra.mxu0 %v2397
    %v2503 = vpop.f32.mrf.mxu0
    %v2504 = vadd.f32 %v2419, %v2503
    %v2505 = vpop.f32.mrf.mxu0
    %v2506 = vpop.f32.mrf.mxu0
    %v2507 = vadd.f32 %v2419, %v2506
    %v2508 = vpop.f32.mrf.mxu0
    %2509 = vdwg.mxu0
    %v2510 = vadd.f32 %v2229, %v2504
    %v2511 = vadd.f32 %v2230, %v2507
    %2512 = vst.msk [vmem:[#allocation2] sm:$0xff] %vm50, %v2510
    %2513 = vst.msk [vmem:[#allocation2 + $0x8] sm:$0xff] %vm50, %v2511
    // Predicated region
    $region54: #{tpu_custom_call.1} parent=1 // pred_check
      _
    $region55: #{tpu_custom_call.1} parent=1 // pred_check_branch
      %2515 = sbr.rel (0) target = $region57
    $region56: #{tpu_custom_call.1} parent=1 // pred_region
      %s2517 = ssub.s32 256, 256
      %2518 = vsyncadd [#allocation3], %s2517
      %s2519 = sshll.u32 [#allocation2], 4
      %s2520 = int_to_ptr.vmem [resolvable:$true] %s2519
      %2525 = dma.vmem_to_hbm [thread:$0]  %s2520, 256, %s13, [#allocation3], 128, 128, 8
    $region57: #{tpu_custom_call.1} parent=1 // pred_fallthru
      _
    // Predicated region
    $region58: #{tpu_custom_call.1} parent=1 // pred_check
      _
    $region59: #{tpu_custom_call.1} parent=1 // pred_check_branch
      %2527 = sbr.rel (0) target = $region61
    $region60: #{tpu_custom_call.1} parent=1 // pred_region
      %2528 = dma.done [#allocation3], 256
    $region61: #{tpu_custom_call.1} parent=1 // pred_fallthru
      _
    %2529 = vsyncpa [#allocation3], 1

</llo_original>
